<compile_context>
chip_gen: v5e
topology: v5e:2x2
jax: 0.10.0
libtpu: 0.0.40
codegen_flags: <defaults>
</compile_context>

<pallas_src>
import jax
import jax.numpy as jnp
from jax import lax
from jax.experimental import pallas as pl
from jax.experimental.pallas import tpu as pltpu

BN_EPS = 1e-5
# 48 MiB scoped VMEM: headroom under v7x's 64 MiB physical VMEM, generous on v5e/v6e.
_VMEM_LIMIT = 48 * 1024 * 1024


def _silu(x):
    return x * (1.0 / (1.0 + jnp.exp(-x)))


# --------------------------- fused C2f kernel (whole module) ---------------------------
def _make_c2f_kernel(n, hp, wp, margin, shortcut):
    p = hp * wp
    m = margin
    # 3x3 tap (kh, kw) samples the flattened padded frame at lane offset
    # d = (kh-1)*wp + (kw-1) relative to the output pixel.
    taps = [(kh * 3 + kw, (kh - 1) * wp + (kw - 1)) for kh in range(3) for kw in range(3)]

    def kernel(x_ref, w1_ref, b1_ref, wm1_ref, bm1_ref, wm2_ref, bm2_ref,
               w2_ref, b2_ref, msk_ref, o_ref, xs_ref):
        mask = msk_ref[...]                                       # (1, p) f32, zero border

        # Zero the halo scratch ONCE per grid step; only the interior is rewritten below,
        # so the halo margins (and, via `mask`, the frame border) stay exactly zero.
        xs_ref[...] = jnp.zeros_like(xs_ref)

        def conv3x3(w_ref, idx, bias):
            # Register accumulation over the 9 taps -- no VMEM accumulator RMW.
            acc = None
            for t, d in taps:
                y = jnp.dot(w_ref[idx, t], xs_ref[:, m + d:m + d + p],
                            preferred_element_type=jnp.float32)
                acc = y if acc is None else acc + y
            return acc + bias

        # ---- cv1 (1x1 Conv+BN+SiLU); the .chunk(2, 1) halves are two small matmuls ----
        xb = x_ref[0].astype(jnp.bfloat16)                        # (c1, p) bf16 MXU operand
        y0 = _silu(jnp.dot(w1_ref[0], xb, preferred_element_type=jnp.float32) + b1_ref[0])
        y1 = _silu(jnp.dot(w1_ref[1], xb, preferred_element_type=jnp.float32) + b1_ref[1])

        # ---- cv2 partial sums (fused torch.cat): accumulate branch-by-branch in regs ----
        out = jnp.dot(w2_ref[0], y0.astype(jnp.bfloat16), preferred_element_type=jnp.float32)
        out = out + jnp.dot(w2_ref[1], y1.astype(jnp.bfloat16),
                            preferred_element_type=jnp.float32)

        # ---- n fused Bottlenecks (3x3 -> 3x3 [+ residual]); everything stays on-chip ----
        cur = y1
        for i in range(n):
            # Stage the (masked) input into the halo scratch so every tap above is a plain
            # static lane slice; masking restores the zero 'same'-padding border.
            xs_ref[:, m:m + p] = (cur * mask).astype(jnp.bfloat16)
            h = _silu(conv3x3(wm1_ref, i, bm1_ref[i]))
            xs_ref[:, m:m + p] = (h * mask).astype(jnp.bfloat16)
            y = _silu(conv3x3(wm2_ref, i, bm2_ref[i]))
            if shortcut:
                y = y + cur                                       # residual in f32
            out = out + jnp.dot(w2_ref[2 + i], y.astype(jnp.bfloat16),
                                preferred_element_type=jnp.float32)
            cur = y

        o_ref[0] = _silu(out + b2_ref[...]).astype(o_ref.dtype)

    return kernel


def c2f_forward(x_nchw, kp, *, n, shortcut):
    """x_nchw: (N, c1, H, W) f32.  kp: packed kernel params (see pack_c2f_params)."""
    N, c1, H, W = x_nchw.shape
    c = kp["w_cv1"].shape[1]
    c2 = kp["b_cv2"].shape[0]
    hp, wp = H + 2, W + 2
    p = hp * wp
    # Halo margin for the 3x3 taps.  Kept 128-lane aligned so the interior staging store
    # starts tile-aligned (the per-tap reads are unaligned lane slices either way); the
    # extra scratch lanes are negligible (~2*128*c*2 bytes).
    margin = ((wp + 1 + 127) // 128) * 128
    pe = p + 2 * margin

    # Pad the 3x3 'same' frame ONCE for the whole module; activations stay channels-first
    # with the spatial dims flattened (lane-dense) end to end.
    # TODO(synk): fold this pad and the final crop into the kernel's edge loads/stores.
    xp = jnp.pad(x_nchw, ((0, 0), (0, 0), (1, 1), (1, 1))).reshape(N, c1, p)
    mask = (jnp.zeros((hp, wp), jnp.float32).at[1:-1, 1:-1].set(1.0)).reshape(1, p)

    kernel = _make_c2f_kernel(n, hp, wp, margin, shortcut)
    flops = 2 * N * p * (2 * c * c1 + n * 2 * 9 * c * c + c2 * (2 + n) * c)
    cost = pl.CostEstimate(
        flops=flops,
        transcendentals=N * p * (2 * c + 2 * n * c + c2),
        bytes_accessed=4 * N * p * (c1 + c2) + 4 * p
        + 2 * (2 * c * c1 + n * 18 * c * c + c2 * (2 + n) * c))

    out_p = pl.pallas_call(
        kernel,
        out_shape=jax.ShapeDtypeStruct((N, c2, p), jnp.float32),
        grid=(N,),
        in_specs=[
            pl.BlockSpec((1, c1, p), lambda b: (b, 0, 0)),            # padded input image
            pl.BlockSpec((2, c, c1), lambda b: (0, 0, 0)),            # cv1 weight (chunked)
            pl.BlockSpec((2, c, 1), lambda b: (0, 0, 0)),             # cv1 bias
            pl.BlockSpec((n, 9, c, c), lambda b: (0, 0, 0, 0)),       # bottleneck cv1 w
            pl.BlockSpec((n, c, 1), lambda b: (0, 0, 0)),             # bottleneck cv1 b
            pl.BlockSpec((n, 9, c, c), lambda b: (0, 0, 0, 0)),       # bottleneck cv2 w
            pl.BlockSpec((n, c, 1), lambda b: (0, 0, 0)),             # bottleneck cv2 b
            pl.BlockSpec((2 + n, c2, c), lambda b: (0, 0, 0)),        # cv2 w, per branch
            pl.BlockSpec((c2, 1), lambda b: (0, 0)),                  # cv2 bias
            pl.BlockSpec((1, p), lambda b: (0, 0)),                   # border mask
        ],
        out_specs=pl.BlockSpec((1, c2, p), lambda b: (b, 0, 0)),
        scratch_shapes=[pltpu.VMEM((c, pe), jnp.bfloat16)],           # single halo scratch
        compiler_params=pltpu.CompilerParams(
            dimension_semantics=("parallel",), vmem_limit_bytes=_VMEM_LIMIT),
        cost_estimate=cost,
    )(xp, kp["w_cv1"], kp["b_cv1"], kp["wm1"], kp["bm1"],
      kp["wm2"], kp["bm2"], kp["w_cv2"], kp["b_cv2"], mask)

    return out_p.reshape(N, c2, hp, wp)[:, :, 1:-1, 1:-1]             # drop frame -> NCHW


# ------------------------ parameter init (synthetic, deterministic) --------------------
def make_conv_params(key, cin, cout, ksize):
    kw_, kg, kb, km, kv = jax.random.split(key, 5)
    if ksize == 1:
        w = jax.random.normal(kw_, (cout, cin), jnp.float32) / jnp.sqrt(cin)
    else:
        w = jax.random.normal(kw_, (9, cout, cin), jnp.float32) / jnp.sqrt(9.0 * cin)
    gamma = 1.0 + 0.1 * jax.random.normal(kg, (cout,), jnp.float32)
    beta = 0.05 * jax.random.normal(kb, (cout,), jnp.float32)
    mean = 0.1 * jax.random.normal(km, (cout,), jnp.float32)
    var = 1.0 + 0.1 * jax.random.uniform(kv, (cout,), jnp.float32)
    scale = gamma / jnp.sqrt(var + BN_EPS)                 # fold eval-mode BatchNorm
    bias = beta - mean * scale
    w_f = w * (scale[:, None] if ksize == 1 else scale[None, :, None])
    return {"w": w_f, "b": bias}                           # folded weights/bias, f32


def init_c2f_params(key, c1, c2, n, e=0.5):
    c = int(c2 * e)
    keys = jax.random.split(key, 2 + 2 * n)
    return {"cv1": make_conv_params(keys[0], c1, 2 * c, 1),
            "cv2": make_conv_params(keys[1], (2 + n) * c, c2, 1),
            "m": [{"cv1": make_conv_params(keys[2 + 2 * i], c, c, 3),
                   "cv2": make_conv_params(keys[3 + 2 * i], c, c, 3)}
                  for i in range(n)]}


def pack_c2f_params(params, n, c):
    """Repack folded f32 params into the kernel's layouts (bf16 MXU weights, f32 biases)."""
    c1 = params["cv1"]["w"].shape[1]
    c2 = params["cv2"]["w"].shape[0]
    return {
        "w_cv1": params["cv1"]["w"].reshape(2, c, c1).astype(jnp.bfloat16),
        "b_cv1": params["cv1"]["b"].reshape(2, c, 1),
        "wm1": jnp.stack([blk["cv1"]["w"] for blk in params["m"]]).astype(jnp.bfloat16),
        "bm1": jnp.stack([blk["cv1"]["b"] for blk in params["m"]]).reshape(n, c, 1),
        "wm2": jnp.stack([blk["cv2"]["w"] for blk in params["m"]]).astype(jnp.bfloat16),
        "bm2": jnp.stack([blk["cv2"]["b"] for blk in params["m"]]).reshape(n, c, 1),
        # cv2 weight split per concat branch -> (2+n, c2, c) so torch.cat is fused away.
        "w_cv2": params["cv2"]["w"].reshape(c2, 2 + n, c)
                                   .transpose(1, 0, 2).astype(jnp.bfloat16),
        "b_cv2": params["cv2"]["b"].reshape(c2, 1),
    }


# -------------------------- pure-JAX reference (validation) ----------------------------
def _ref_conv(x_nhwc, w, b, ksize):
    if ksize == 1:
        w_hwio = jnp.transpose(w, (1, 0))[None, None, :, :]
        pad = "VALID"
    else:
        cout, cin = w.shape[1], w.shape[2]
        w_hwio = jnp.transpose(w.reshape(3, 3, cout, cin), (0, 1, 3, 2))
        pad = "SAME"
    y = lax.conv_general_dilated(x_nhwc.astype(jnp.bfloat16), w_hwio.astype(jnp.bfloat16),
                                 (1, 1), pad,
                                 dimension_numbers=("NHWC", "HWIO", "NHWC"),
                                 preferred_element_type=jnp.float32)
    return _silu(y + b)


def c2f_reference(x_nchw, params, *, n, shortcut, c):
    x = jnp.transpose(x_nchw, (0, 2, 3, 1))
    y = _ref_conv(x, params["cv1"]["w"], params["cv1"]["b"], 1)
    ys = [y[..., :c], y[..., c:]]
    for i in range(n):
        blk = params["m"][i]
        inp = ys[-1]
        h1 = _ref_conv(inp, blk["cv1"]["w"], blk["cv1"]["b"], 3)
        h2 = _ref_conv(h1, blk["cv2"]["w"], blk["cv2"]["b"], 3)
        ys.append(inp + h2 if shortcut else h2)
    cat = jnp.concatenate(ys, axis=-1)
    out = _ref_conv(cat, params["cv2"]["w"], params["cv2"]["b"], 1)
    return jnp.transpose(out, (0, 3, 1, 2))


# ------------------------------------- main ---------------------------------------------
if __name__ == "__main__":
    # C2f(c1=4, c2=8, n=2, shortcut=True, g=1, e=0.5) -> hidden c = 4
    c1, c2, n_blocks, shortcut, e = 4, 8, 2, True, 0.5
    c = int(c2 * e)
    N, H, W = 2, 16, 16

    key = jax.random.PRNGKey(0)
    kx, kpar = jax.random.split(key)
    x = jax.random.normal(kx, (N, c1, H, W), jnp.float32)      # PyTorch NCHW input
    params = init_c2f_params(kpar, c1, c2, n_blocks, e)
    kparams = pack_c2f_params(params, n_blocks, c)

    fwd = jax.jit(lambda xx, pp: c2f_forward(xx, pp, n=n_blocks, shortcut=shortcut))
    out = jax.block_until_ready(fwd(x, kparams))
    ref = jax.block_until_ready(
        c2f_reference(x, params, n=n_blocks, shortcut=shortcut, c=c))

    assert out.shape == (N, c2, H, W), out.shape
    max_err = float(jnp.max(jnp.abs(out - ref)))
    assert jnp.allclose(out, ref, rtol=2e-2, atol=2e-2), max_err
    print("KERNEL_OK")
</pallas_src>

<mosaic_0001>
module attributes {stable_mosaic.version = 11 : i64} {
  func.func @kernel(%arg0: i32, %arg1: memref<1x4x324xf32, #tpu.memory_space<vmem>>, %arg2: memref<2x4x4xbf16, #tpu.memory_space<vmem>>, %arg3: memref<2x4x1xf32, #tpu.memory_space<vmem>>, %arg4: memref<2x9x4x4xbf16, #tpu.memory_space<vmem>>, %arg5: memref<2x4x1xf32, #tpu.memory_space<vmem>>, %arg6: memref<2x9x4x4xbf16, #tpu.memory_space<vmem>>, %arg7: memref<2x4x1xf32, #tpu.memory_space<vmem>>, %arg8: memref<4x8x4xbf16, #tpu.memory_space<vmem>>, %arg9: memref<8x1xf32, #tpu.memory_space<vmem>>, %arg10: memref<1x324xf32, #tpu.memory_space<vmem>>, %arg11: memref<1x8x324xf32, #tpu.memory_space<vmem>>, %arg12: memref<4x580xbf16, #tpu.memory_space<vmem>>) attributes {dimension_semantics = [#tpu.dimension_semantics<parallel>], iteration_bounds = array<i64: 2>, scalar_prefetch = 0 : i64, scratch_operands = 1 : i64, tpu.core_type = #tpu.core_type<tc>, window_params = [{transform_indices = @transform_0, window_bounds = array<i64: 1, 4, 324>}, {pipeline_mode = #tpu.pipeline_mode<synchronous>, transform_indices = @transform_1, window_bounds = array<i64: 2, 4, 4>}, {pipeline_mode = #tpu.pipeline_mode<synchronous>, transform_indices = @transform_2, window_bounds = array<i64: 2, 4, 1>}, {pipeline_mode = #tpu.pipeline_mode<synchronous>, transform_indices = @transform_3, window_bounds = array<i64: 2, 9, 4, 4>}, {pipeline_mode = #tpu.pipeline_mode<synchronous>, transform_indices = @transform_4, window_bounds = array<i64: 2, 4, 1>}, {pipeline_mode = #tpu.pipeline_mode<synchronous>, transform_indices = @transform_5, window_bounds = array<i64: 2, 9, 4, 4>}, {pipeline_mode = #tpu.pipeline_mode<synchronous>, transform_indices = @transform_6, window_bounds = array<i64: 2, 4, 1>}, {pipeline_mode = #tpu.pipeline_mode<synchronous>, transform_indices = @transform_7, window_bounds = array<i64: 4, 8, 4>}, {pipeline_mode = #tpu.pipeline_mode<synchronous>, transform_indices = @transform_8, window_bounds = array<i64: 8, 1>}, {pipeline_mode = #tpu.pipeline_mode<synchronous>, transform_indices = @transform_9, window_bounds = array<i64: 1, 324>}, {transform_indices = @transform_10, window_bounds = array<i64: 1, 8, 324>}]} {
    %c0 = arith.constant 0 : index
    %c0_0 = arith.constant 0 : index
    %0 = vector.load %arg10[%c0, %c0_0] : memref<1x324xf32, #tpu.memory_space<vmem>>, vector<1x324xf32>
    %cst = arith.constant 0.000000e+00 : bf16
    %1 = vector.broadcast %cst : bf16 to vector<4x580xbf16>
    %c0_1 = arith.constant 0 : index
    %c0_2 = arith.constant 0 : index
    %2 = vector.load %arg12[%c0_1, %c0_2] : memref<4x580xbf16, #tpu.memory_space<vmem>>, vector<4x580xbf16>
    tpu.vector_store %arg12[%c0_1, %c0_2], %1 {strides = array<i32>} : memref<4x580xbf16, #tpu.memory_space<vmem>>, vector<4x580xbf16>,
    %c0_3 = arith.constant 0 : index
    %c0_4 = arith.constant 0 : index
    %c0_5 = arith.constant 0 : index
    %3 = vector.load %arg1[%c0_3, %c0_4, %c0_5] : memref<1x4x324xf32, #tpu.memory_space<vmem>>, vector<1x4x324xf32>
    %4 = vector.shape_cast %3 : vector<1x4x324xf32> to vector<4x324xf32>
    %5 = arith.truncf %4 : vector<4x324xf32> to vector<4x324xbf16>
    %c0_6 = arith.constant 0 : index
    %c0_7 = arith.constant 0 : index
    %c0_8 = arith.constant 0 : index
    %6 = vector.load %arg2[%c0_6, %c0_7, %c0_8] : memref<2x4x4xbf16, #tpu.memory_space<vmem>>, vector<1x4x4xbf16>
    %7 = vector.shape_cast %6 : vector<1x4x4xbf16> to vector<4x4xbf16>
    %cst_9 = arith.constant dense<0.000000e+00> : vector<4x324xf32>
    %8 = tpu.matmul %7, %5, %cst_9 {dimension_numbers = #tpu.dot_dimension_numbers<[1], [0], [0], [1], [0, 0, 1, 1], [], []>} : vector<4x4xbf16>, vector<4x324xbf16>, vector<4x324xf32> -> vector<4x324xf32>
    %c0_10 = arith.constant 0 : index
    %c0_11 = arith.constant 0 : index
    %c0_12 = arith.constant 0 : index
    %9 = vector.load %arg3[%c0_10, %c0_11, %c0_12] : memref<2x4x1xf32, #tpu.memory_space<vmem>>, vector<1x4x1xf32>
    %10 = vector.shape_cast %9 : vector<1x4x1xf32> to vector<4x1xf32>
    %11 = vector.broadcast %10 : vector<4x1xf32> to vector<4x324xf32>
    %12 = arith.addf %8, %11 : vector<4x324xf32>
    %cst_13 = arith.constant 0.000000e+00 : f32
    %13 = vector.broadcast %cst_13 : f32 to vector<4x324xf32>
    %14 = arith.subf %13, %12 : vector<4x324xf32>
    %15 = math.exp %14 : vector<4x324xf32>
    %cst_14 = arith.constant 1.000000e+00 : f32
    %16 = vector.broadcast %cst_14 : f32 to vector<4x324xf32>
    %17 = arith.addf %16, %15 : vector<4x324xf32>
    %cst_15 = arith.constant 1.000000e+00 : f32
    %18 = vector.broadcast %cst_15 : f32 to vector<4x324xf32>
    %19 = arith.divf %18, %17 : vector<4x324xf32>
    %20 = arith.mulf %12, %19 : vector<4x324xf32>
    %c1 = arith.constant 1 : index
    %c0_16 = arith.constant 0 : index
    %c0_17 = arith.constant 0 : index
    %21 = vector.load %arg2[%c1, %c0_16, %c0_17] : memref<2x4x4xbf16, #tpu.memory_space<vmem>>, vector<1x4x4xbf16>
    %22 = vector.shape_cast %21 : vector<1x4x4xbf16> to vector<4x4xbf16>
    %cst_18 = arith.constant dense<0.000000e+00> : vector<4x324xf32>
    %23 = tpu.matmul %22, %5, %cst_18 {dimension_numbers = #tpu.dot_dimension_numbers<[1], [0], [0], [1], [0, 0, 1, 1], [], []>} : vector<4x4xbf16>, vector<4x324xbf16>, vector<4x324xf32> -> vector<4x324xf32>
    %c1_19 = arith.constant 1 : index
    %c0_20 = arith.constant 0 : index
    %c0_21 = arith.constant 0 : index
    %24 = vector.load %arg3[%c1_19, %c0_20, %c0_21] : memref<2x4x1xf32, #tpu.memory_space<vmem>>, vector<1x4x1xf32>
    %25 = vector.shape_cast %24 : vector<1x4x1xf32> to vector<4x1xf32>
    %26 = vector.broadcast %25 : vector<4x1xf32> to vector<4x324xf32>
    %27 = arith.addf %23, %26 : vector<4x324xf32>
    %cst_22 = arith.constant 0.000000e+00 : f32
    %28 = vector.broadcast %cst_22 : f32 to vector<4x324xf32>
    %29 = arith.subf %28, %27 : vector<4x324xf32>
    %30 = math.exp %29 : vector<4x324xf32>
    %cst_23 = arith.constant 1.000000e+00 : f32
    %31 = vector.broadcast %cst_23 : f32 to vector<4x324xf32>
    %32 = arith.addf %31, %30 : vector<4x324xf32>
    %cst_24 = arith.constant 1.000000e+00 : f32
    %33 = vector.broadcast %cst_24 : f32 to vector<4x324xf32>
    %34 = arith.divf %33, %32 : vector<4x324xf32>
    %35 = arith.mulf %27, %34 : vector<4x324xf32>
    %c0_25 = arith.constant 0 : index
    %c0_26 = arith.constant 0 : index
    %c0_27 = arith.constant 0 : index
    %36 = vector.load %arg8[%c0_25, %c0_26, %c0_27] : memref<4x8x4xbf16, #tpu.memory_space<vmem>>, vector<1x8x4xbf16>
    %37 = vector.shape_cast %36 : vector<1x8x4xbf16> to vector<8x4xbf16>
    %38 = arith.truncf %20 : vector<4x324xf32> to vector<4x324xbf16>
    %cst_28 = arith.constant dense<0.000000e+00> : vector<8x324xf32>
    %39 = tpu.matmul %37, %38, %cst_28 {dimension_numbers = #tpu.dot_dimension_numbers<[1], [0], [0], [1], [0, 0, 1, 1], [], []>} : vector<8x4xbf16>, vector<4x324xbf16>, vector<8x324xf32> -> vector<8x324xf32>
    %c1_29 = arith.constant 1 : index
    %c0_30 = arith.constant 0 : index
    %c0_31 = arith.constant 0 : index
    %40 = vector.load %arg8[%c1_29, %c0_30, %c0_31] : memref<4x8x4xbf16, #tpu.memory_space<vmem>>, vector<1x8x4xbf16>
    %41 = vector.shape_cast %40 : vector<1x8x4xbf16> to vector<8x4xbf16>
    %42 = arith.truncf %35 : vector<4x324xf32> to vector<4x324xbf16>
    %cst_32 = arith.constant dense<0.000000e+00> : vector<8x324xf32>
    %43 = tpu.matmul %41, %42, %cst_32 {dimension_numbers = #tpu.dot_dimension_numbers<[1], [0], [0], [1], [0, 0, 1, 1], [], []>} : vector<8x4xbf16>, vector<4x324xbf16>, vector<8x324xf32> -> vector<8x324xf32>
    %44 = arith.addf %39, %43 : vector<8x324xf32>
    %45 = vector.broadcast %0 : vector<1x324xf32> to vector<4x324xf32>
    %46 = arith.mulf %35, %45 : vector<4x324xf32>
    %47 = arith.truncf %46 : vector<4x324xf32> to vector<4x324xbf16>
    %c0_33 = arith.constant 0 : index
    %c128 = arith.constant 128 : index
    %48 = vector.load %arg12[%c0_33, %c128] : memref<4x580xbf16, #tpu.memory_space<vmem>>, vector<4x324xbf16>
    tpu.vector_store %arg12[%c0_33, %c128], %47 {strides = array<i32>} : memref<4x580xbf16, #tpu.memory_space<vmem>>, vector<4x324xbf16>,
    %c0_34 = arith.constant 0 : index
    %c0_35 = arith.constant 0 : index
    %c0_36 = arith.constant 0 : index
    %49 = vector.load %arg5[%c0_34, %c0_35, %c0_36] : memref<2x4x1xf32, #tpu.memory_space<vmem>>, vector<1x4x1xf32>
    %50 = vector.shape_cast %49 : vector<1x4x1xf32> to vector<4x1xf32>
    %c0_37 = arith.constant 0 : index
    %c0_38 = arith.constant 0 : index
    %c0_39 = arith.constant 0 : index
    %c0_40 = arith.constant 0 : index
    %51 = vector.load %arg4[%c0_37, %c0_38, %c0_39, %c0_40] : memref<2x9x4x4xbf16, #tpu.memory_space<vmem>>, vector<1x1x4x4xbf16>
    %52 = vector.shape_cast %51 : vector<1x1x4x4xbf16> to vector<4x4xbf16>
    %c0_41 = arith.constant 0 : index
    %c109 = arith.constant 109 : index
    %53 = vector.load %arg12[%c0_41, %c109] : memref<4x580xbf16, #tpu.memory_space<vmem>>, vector<4x324xbf16>
    %cst_42 = arith.constant dense<0.000000e+00> : vector<4x324xf32>
    %54 = tpu.matmul %52, %53, %cst_42 {dimension_numbers = #tpu.dot_dimension_numbers<[1], [0], [0], [1], [0, 0, 1, 1], [], []>} : vector<4x4xbf16>, vector<4x324xbf16>, vector<4x324xf32> -> vector<4x324xf32>
    %c0_43 = arith.constant 0 : index
    %c1_44 = arith.constant 1 : index
    %c0_45 = arith.constant 0 : index
    %c0_46 = arith.constant 0 : index
    %55 = vector.load %arg4[%c0_43, %c1_44, %c0_45, %c0_46] : memref<2x9x4x4xbf16, #tpu.memory_space<vmem>>, vector<1x1x4x4xbf16>
    %56 = vector.shape_cast %55 : vector<1x1x4x4xbf16> to vector<4x4xbf16>
    %c0_47 = arith.constant 0 : index
    %c110 = arith.constant 110 : index
    %57 = vector.load %arg12[%c0_47, %c110] : memref<4x580xbf16, #tpu.memory_space<vmem>>, vector<4x324xbf16>
    %cst_48 = arith.constant dense<0.000000e+00> : vector<4x324xf32>
    %58 = tpu.matmul %56, %57, %cst_48 {dimension_numbers = #tpu.dot_dimension_numbers<[1], [0], [0], [1], [0, 0, 1, 1], [], []>} : vector<4x4xbf16>, vector<4x324xbf16>, vector<4x324xf32> -> vector<4x324xf32>
    %59 = arith.addf %54, %58 : vector<4x324xf32>
    %c0_49 = arith.constant 0 : index
    %c2 = arith.constant 2 : index
    %c0_50 = arith.constant 0 : index
    %c0_51 = arith.constant 0 : index
    %60 = vector.load %arg4[%c0_49, %c2, %c0_50, %c0_51] : memref<2x9x4x4xbf16, #tpu.memory_space<vmem>>, vector<1x1x4x4xbf16>
    %61 = vector.shape_cast %60 : vector<1x1x4x4xbf16> to vector<4x4xbf16>
    %c0_52 = arith.constant 0 : index
    %c111 = arith.constant 111 : index
    %62 = vector.load %arg12[%c0_52, %c111] : memref<4x580xbf16, #tpu.memory_space<vmem>>, vector<4x324xbf16>
    %cst_53 = arith.constant dense<0.000000e+00> : vector<4x324xf32>
    %63 = tpu.matmul %61, %62, %cst_53 {dimension_numbers = #tpu.dot_dimension_numbers<[1], [0], [0], [1], [0, 0, 1, 1], [], []>} : vector<4x4xbf16>, vector<4x324xbf16>, vector<4x324xf32> -> vector<4x324xf32>
    %64 = arith.addf %59, %63 : vector<4x324xf32>
    %c0_54 = arith.constant 0 : index
    %c3 = arith.constant 3 : index
    %c0_55 = arith.constant 0 : index
    %c0_56 = arith.constant 0 : index
    %65 = vector.load %arg4[%c0_54, %c3, %c0_55, %c0_56] : memref<2x9x4x4xbf16, #tpu.memory_space<vmem>>, vector<1x1x4x4xbf16>
    %66 = vector.shape_cast %65 : vector<1x1x4x4xbf16> to vector<4x4xbf16>
    %c0_57 = arith.constant 0 : index
    %c127 = arith.constant 127 : index
    %67 = vector.load %arg12[%c0_57, %c127] : memref<4x580xbf16, #tpu.memory_space<vmem>>, vector<4x324xbf16>
    %cst_58 = arith.constant dense<0.000000e+00> : vector<4x324xf32>
    %68 = tpu.matmul %66, %67, %cst_58 {dimension_numbers = #tpu.dot_dimension_numbers<[1], [0], [0], [1], [0, 0, 1, 1], [], []>} : vector<4x4xbf16>, vector<4x324xbf16>, vector<4x324xf32> -> vector<4x324xf32>
    %69 = arith.addf %64, %68 : vector<4x324xf32>
    %c0_59 = arith.constant 0 : index
    %c4 = arith.constant 4 : index
    %c0_60 = arith.constant 0 : index
    %c0_61 = arith.constant 0 : index
    %70 = vector.load %arg4[%c0_59, %c4, %c0_60, %c0_61] : memref<2x9x4x4xbf16, #tpu.memory_space<vmem>>, vector<1x1x4x4xbf16>
    %71 = vector.shape_cast %70 : vector<1x1x4x4xbf16> to vector<4x4xbf16>
    %c0_62 = arith.constant 0 : index
    %c128_63 = arith.constant 128 : index
    %72 = vector.load %arg12[%c0_62, %c128_63] : memref<4x580xbf16, #tpu.memory_space<vmem>>, vector<4x324xbf16>
    %cst_64 = arith.constant dense<0.000000e+00> : vector<4x324xf32>
    %73 = tpu.matmul %71, %72, %cst_64 {dimension_numbers = #tpu.dot_dimension_numbers<[1], [0], [0], [1], [0, 0, 1, 1], [], []>} : vector<4x4xbf16>, vector<4x324xbf16>, vector<4x324xf32> -> vector<4x324xf32>
    %74 = arith.addf %69, %73 : vector<4x324xf32>
    %c0_65 = arith.constant 0 : index
    %c5 = arith.constant 5 : index
    %c0_66 = arith.constant 0 : index
    %c0_67 = arith.constant 0 : index
    %75 = vector.load %arg4[%c0_65, %c5, %c0_66, %c0_67] : memref<2x9x4x4xbf16, #tpu.memory_space<vmem>>, vector<1x1x4x4xbf16>
    %76 = vector.shape_cast %75 : vector<1x1x4x4xbf16> to vector<4x4xbf16>
    %c0_68 = arith.constant 0 : index
    %c129 = arith.constant 129 : index
    %77 = vector.load %arg12[%c0_68, %c129] : memref<4x580xbf16, #tpu.memory_space<vmem>>, vector<4x324xbf16>
    %cst_69 = arith.constant dense<0.000000e+00> : vector<4x324xf32>
    %78 = tpu.matmul %76, %77, %cst_69 {dimension_numbers = #tpu.dot_dimension_numbers<[1], [0], [0], [1], [0, 0, 1, 1], [], []>} : vector<4x4xbf16>, vector<4x324xbf16>, vector<4x324xf32> -> vector<4x324xf32>
    %79 = arith.addf %74, %78 : vector<4x324xf32>
    %c0_70 = arith.constant 0 : index
    %c6 = arith.constant 6 : index
    %c0_71 = arith.constant 0 : index
    %c0_72 = arith.constant 0 : index
    %80 = vector.load %arg4[%c0_70, %c6, %c0_71, %c0_72] : memref<2x9x4x4xbf16, #tpu.memory_space<vmem>>, vector<1x1x4x4xbf16>
    %81 = vector.shape_cast %80 : vector<1x1x4x4xbf16> to vector<4x4xbf16>
    %c0_73 = arith.constant 0 : index
    %c145 = arith.constant 145 : index
    %82 = vector.load %arg12[%c0_73, %c145] : memref<4x580xbf16, #tpu.memory_space<vmem>>, vector<4x324xbf16>
    %cst_74 = arith.constant dense<0.000000e+00> : vector<4x324xf32>
    %83 = tpu.matmul %81, %82, %cst_74 {dimension_numbers = #tpu.dot_dimension_numbers<[1], [0], [0], [1], [0, 0, 1, 1], [], []>} : vector<4x4xbf16>, vector<4x324xbf16>, vector<4x324xf32> -> vector<4x324xf32>
    %84 = arith.addf %79, %83 : vector<4x324xf32>
    %c0_75 = arith.constant 0 : index
    %c7 = arith.constant 7 : index
    %c0_76 = arith.constant 0 : index
    %c0_77 = arith.constant 0 : index
    %85 = vector.load %arg4[%c0_75, %c7, %c0_76, %c0_77] : memref<2x9x4x4xbf16, #tpu.memory_space<vmem>>, vector<1x1x4x4xbf16>
    %86 = vector.shape_cast %85 : vector<1x1x4x4xbf16> to vector<4x4xbf16>
    %c0_78 = arith.constant 0 : index
    %c146 = arith.constant 146 : index
    %87 = vector.load %arg12[%c0_78, %c146] : memref<4x580xbf16, #tpu.memory_space<vmem>>, vector<4x324xbf16>
    %cst_79 = arith.constant dense<0.000000e+00> : vector<4x324xf32>
    %88 = tpu.matmul %86, %87, %cst_79 {dimension_numbers = #tpu.dot_dimension_numbers<[1], [0], [0], [1], [0, 0, 1, 1], [], []>} : vector<4x4xbf16>, vector<4x324xbf16>, vector<4x324xf32> -> vector<4x324xf32>
    %89 = arith.addf %84, %88 : vector<4x324xf32>
    %c0_80 = arith.constant 0 : index
    %c8 = arith.constant 8 : index
    %c0_81 = arith.constant 0 : index
    %c0_82 = arith.constant 0 : index
    %90 = vector.load %arg4[%c0_80, %c8, %c0_81, %c0_82] : memref<2x9x4x4xbf16, #tpu.memory_space<vmem>>, vector<1x1x4x4xbf16>
    %91 = vector.shape_cast %90 : vector<1x1x4x4xbf16> to vector<4x4xbf16>
    %c0_83 = arith.constant 0 : index
    %c147 = arith.constant 147 : index
    %92 = vector.load %arg12[%c0_83, %c147] : memref<4x580xbf16, #tpu.memory_space<vmem>>, vector<4x324xbf16>
    %cst_84 = arith.constant dense<0.000000e+00> : vector<4x324xf32>
    %93 = tpu.matmul %91, %92, %cst_84 {dimension_numbers = #tpu.dot_dimension_numbers<[1], [0], [0], [1], [0, 0, 1, 1], [], []>} : vector<4x4xbf16>, vector<4x324xbf16>, vector<4x324xf32> -> vector<4x324xf32>
    %94 = arith.addf %89, %93 : vector<4x324xf32>
    %95 = vector.broadcast %50 : vector<4x1xf32> to vector<4x324xf32>
    %96 = arith.addf %94, %95 : vector<4x324xf32>
    %cst_85 = arith.constant 0.000000e+00 : f32
    %97 = vector.broadcast %cst_85 : f32 to vector<4x324xf32>
    %98 = arith.subf %97, %96 : vector<4x324xf32>
    %99 = math.exp %98 : vector<4x324xf32>
    %cst_86 = arith.constant 1.000000e+00 : f32
    %100 = vector.broadcast %cst_86 : f32 to vector<4x324xf32>
    %101 = arith.addf %100, %99 : vector<4x324xf32>
    %cst_87 = arith.constant 1.000000e+00 : f32
    %102 = vector.broadcast %cst_87 : f32 to vector<4x324xf32>
    %103 = arith.divf %102, %101 : vector<4x324xf32>
    %104 = arith.mulf %96, %103 : vector<4x324xf32>
    %105 = vector.broadcast %0 : vector<1x324xf32> to vector<4x324xf32>
    %106 = arith.mulf %104, %105 : vector<4x324xf32>
    %107 = arith.truncf %106 : vector<4x324xf32> to vector<4x324xbf16>
    %c0_88 = arith.constant 0 : index
    %c128_89 = arith.constant 128 : index
    %108 = vector.load %arg12[%c0_88, %c128_89] : memref<4x580xbf16, #tpu.memory_space<vmem>>, vector<4x324xbf16>
    tpu.vector_store %arg12[%c0_88, %c128_89], %107 {strides = array<i32>} : memref<4x580xbf16, #tpu.memory_space<vmem>>, vector<4x324xbf16>,
    %c0_90 = arith.constant 0 : index
    %c0_91 = arith.constant 0 : index
    %c0_92 = arith.constant 0 : index
    %109 = vector.load %arg7[%c0_90, %c0_91, %c0_92] : memref<2x4x1xf32, #tpu.memory_space<vmem>>, vector<1x4x1xf32>
    %110 = vector.shape_cast %109 : vector<1x4x1xf32> to vector<4x1xf32>
    %c0_93 = arith.constant 0 : index
    %c0_94 = arith.constant 0 : index
    %c0_95 = arith.constant 0 : index
    %c0_96 = arith.constant 0 : index
    %111 = vector.load %arg6[%c0_93, %c0_94, %c0_95, %c0_96] : memref<2x9x4x4xbf16, #tpu.memory_space<vmem>>, vector<1x1x4x4xbf16>
    %112 = vector.shape_cast %111 : vector<1x1x4x4xbf16> to vector<4x4xbf16>
    %c0_97 = arith.constant 0 : index
    %c109_98 = arith.constant 109 : index
    %113 = vector.load %arg12[%c0_97, %c109_98] : memref<4x580xbf16, #tpu.memory_space<vmem>>, vector<4x324xbf16>
    %cst_99 = arith.constant dense<0.000000e+00> : vector<4x324xf32>
    %114 = tpu.matmul %112, %113, %cst_99 {dimension_numbers = #tpu.dot_dimension_numbers<[1], [0], [0], [1], [0, 0, 1, 1], [], []>} : vector<4x4xbf16>, vector<4x324xbf16>, vector<4x324xf32> -> vector<4x324xf32>
    %c0_100 = arith.constant 0 : index
    %c1_101 = arith.constant 1 : index
    %c0_102 = arith.constant 0 : index
    %c0_103 = arith.constant 0 : index
    %115 = vector.load %arg6[%c0_100, %c1_101, %c0_102, %c0_103] : memref<2x9x4x4xbf16, #tpu.memory_space<vmem>>, vector<1x1x4x4xbf16>
    %116 = vector.shape_cast %115 : vector<1x1x4x4xbf16> to vector<4x4xbf16>
    %c0_104 = arith.constant 0 : index
    %c110_105 = arith.constant 110 : index
    %117 = vector.load %arg12[%c0_104, %c110_105] : memref<4x580xbf16, #tpu.memory_space<vmem>>, vector<4x324xbf16>
    %cst_106 = arith.constant dense<0.000000e+00> : vector<4x324xf32>
    %118 = tpu.matmul %116, %117, %cst_106 {dimension_numbers = #tpu.dot_dimension_numbers<[1], [0], [0], [1], [0, 0, 1, 1], [], []>} : vector<4x4xbf16>, vector<4x324xbf16>, vector<4x324xf32> -> vector<4x324xf32>
    %119 = arith.addf %114, %118 : vector<4x324xf32>
    %c0_107 = arith.constant 0 : index
    %c2_108 = arith.constant 2 : index
    %c0_109 = arith.constant 0 : index
    %c0_110 = arith.constant 0 : index
    %120 = vector.load %arg6[%c0_107, %c2_108, %c0_109, %c0_110] : memref<2x9x4x4xbf16, #tpu.memory_space<vmem>>, vector<1x1x4x4xbf16>
    %121 = vector.shape_cast %120 : vector<1x1x4x4xbf16> to vector<4x4xbf16>
    %c0_111 = arith.constant 0 : index
    %c111_112 = arith.constant 111 : index
    %122 = vector.load %arg12[%c0_111, %c111_112] : memref<4x580xbf16, #tpu.memory_space<vmem>>, vector<4x324xbf16>
    %cst_113 = arith.constant dense<0.000000e+00> : vector<4x324xf32>
    %123 = tpu.matmul %121, %122, %cst_113 {dimension_numbers = #tpu.dot_dimension_numbers<[1], [0], [0], [1], [0, 0, 1, 1], [], []>} : vector<4x4xbf16>, vector<4x324xbf16>, vector<4x324xf32> -> vector<4x324xf32>
    %124 = arith.addf %119, %123 : vector<4x324xf32>
    %c0_114 = arith.constant 0 : index
    %c3_115 = arith.constant 3 : index
    %c0_116 = arith.constant 0 : index
    %c0_117 = arith.constant 0 : index
    %125 = vector.load %arg6[%c0_114, %c3_115, %c0_116, %c0_117] : memref<2x9x4x4xbf16, #tpu.memory_space<vmem>>, vector<1x1x4x4xbf16>
    %126 = vector.shape_cast %125 : vector<1x1x4x4xbf16> to vector<4x4xbf16>
    %c0_118 = arith.constant 0 : index
    %c127_119 = arith.constant 127 : index
    %127 = vector.load %arg12[%c0_118, %c127_119] : memref<4x580xbf16, #tpu.memory_space<vmem>>, vector<4x324xbf16>
    %cst_120 = arith.constant dense<0.000000e+00> : vector<4x324xf32>
    %128 = tpu.matmul %126, %127, %cst_120 {dimension_numbers = #tpu.dot_dimension_numbers<[1], [0], [0], [1], [0, 0, 1, 1], [], []>} : vector<4x4xbf16>, vector<4x324xbf16>, vector<4x324xf32> -> vector<4x324xf32>
    %129 = arith.addf %124, %128 : vector<4x324xf32>
    %c0_121 = arith.constant 0 : index
    %c4_122 = arith.constant 4 : index
    %c0_123 = arith.constant 0 : index
    %c0_124 = arith.constant 0 : index
    %130 = vector.load %arg6[%c0_121, %c4_122, %c0_123, %c0_124] : memref<2x9x4x4xbf16, #tpu.memory_space<vmem>>, vector<1x1x4x4xbf16>
    %131 = vector.shape_cast %130 : vector<1x1x4x4xbf16> to vector<4x4xbf16>
    %c0_125 = arith.constant 0 : index
    %c128_126 = arith.constant 128 : index
    %132 = vector.load %arg12[%c0_125, %c128_126] : memref<4x580xbf16, #tpu.memory_space<vmem>>, vector<4x324xbf16>
    %cst_127 = arith.constant dense<0.000000e+00> : vector<4x324xf32>
    %133 = tpu.matmul %131, %132, %cst_127 {dimension_numbers = #tpu.dot_dimension_numbers<[1], [0], [0], [1], [0, 0, 1, 1], [], []>} : vector<4x4xbf16>, vector<4x324xbf16>, vector<4x324xf32> -> vector<4x324xf32>
    %134 = arith.addf %129, %133 : vector<4x324xf32>
    %c0_128 = arith.constant 0 : index
    %c5_129 = arith.constant 5 : index
    %c0_130 = arith.constant 0 : index
    %c0_131 = arith.constant 0 : index
    %135 = vector.load %arg6[%c0_128, %c5_129, %c0_130, %c0_131] : memref<2x9x4x4xbf16, #tpu.memory_space<vmem>>, vector<1x1x4x4xbf16>
    %136 = vector.shape_cast %135 : vector<1x1x4x4xbf16> to vector<4x4xbf16>
    %c0_132 = arith.constant 0 : index
    %c129_133 = arith.constant 129 : index
    %137 = vector.load %arg12[%c0_132, %c129_133] : memref<4x580xbf16, #tpu.memory_space<vmem>>, vector<4x324xbf16>
    %cst_134 = arith.constant dense<0.000000e+00> : vector<4x324xf32>
    %138 = tpu.matmul %136, %137, %cst_134 {dimension_numbers = #tpu.dot_dimension_numbers<[1], [0], [0], [1], [0, 0, 1, 1], [], []>} : vector<4x4xbf16>, vector<4x324xbf16>, vector<4x324xf32> -> vector<4x324xf32>
    %139 = arith.addf %134, %138 : vector<4x324xf32>
    %c0_135 = arith.constant 0 : index
    %c6_136 = arith.constant 6 : index
    %c0_137 = arith.constant 0 : index
    %c0_138 = arith.constant 0 : index
    %140 = vector.load %arg6[%c0_135, %c6_136, %c0_137, %c0_138] : memref<2x9x4x4xbf16, #tpu.memory_space<vmem>>, vector<1x1x4x4xbf16>
    %141 = vector.shape_cast %140 : vector<1x1x4x4xbf16> to vector<4x4xbf16>
    %c0_139 = arith.constant 0 : index
    %c145_140 = arith.constant 145 : index
    %142 = vector.load %arg12[%c0_139, %c145_140] : memref<4x580xbf16, #tpu.memory_space<vmem>>, vector<4x324xbf16>
    %cst_141 = arith.constant dense<0.000000e+00> : vector<4x324xf32>
    %143 = tpu.matmul %141, %142, %cst_141 {dimension_numbers = #tpu.dot_dimension_numbers<[1], [0], [0], [1], [0, 0, 1, 1], [], []>} : vector<4x4xbf16>, vector<4x324xbf16>, vector<4x324xf32> -> vector<4x324xf32>
    %144 = arith.addf %139, %143 : vector<4x324xf32>
    %c0_142 = arith.constant 0 : index
    %c7_143 = arith.constant 7 : index
    %c0_144 = arith.constant 0 : index
    %c0_145 = arith.constant 0 : index
    %145 = vector.load %arg6[%c0_142, %c7_143, %c0_144, %c0_145] : memref<2x9x4x4xbf16, #tpu.memory_space<vmem>>, vector<1x1x4x4xbf16>
    %146 = vector.shape_cast %145 : vector<1x1x4x4xbf16> to vector<4x4xbf16>
    %c0_146 = arith.constant 0 : index
    %c146_147 = arith.constant 146 : index
    %147 = vector.load %arg12[%c0_146, %c146_147] : memref<4x580xbf16, #tpu.memory_space<vmem>>, vector<4x324xbf16>
    %cst_148 = arith.constant dense<0.000000e+00> : vector<4x324xf32>
    %148 = tpu.matmul %146, %147, %cst_148 {dimension_numbers = #tpu.dot_dimension_numbers<[1], [0], [0], [1], [0, 0, 1, 1], [], []>} : vector<4x4xbf16>, vector<4x324xbf16>, vector<4x324xf32> -> vector<4x324xf32>
    %149 = arith.addf %144, %148 : vector<4x324xf32>
    %c0_149 = arith.constant 0 : index
    %c8_150 = arith.constant 8 : index
    %c0_151 = arith.constant 0 : index
    %c0_152 = arith.constant 0 : index
    %150 = vector.load %arg6[%c0_149, %c8_150, %c0_151, %c0_152] : memref<2x9x4x4xbf16, #tpu.memory_space<vmem>>, vector<1x1x4x4xbf16>
    %151 = vector.shape_cast %150 : vector<1x1x4x4xbf16> to vector<4x4xbf16>
    %c0_153 = arith.constant 0 : index
    %c147_154 = arith.constant 147 : index
    %152 = vector.load %arg12[%c0_153, %c147_154] : memref<4x580xbf16, #tpu.memory_space<vmem>>, vector<4x324xbf16>
    %cst_155 = arith.constant dense<0.000000e+00> : vector<4x324xf32>
    %153 = tpu.matmul %151, %152, %cst_155 {dimension_numbers = #tpu.dot_dimension_numbers<[1], [0], [0], [1], [0, 0, 1, 1], [], []>} : vector<4x4xbf16>, vector<4x324xbf16>, vector<4x324xf32> -> vector<4x324xf32>
    %154 = arith.addf %149, %153 : vector<4x324xf32>
    %155 = vector.broadcast %110 : vector<4x1xf32> to vector<4x324xf32>
    %156 = arith.addf %154, %155 : vector<4x324xf32>
    %cst_156 = arith.constant 0.000000e+00 : f32
    %157 = vector.broadcast %cst_156 : f32 to vector<4x324xf32>
    %158 = arith.subf %157, %156 : vector<4x324xf32>
    %159 = math.exp %158 : vector<4x324xf32>
    %cst_157 = arith.constant 1.000000e+00 : f32
    %160 = vector.broadcast %cst_157 : f32 to vector<4x324xf32>
    %161 = arith.addf %160, %159 : vector<4x324xf32>
    %cst_158 = arith.constant 1.000000e+00 : f32
    %162 = vector.broadcast %cst_158 : f32 to vector<4x324xf32>
    %163 = arith.divf %162, %161 : vector<4x324xf32>
    %164 = arith.mulf %156, %163 : vector<4x324xf32>
    %165 = arith.addf %164, %35 : vector<4x324xf32>
    %c2_159 = arith.constant 2 : index
    %c0_160 = arith.constant 0 : index
    %c0_161 = arith.constant 0 : index
    %166 = vector.load %arg8[%c2_159, %c0_160, %c0_161] : memref<4x8x4xbf16, #tpu.memory_space<vmem>>, vector<1x8x4xbf16>
    %167 = vector.shape_cast %166 : vector<1x8x4xbf16> to vector<8x4xbf16>
    %168 = arith.truncf %165 : vector<4x324xf32> to vector<4x324xbf16>
    %cst_162 = arith.constant dense<0.000000e+00> : vector<8x324xf32>
    %169 = tpu.matmul %167, %168, %cst_162 {dimension_numbers = #tpu.dot_dimension_numbers<[1], [0], [0], [1], [0, 0, 1, 1], [], []>} : vector<8x4xbf16>, vector<4x324xbf16>, vector<8x324xf32> -> vector<8x324xf32>
    %170 = arith.addf %44, %169 : vector<8x324xf32>
    %171 = vector.broadcast %0 : vector<1x324xf32> to vector<4x324xf32>
    %172 = arith.mulf %165, %171 : vector<4x324xf32>
    %173 = arith.truncf %172 : vector<4x324xf32> to vector<4x324xbf16>
    %c0_163 = arith.constant 0 : index
    %c128_164 = arith.constant 128 : index
    %174 = vector.load %arg12[%c0_163, %c128_164] : memref<4x580xbf16, #tpu.memory_space<vmem>>, vector<4x324xbf16>
    tpu.vector_store %arg12[%c0_163, %c128_164], %173 {strides = array<i32>} : memref<4x580xbf16, #tpu.memory_space<vmem>>, vector<4x324xbf16>,
    %c1_165 = arith.constant 1 : index
    %c0_166 = arith.constant 0 : index
    %c0_167 = arith.constant 0 : index
    %175 = vector.load %arg5[%c1_165, %c0_166, %c0_167] : memref<2x4x1xf32, #tpu.memory_space<vmem>>, vector<1x4x1xf32>
    %176 = vector.shape_cast %175 : vector<1x4x1xf32> to vector<4x1xf32>
    %c1_168 = arith.constant 1 : index
    %c0_169 = arith.constant 0 : index
    %c0_170 = arith.constant 0 : index
    %c0_171 = arith.constant 0 : index
    %177 = vector.load %arg4[%c1_168, %c0_169, %c0_170, %c0_171] : memref<2x9x4x4xbf16, #tpu.memory_space<vmem>>, vector<1x1x4x4xbf16>
    %178 = vector.shape_cast %177 : vector<1x1x4x4xbf16> to vector<4x4xbf16>
    %c0_172 = arith.constant 0 : index
    %c109_173 = arith.constant 109 : index
    %179 = vector.load %arg12[%c0_172, %c109_173] : memref<4x580xbf16, #tpu.memory_space<vmem>>, vector<4x324xbf16>
    %cst_174 = arith.constant dense<0.000000e+00> : vector<4x324xf32>
    %180 = tpu.matmul %178, %179, %cst_174 {dimension_numbers = #tpu.dot_dimension_numbers<[1], [0], [0], [1], [0, 0, 1, 1], [], []>} : vector<4x4xbf16>, vector<4x324xbf16>, vector<4x324xf32> -> vector<4x324xf32>
    %c1_175 = arith.constant 1 : index
    %c1_176 = arith.constant 1 : index
    %c0_177 = arith.constant 0 : index
    %c0_178 = arith.constant 0 : index
    %181 = vector.load %arg4[%c1_175, %c1_176, %c0_177, %c0_178] : memref<2x9x4x4xbf16, #tpu.memory_space<vmem>>, vector<1x1x4x4xbf16>
    %182 = vector.shape_cast %181 : vector<1x1x4x4xbf16> to vector<4x4xbf16>
    %c0_179 = arith.constant 0 : index
    %c110_180 = arith.constant 110 : index
    %183 = vector.load %arg12[%c0_179, %c110_180] : memref<4x580xbf16, #tpu.memory_space<vmem>>, vector<4x324xbf16>
    %cst_181 = arith.constant dense<0.000000e+00> : vector<4x324xf32>
    %184 = tpu.matmul %182, %183, %cst_181 {dimension_numbers = #tpu.dot_dimension_numbers<[1], [0], [0], [1], [0, 0, 1, 1], [], []>} : vector<4x4xbf16>, vector<4x324xbf16>, vector<4x324xf32> -> vector<4x324xf32>
    %185 = arith.addf %180, %184 : vector<4x324xf32>
    %c1_182 = arith.constant 1 : index
    %c2_183 = arith.constant 2 : index
    %c0_184 = arith.constant 0 : index
    %c0_185 = arith.constant 0 : index
    %186 = vector.load %arg4[%c1_182, %c2_183, %c0_184, %c0_185] : memref<2x9x4x4xbf16, #tpu.memory_space<vmem>>, vector<1x1x4x4xbf16>
    %187 = vector.shape_cast %186 : vector<1x1x4x4xbf16> to vector<4x4xbf16>
    %c0_186 = arith.constant 0 : index
    %c111_187 = arith.constant 111 : index
    %188 = vector.load %arg12[%c0_186, %c111_187] : memref<4x580xbf16, #tpu.memory_space<vmem>>, vector<4x324xbf16>
    %cst_188 = arith.constant dense<0.000000e+00> : vector<4x324xf32>
    %189 = tpu.matmul %187, %188, %cst_188 {dimension_numbers = #tpu.dot_dimension_numbers<[1], [0], [0], [1], [0, 0, 1, 1], [], []>} : vector<4x4xbf16>, vector<4x324xbf16>, vector<4x324xf32> -> vector<4x324xf32>
    %190 = arith.addf %185, %189 : vector<4x324xf32>
    %c1_189 = arith.constant 1 : index
    %c3_190 = arith.constant 3 : index
    %c0_191 = arith.constant 0 : index
    %c0_192 = arith.constant 0 : index
    %191 = vector.load %arg4[%c1_189, %c3_190, %c0_191, %c0_192] : memref<2x9x4x4xbf16, #tpu.memory_space<vmem>>, vector<1x1x4x4xbf16>
    %192 = vector.shape_cast %191 : vector<1x1x4x4xbf16> to vector<4x4xbf16>
    %c0_193 = arith.constant 0 : index
    %c127_194 = arith.constant 127 : index
    %193 = vector.load %arg12[%c0_193, %c127_194] : memref<4x580xbf16, #tpu.memory_space<vmem>>, vector<4x324xbf16>
    %cst_195 = arith.constant dense<0.000000e+00> : vector<4x324xf32>
    %194 = tpu.matmul %192, %193, %cst_195 {dimension_numbers = #tpu.dot_dimension_numbers<[1], [0], [0], [1], [0, 0, 1, 1], [], []>} : vector<4x4xbf16>, vector<4x324xbf16>, vector<4x324xf32> -> vector<4x324xf32>
    %195 = arith.addf %190, %194 : vector<4x324xf32>
    %c1_196 = arith.constant 1 : index
    %c4_197 = arith.constant 4 : index
    %c0_198 = arith.constant 0 : index
    %c0_199 = arith.constant 0 : index
    %196 = vector.load %arg4[%c1_196, %c4_197, %c0_198, %c0_199] : memref<2x9x4x4xbf16, #tpu.memory_space<vmem>>, vector<1x1x4x4xbf16>
    %197 = vector.shape_cast %196 : vector<1x1x4x4xbf16> to vector<4x4xbf16>
    %c0_200 = arith.constant 0 : index
    %c128_201 = arith.constant 128 : index
    %198 = vector.load %arg12[%c0_200, %c128_201] : memref<4x580xbf16, #tpu.memory_space<vmem>>, vector<4x324xbf16>
    %cst_202 = arith.constant dense<0.000000e+00> : vector<4x324xf32>
    %199 = tpu.matmul %197, %198, %cst_202 {dimension_numbers = #tpu.dot_dimension_numbers<[1], [0], [0], [1], [0, 0, 1, 1], [], []>} : vector<4x4xbf16>, vector<4x324xbf16>, vector<4x324xf32> -> vector<4x324xf32>
    %200 = arith.addf %195, %199 : vector<4x324xf32>
    %c1_203 = arith.constant 1 : index
    %c5_204 = arith.constant 5 : index
    %c0_205 = arith.constant 0 : index
    %c0_206 = arith.constant 0 : index
    %201 = vector.load %arg4[%c1_203, %c5_204, %c0_205, %c0_206] : memref<2x9x4x4xbf16, #tpu.memory_space<vmem>>, vector<1x1x4x4xbf16>
    %202 = vector.shape_cast %201 : vector<1x1x4x4xbf16> to vector<4x4xbf16>
    %c0_207 = arith.constant 0 : index
    %c129_208 = arith.constant 129 : index
    %203 = vector.load %arg12[%c0_207, %c129_208] : memref<4x580xbf16, #tpu.memory_space<vmem>>, vector<4x324xbf16>
    %cst_209 = arith.constant dense<0.000000e+00> : vector<4x324xf32>
    %204 = tpu.matmul %202, %203, %cst_209 {dimension_numbers = #tpu.dot_dimension_numbers<[1], [0], [0], [1], [0, 0, 1, 1], [], []>} : vector<4x4xbf16>, vector<4x324xbf16>, vector<4x324xf32> -> vector<4x324xf32>
    %205 = arith.addf %200, %204 : vector<4x324xf32>
    %c1_210 = arith.constant 1 : index
    %c6_211 = arith.constant 6 : index
    %c0_212 = arith.constant 0 : index
    %c0_213 = arith.constant 0 : index
    %206 = vector.load %arg4[%c1_210, %c6_211, %c0_212, %c0_213] : memref<2x9x4x4xbf16, #tpu.memory_space<vmem>>, vector<1x1x4x4xbf16>
    %207 = vector.shape_cast %206 : vector<1x1x4x4xbf16> to vector<4x4xbf16>
    %c0_214 = arith.constant 0 : index
    %c145_215 = arith.constant 145 : index
    %208 = vector.load %arg12[%c0_214, %c145_215] : memref<4x580xbf16, #tpu.memory_space<vmem>>, vector<4x324xbf16>
    %cst_216 = arith.constant dense<0.000000e+00> : vector<4x324xf32>
    %209 = tpu.matmul %207, %208, %cst_216 {dimension_numbers = #tpu.dot_dimension_numbers<[1], [0], [0], [1], [0, 0, 1, 1], [], []>} : vector<4x4xbf16>, vector<4x324xbf16>, vector<4x324xf32> -> vector<4x324xf32>
    %210 = arith.addf %205, %209 : vector<4x324xf32>
    %c1_217 = arith.constant 1 : index
    %c7_218 = arith.constant 7 : index
    %c0_219 = arith.constant 0 : index
    %c0_220 = arith.constant 0 : index
    %211 = vector.load %arg4[%c1_217, %c7_218, %c0_219, %c0_220] : memref<2x9x4x4xbf16, #tpu.memory_space<vmem>>, vector<1x1x4x4xbf16>
    %212 = vector.shape_cast %211 : vector<1x1x4x4xbf16> to vector<4x4xbf16>
    %c0_221 = arith.constant 0 : index
    %c146_222 = arith.constant 146 : index
    %213 = vector.load %arg12[%c0_221, %c146_222] : memref<4x580xbf16, #tpu.memory_space<vmem>>, vector<4x324xbf16>
    %cst_223 = arith.constant dense<0.000000e+00> : vector<4x324xf32>
    %214 = tpu.matmul %212, %213, %cst_223 {dimension_numbers = #tpu.dot_dimension_numbers<[1], [0], [0], [1], [0, 0, 1, 1], [], []>} : vector<4x4xbf16>, vector<4x324xbf16>, vector<4x324xf32> -> vector<4x324xf32>
    %215 = arith.addf %210, %214 : vector<4x324xf32>
    %c1_224 = arith.constant 1 : index
    %c8_225 = arith.constant 8 : index
    %c0_226 = arith.constant 0 : index
    %c0_227 = arith.constant 0 : index
    %216 = vector.load %arg4[%c1_224, %c8_225, %c0_226, %c0_227] : memref<2x9x4x4xbf16, #tpu.memory_space<vmem>>, vector<1x1x4x4xbf16>
    %217 = vector.shape_cast %216 : vector<1x1x4x4xbf16> to vector<4x4xbf16>
    %c0_228 = arith.constant 0 : index
    %c147_229 = arith.constant 147 : index
    %218 = vector.load %arg12[%c0_228, %c147_229] : memref<4x580xbf16, #tpu.memory_space<vmem>>, vector<4x324xbf16>
    %cst_230 = arith.constant dense<0.000000e+00> : vector<4x324xf32>
    %219 = tpu.matmul %217, %218, %cst_230 {dimension_numbers = #tpu.dot_dimension_numbers<[1], [0], [0], [1], [0, 0, 1, 1], [], []>} : vector<4x4xbf16>, vector<4x324xbf16>, vector<4x324xf32> -> vector<4x324xf32>
    %220 = arith.addf %215, %219 : vector<4x324xf32>
    %221 = vector.broadcast %176 : vector<4x1xf32> to vector<4x324xf32>
    %222 = arith.addf %220, %221 : vector<4x324xf32>
    %cst_231 = arith.constant 0.000000e+00 : f32
    %223 = vector.broadcast %cst_231 : f32 to vector<4x324xf32>
    %224 = arith.subf %223, %222 : vector<4x324xf32>
    %225 = math.exp %224 : vector<4x324xf32>
    %cst_232 = arith.constant 1.000000e+00 : f32
    %226 = vector.broadcast %cst_232 : f32 to vector<4x324xf32>
    %227 = arith.addf %226, %225 : vector<4x324xf32>
    %cst_233 = arith.constant 1.000000e+00 : f32
    %228 = vector.broadcast %cst_233 : f32 to vector<4x324xf32>
    %229 = arith.divf %228, %227 : vector<4x324xf32>
    %230 = arith.mulf %222, %229 : vector<4x324xf32>
    %231 = vector.broadcast %0 : vector<1x324xf32> to vector<4x324xf32>
    %232 = arith.mulf %230, %231 : vector<4x324xf32>
    %233 = arith.truncf %232 : vector<4x324xf32> to vector<4x324xbf16>
    %c0_234 = arith.constant 0 : index
    %c128_235 = arith.constant 128 : index
    %234 = vector.load %arg12[%c0_234, %c128_235] : memref<4x580xbf16, #tpu.memory_space<vmem>>, vector<4x324xbf16>
    tpu.vector_store %arg12[%c0_234, %c128_235], %233 {strides = array<i32>} : memref<4x580xbf16, #tpu.memory_space<vmem>>, vector<4x324xbf16>,
    %c1_236 = arith.constant 1 : index
    %c0_237 = arith.constant 0 : index
    %c0_238 = arith.constant 0 : index
    %235 = vector.load %arg7[%c1_236, %c0_237, %c0_238] : memref<2x4x1xf32, #tpu.memory_space<vmem>>, vector<1x4x1xf32>
    %236 = vector.shape_cast %235 : vector<1x4x1xf32> to vector<4x1xf32>
    %c1_239 = arith.constant 1 : index
    %c0_240 = arith.constant 0 : index
    %c0_241 = arith.constant 0 : index
    %c0_242 = arith.constant 0 : index
    %237 = vector.load %arg6[%c1_239, %c0_240, %c0_241, %c0_242] : memref<2x9x4x4xbf16, #tpu.memory_space<vmem>>, vector<1x1x4x4xbf16>
    %238 = vector.shape_cast %237 : vector<1x1x4x4xbf16> to vector<4x4xbf16>
    %c0_243 = arith.constant 0 : index
    %c109_244 = arith.constant 109 : index
    %239 = vector.load %arg12[%c0_243, %c109_244] : memref<4x580xbf16, #tpu.memory_space<vmem>>, vector<4x324xbf16>
    %cst_245 = arith.constant dense<0.000000e+00> : vector<4x324xf32>
    %240 = tpu.matmul %238, %239, %cst_245 {dimension_numbers = #tpu.dot_dimension_numbers<[1], [0], [0], [1], [0, 0, 1, 1], [], []>} : vector<4x4xbf16>, vector<4x324xbf16>, vector<4x324xf32> -> vector<4x324xf32>
    %c1_246 = arith.constant 1 : index
    %c1_247 = arith.constant 1 : index
    %c0_248 = arith.constant 0 : index
    %c0_249 = arith.constant 0 : index
    %241 = vector.load %arg6[%c1_246, %c1_247, %c0_248, %c0_249] : memref<2x9x4x4xbf16, #tpu.memory_space<vmem>>, vector<1x1x4x4xbf16>
    %242 = vector.shape_cast %241 : vector<1x1x4x4xbf16> to vector<4x4xbf16>
    %c0_250 = arith.constant 0 : index
    %c110_251 = arith.constant 110 : index
    %243 = vector.load %arg12[%c0_250, %c110_251] : memref<4x580xbf16, #tpu.memory_space<vmem>>, vector<4x324xbf16>
    %cst_252 = arith.constant dense<0.000000e+00> : vector<4x324xf32>
    %244 = tpu.matmul %242, %243, %cst_252 {dimension_numbers = #tpu.dot_dimension_numbers<[1], [0], [0], [1], [0, 0, 1, 1], [], []>} : vector<4x4xbf16>, vector<4x324xbf16>, vector<4x324xf32> -> vector<4x324xf32>
    %245 = arith.addf %240, %244 : vector<4x324xf32>
    %c1_253 = arith.constant 1 : index
    %c2_254 = arith.constant 2 : index
    %c0_255 = arith.constant 0 : index
    %c0_256 = arith.constant 0 : index
    %246 = vector.load %arg6[%c1_253, %c2_254, %c0_255, %c0_256] : memref<2x9x4x4xbf16, #tpu.memory_space<vmem>>, vector<1x1x4x4xbf16>
    %247 = vector.shape_cast %246 : vector<1x1x4x4xbf16> to vector<4x4xbf16>
    %c0_257 = arith.constant 0 : index
    %c111_258 = arith.constant 111 : index
    %248 = vector.load %arg12[%c0_257, %c111_258] : memref<4x580xbf16, #tpu.memory_space<vmem>>, vector<4x324xbf16>
    %cst_259 = arith.constant dense<0.000000e+00> : vector<4x324xf32>
    %249 = tpu.matmul %247, %248, %cst_259 {dimension_numbers = #tpu.dot_dimension_numbers<[1], [0], [0], [1], [0, 0, 1, 1], [], []>} : vector<4x4xbf16>, vector<4x324xbf16>, vector<4x324xf32> -> vector<4x324xf32>
    %250 = arith.addf %245, %249 : vector<4x324xf32>
    %c1_260 = arith.constant 1 : index
    %c3_261 = arith.constant 3 : index
    %c0_262 = arith.constant 0 : index
    %c0_263 = arith.constant 0 : index
    %251 = vector.load %arg6[%c1_260, %c3_261, %c0_262, %c0_263] : memref<2x9x4x4xbf16, #tpu.memory_space<vmem>>, vector<1x1x4x4xbf16>
    %252 = vector.shape_cast %251 : vector<1x1x4x4xbf16> to vector<4x4xbf16>
    %c0_264 = arith.constant 0 : index
    %c127_265 = arith.constant 127 : index
    %253 = vector.load %arg12[%c0_264, %c127_265] : memref<4x580xbf16, #tpu.memory_space<vmem>>, vector<4x324xbf16>
    %cst_266 = arith.constant dense<0.000000e+00> : vector<4x324xf32>
    %254 = tpu.matmul %252, %253, %cst_266 {dimension_numbers = #tpu.dot_dimension_numbers<[1], [0], [0], [1], [0, 0, 1, 1], [], []>} : vector<4x4xbf16>, vector<4x324xbf16>, vector<4x324xf32> -> vector<4x324xf32>
    %255 = arith.addf %250, %254 : vector<4x324xf32>
    %c1_267 = arith.constant 1 : index
    %c4_268 = arith.constant 4 : index
    %c0_269 = arith.constant 0 : index
    %c0_270 = arith.constant 0 : index
    %256 = vector.load %arg6[%c1_267, %c4_268, %c0_269, %c0_270] : memref<2x9x4x4xbf16, #tpu.memory_space<vmem>>, vector<1x1x4x4xbf16>
    %257 = vector.shape_cast %256 : vector<1x1x4x4xbf16> to vector<4x4xbf16>
    %c0_271 = arith.constant 0 : index
    %c128_272 = arith.constant 128 : index
    %258 = vector.load %arg12[%c0_271, %c128_272] : memref<4x580xbf16, #tpu.memory_space<vmem>>, vector<4x324xbf16>
    %cst_273 = arith.constant dense<0.000000e+00> : vector<4x324xf32>
    %259 = tpu.matmul %257, %258, %cst_273 {dimension_numbers = #tpu.dot_dimension_numbers<[1], [0], [0], [1], [0, 0, 1, 1], [], []>} : vector<4x4xbf16>, vector<4x324xbf16>, vector<4x324xf32> -> vector<4x324xf32>
    %260 = arith.addf %255, %259 : vector<4x324xf32>
    %c1_274 = arith.constant 1 : index
    %c5_275 = arith.constant 5 : index
    %c0_276 = arith.constant 0 : index
    %c0_277 = arith.constant 0 : index
    %261 = vector.load %arg6[%c1_274, %c5_275, %c0_276, %c0_277] : memref<2x9x4x4xbf16, #tpu.memory_space<vmem>>, vector<1x1x4x4xbf16>
    %262 = vector.shape_cast %261 : vector<1x1x4x4xbf16> to vector<4x4xbf16>
    %c0_278 = arith.constant 0 : index
    %c129_279 = arith.constant 129 : index
    %263 = vector.load %arg12[%c0_278, %c129_279] : memref<4x580xbf16, #tpu.memory_space<vmem>>, vector<4x324xbf16>
    %cst_280 = arith.constant dense<0.000000e+00> : vector<4x324xf32>
    %264 = tpu.matmul %262, %263, %cst_280 {dimension_numbers = #tpu.dot_dimension_numbers<[1], [0], [0], [1], [0, 0, 1, 1], [], []>} : vector<4x4xbf16>, vector<4x324xbf16>, vector<4x324xf32> -> vector<4x324xf32>
    %265 = arith.addf %260, %264 : vector<4x324xf32>
    %c1_281 = arith.constant 1 : index
    %c6_282 = arith.constant 6 : index
    %c0_283 = arith.constant 0 : index
    %c0_284 = arith.constant 0 : index
    %266 = vector.load %arg6[%c1_281, %c6_282, %c0_283, %c0_284] : memref<2x9x4x4xbf16, #tpu.memory_space<vmem>>, vector<1x1x4x4xbf16>
    %267 = vector.shape_cast %266 : vector<1x1x4x4xbf16> to vector<4x4xbf16>
    %c0_285 = arith.constant 0 : index
    %c145_286 = arith.constant 145 : index
    %268 = vector.load %arg12[%c0_285, %c145_286] : memref<4x580xbf16, #tpu.memory_space<vmem>>, vector<4x324xbf16>
    %cst_287 = arith.constant dense<0.000000e+00> : vector<4x324xf32>
    %269 = tpu.matmul %267, %268, %cst_287 {dimension_numbers = #tpu.dot_dimension_numbers<[1], [0], [0], [1], [0, 0, 1, 1], [], []>} : vector<4x4xbf16>, vector<4x324xbf16>, vector<4x324xf32> -> vector<4x324xf32>
    %270 = arith.addf %265, %269 : vector<4x324xf32>
    %c1_288 = arith.constant 1 : index
    %c7_289 = arith.constant 7 : index
    %c0_290 = arith.constant 0 : index
    %c0_291 = arith.constant 0 : index
    %271 = vector.load %arg6[%c1_288, %c7_289, %c0_290, %c0_291] : memref<2x9x4x4xbf16, #tpu.memory_space<vmem>>, vector<1x1x4x4xbf16>
    %272 = vector.shape_cast %271 : vector<1x1x4x4xbf16> to vector<4x4xbf16>
    %c0_292 = arith.constant 0 : index
    %c146_293 = arith.constant 146 : index
    %273 = vector.load %arg12[%c0_292, %c146_293] : memref<4x580xbf16, #tpu.memory_space<vmem>>, vector<4x324xbf16>
    %cst_294 = arith.constant dense<0.000000e+00> : vector<4x324xf32>
    %274 = tpu.matmul %272, %273, %cst_294 {dimension_numbers = #tpu.dot_dimension_numbers<[1], [0], [0], [1], [0, 0, 1, 1], [], []>} : vector<4x4xbf16>, vector<4x324xbf16>, vector<4x324xf32> -> vector<4x324xf32>
    %275 = arith.addf %270, %274 : vector<4x324xf32>
    %c1_295 = arith.constant 1 : index
    %c8_296 = arith.constant 8 : index
    %c0_297 = arith.constant 0 : index
    %c0_298 = arith.constant 0 : index
    %276 = vector.load %arg6[%c1_295, %c8_296, %c0_297, %c0_298] : memref<2x9x4x4xbf16, #tpu.memory_space<vmem>>, vector<1x1x4x4xbf16>
    %277 = vector.shape_cast %276 : vector<1x1x4x4xbf16> to vector<4x4xbf16>
    %c0_299 = arith.constant 0 : index
    %c147_300 = arith.constant 147 : index
    %278 = vector.load %arg12[%c0_299, %c147_300] : memref<4x580xbf16, #tpu.memory_space<vmem>>, vector<4x324xbf16>
    %cst_301 = arith.constant dense<0.000000e+00> : vector<4x324xf32>
    %279 = tpu.matmul %277, %278, %cst_301 {dimension_numbers = #tpu.dot_dimension_numbers<[1], [0], [0], [1], [0, 0, 1, 1], [], []>} : vector<4x4xbf16>, vector<4x324xbf16>, vector<4x324xf32> -> vector<4x324xf32>
    %280 = arith.addf %275, %279 : vector<4x324xf32>
    %281 = vector.broadcast %236 : vector<4x1xf32> to vector<4x324xf32>
    %282 = arith.addf %280, %281 : vector<4x324xf32>
    %cst_302 = arith.constant 0.000000e+00 : f32
    %283 = vector.broadcast %cst_302 : f32 to vector<4x324xf32>
    %284 = arith.subf %283, %282 : vector<4x324xf32>
    %285 = math.exp %284 : vector<4x324xf32>
    %cst_303 = arith.constant 1.000000e+00 : f32
    %286 = vector.broadcast %cst_303 : f32 to vector<4x324xf32>
    %287 = arith.addf %286, %285 : vector<4x324xf32>
    %cst_304 = arith.constant 1.000000e+00 : f32
    %288 = vector.broadcast %cst_304 : f32 to vector<4x324xf32>
    %289 = arith.divf %288, %287 : vector<4x324xf32>
    %290 = arith.mulf %282, %289 : vector<4x324xf32>
    %291 = arith.addf %290, %165 : vector<4x324xf32>
    %c3_305 = arith.constant 3 : index
    %c0_306 = arith.constant 0 : index
    %c0_307 = arith.constant 0 : index
    %292 = vector.load %arg8[%c3_305, %c0_306, %c0_307] : memref<4x8x4xbf16, #tpu.memory_space<vmem>>, vector<1x8x4xbf16>
    %293 = vector.shape_cast %292 : vector<1x8x4xbf16> to vector<8x4xbf16>
    %294 = arith.truncf %291 : vector<4x324xf32> to vector<4x324xbf16>
    %cst_308 = arith.constant dense<0.000000e+00> : vector<8x324xf32>
    %295 = tpu.matmul %293, %294, %cst_308 {dimension_numbers = #tpu.dot_dimension_numbers<[1], [0], [0], [1], [0, 0, 1, 1], [], []>} : vector<8x4xbf16>, vector<4x324xbf16>, vector<8x324xf32> -> vector<8x324xf32>
    %296 = arith.addf %170, %295 : vector<8x324xf32>
    %c0_309 = arith.constant 0 : index
    %c0_310 = arith.constant 0 : index
    %297 = vector.load %arg9[%c0_309, %c0_310] : memref<8x1xf32, #tpu.memory_space<vmem>>, vector<8x1xf32>
    %298 = vector.broadcast %297 : vector<8x1xf32> to vector<8x324xf32>
    %299 = arith.addf %296, %298 : vector<8x324xf32>
    %cst_311 = arith.constant 0.000000e+00 : f32
    %300 = vector.broadcast %cst_311 : f32 to vector<8x324xf32>
    %301 = arith.subf %300, %299 : vector<8x324xf32>
    %302 = math.exp %301 : vector<8x324xf32>
    %cst_312 = arith.constant 1.000000e+00 : f32
    %303 = vector.broadcast %cst_312 : f32 to vector<8x324xf32>
    %304 = arith.addf %303, %302 : vector<8x324xf32>
    %cst_313 = arith.constant 1.000000e+00 : f32
    %305 = vector.broadcast %cst_313 : f32 to vector<8x324xf32>
    %306 = arith.divf %305, %304 : vector<8x324xf32>
    %307 = arith.mulf %299, %306 : vector<8x324xf32>
    %c0_314 = arith.constant 0 : index
    %c0_315 = arith.constant 0 : index
    %c0_316 = arith.constant 0 : index
    %308 = vector.load %arg11[%c0_314, %c0_315, %c0_316] : memref<1x8x324xf32, #tpu.memory_space<vmem>>, vector<1x8x324xf32>
    %309 = vector.shape_cast %308 : vector<1x8x324xf32> to vector<8x324xf32>
    %310 = vector.shape_cast %307 : vector<8x324xf32> to vector<1x8x324xf32>
    tpu.vector_store %arg11[%c0_314, %c0_315, %c0_316], %310 {strides = array<i32>} : memref<1x8x324xf32, #tpu.memory_space<vmem>>, vector<1x8x324xf32>,
    return
  }
  func.func @transform_0(%arg0: i32) -> (i32, i32, i32) {
    %c0_i32 = arith.constant 0 : i32
    %c0_i32_0 = arith.constant 0 : i32
    %c0_i32_1 = arith.constant 0 : i32
    return %arg0, %c0_i32, %c0_i32_0 : i32, i32, i32
  }
  func.func @transform_1(%arg0: i32) -> (i32, i32, i32) {
    %c0_i32 = arith.constant 0 : i32
    %c0_i32_0 = arith.constant 0 : i32
    %c0_i32_1 = arith.constant 0 : i32
    %c0_i32_2 = arith.constant 0 : i32
    return %c0_i32, %c0_i32_0, %c0_i32_1 : i32, i32, i32
  }
  func.func @transform_2(%arg0: i32) -> (i32, i32, i32) {
    %c0_i32 = arith.constant 0 : i32
    %c0_i32_0 = arith.constant 0 : i32
    %c0_i32_1 = arith.constant 0 : i32
    %c0_i32_2 = arith.constant 0 : i32
    return %c0_i32, %c0_i32_0, %c0_i32_1 : i32, i32, i32
  }
  func.func @transform_3(%arg0: i32) -> (i32, i32, i32, i32) {
    %c0_i32 = arith.constant 0 : i32
    %c0_i32_0 = arith.constant 0 : i32
    %c0_i32_1 = arith.constant 0 : i32
    %c0_i32_2 = arith.constant 0 : i32
    %c0_i32_3 = arith.constant 0 : i32
    return %c0_i32, %c0_i32_0, %c0_i32_1, %c0_i32_2 : i32, i32, i32, i32
  }
  func.func @transform_4(%arg0: i32) -> (i32, i32, i32) {
    %c0_i32 = arith.constant 0 : i32
    %c0_i32_0 = arith.constant 0 : i32
    %c0_i32_1 = arith.constant 0 : i32
    %c0_i32_2 = arith.constant 0 : i32
    return %c0_i32, %c0_i32_0, %c0_i32_1 : i32, i32, i32
  }
  func.func @transform_5(%arg0: i32) -> (i32, i32, i32, i32) {
    %c0_i32 = arith.constant 0 : i32
    %c0_i32_0 = arith.constant 0 : i32
    %c0_i32_1 = arith.constant 0 : i32
    %c0_i32_2 = arith.constant 0 : i32
    %c0_i32_3 = arith.constant 0 : i32
    return %c0_i32, %c0_i32_0, %c0_i32_1, %c0_i32_2 : i32, i32, i32, i32
  }
  func.func @transform_6(%arg0: i32) -> (i32, i32, i32) {
    %c0_i32 = arith.constant 0 : i32
    %c0_i32_0 = arith.constant 0 : i32
    %c0_i32_1 = arith.constant 0 : i32
    %c0_i32_2 = arith.constant 0 : i32
    return %c0_i32, %c0_i32_0, %c0_i32_1 : i32, i32, i32
  }
  func.func @transform_7(%arg0: i32) -> (i32, i32, i32) {
    %c0_i32 = arith.constant 0 : i32
    %c0_i32_0 = arith.constant 0 : i32
    %c0_i32_1 = arith.constant 0 : i32
    %c0_i32_2 = arith.constant 0 : i32
    return %c0_i32, %c0_i32_0, %c0_i32_1 : i32, i32, i32
  }
  func.func @transform_8(%arg0: i32) -> (i32, i32) {
    %c0_i32 = arith.constant 0 : i32
    %c0_i32_0 = arith.constant 0 : i32
    %c0_i32_1 = arith.constant 0 : i32
    return %c0_i32, %c0_i32_0 : i32, i32
  }
  func.func @transform_9(%arg0: i32) -> (i32, i32) {
    %c0_i32 = arith.constant 0 : i32
    %c0_i32_0 = arith.constant 0 : i32
    %c0_i32_1 = arith.constant 0 : i32
    return %c0_i32, %c0_i32_0 : i32, i32
  }
  func.func @transform_10(%arg0: i32) -> (i32, i32, i32) {
    %c0_i32 = arith.constant 0 : i32
    %c0_i32_0 = arith.constant 0 : i32
    %c0_i32_1 = arith.constant 0 : i32
    return %arg0, %c0_i32, %c0_i32_0 : i32, i32, i32
  }
}

</mosaic_0001>

<llo_original>
// kernel: _lambda_.1
$region0: #{_lambda_.1}
  #allocation0 [shape = 'u32[]', space=smem, size = 0x4, offset = 0x4, fixed_abs, tag = 'smem constant byte address 0x4 - core index']
  #allocation1 [shape = 'u32[72,128]{1,0:T(1,128)}', space=vmem, size = 0x9000, scoped, tag = 'internal scratch']
  #allocation2 [shape = 'bf16[4,580]{1,0:T(4,128)(2,1)}', space=vmem, size = 0x1400, scoped, tag = 'scratch operand']
  %s0 = inlined_call_operand.vmem [shape: f32[2,4,324], index: 0, kind: input, shape index: {}]
  %s1 = inlined_call_operand.vmem [shape: bf16[2,4,4], index: 1, kind: input, shape index: {}]
  %s2 = inlined_call_operand.vmem [shape: f32[2,4,1], index: 2, kind: input, shape index: {}]
  %s3 = inlined_call_operand.vmem [shape: bf16[2,9,4,4], index: 3, kind: input, shape index: {}]
  %s4 = inlined_call_operand.vmem [shape: f32[2,4,1], index: 4, kind: input, shape index: {}]
  %s5 = inlined_call_operand.vmem [shape: bf16[2,9,4,4], index: 5, kind: input, shape index: {}]
  %s6 = inlined_call_operand.vmem [shape: f32[2,4,1], index: 6, kind: input, shape index: {}]
  %s7 = inlined_call_operand.vmem [shape: bf16[4,8,4], index: 7, kind: input, shape index: {}]
  %s8 = inlined_call_operand.vmem [shape: f32[8,1], index: 8, kind: input, shape index: {}]
  %s9 = inlined_call_operand.vmem [shape: f32[1,324], index: 9, kind: input, shape index: {}]
  %s10 = inlined_call_operand.vmem [shape: f32[2,8,324], index: 10, kind: output, shape index: {}]
  %s11 = sld [smem:[#allocation0]]
  $region73: #{_lambda_.1} parent=0
    _
  %s13 = ssub.s32 1, %s11
  %s14 = scalar_select 0, %s13, %s11
  loop: start=0, step=1, limit=4
  $region2: #{_lambda_.1} parent=0 // loop_pre_header
    _
  $region3: #{_lambda_.1} parent=0 // loop_header
    %s16 = sphi 0, %s20
    %p17 = scmp.ge.s32.totalorder %s16, 4
    %s26 = sphi 0, %s28
    %s29 = sphi 0, %s26
    %s30 = sphi 0, %s29
    %s46 = sphi 0, %s30
    %s50 = sphi 0, %s50
    %s52 = sphi 0, %s50
    %s53 = sphi 0, %s52
    %s67 = sphi 0, %s53
    %s71 = sphi 0, %s71
    %s73 = sphi 0, %s71
    %s74 = sphi 0, %s73
    %s88 = sphi 0, %s74
    %s92 = sphi 0, %s92
    %s94 = sphi 0, %s92
    %s95 = sphi 0, %s94
    %s109 = sphi 0, %s95
    %s113 = sphi 0, %s113
    %s115 = sphi 0, %s113
    %s116 = sphi 0, %s115
    %s130 = sphi 0, %s116
    %s134 = sphi 0, %s134
    %s136 = sphi 0, %s134
    %s137 = sphi 0, %s136
    %s151 = sphi 0, %s137
    %s155 = sphi 0, %s155
    %s157 = sphi 0, %s155
    %s158 = sphi 0, %s157
    %s172 = sphi 0, %s158
    %s176 = sphi 0, %s176
    %s178 = sphi 0, %s176
    %s179 = sphi 0, %s178
    %s193 = sphi 0, %s179
    %s197 = sphi 0, %s197
    %s199 = sphi 0, %s197
    %s200 = sphi 0, %s199
    %s214 = sphi 0, %s200
    %s218 = sphi 0, %s218
    %s220 = sphi 0, %s218
    %s221 = sphi 0, %s220
    %s235 = sphi 0, %s221
    %s241 = sphi 0, %s243
    %s244 = sphi 0, %s241
    %s245 = sphi 0, %s244
    %s261 = sphi 0, %s245
  $region4: #{_lambda_.1} parent=0 // loop_header_branch
    %19 = sbr.rel (%p17) target = $region8
  $region5: #{_lambda_.1} parent=0 // loop_body
    %s21 = ssub.s32 %s16, 1
    %s22 = ssub.s32 %s16, 2
    %s23 = sadd.s32 %s16, 1
    %s24 = ssub.s32 %s16, %s23
    %p25 = scmp.eq.s32.totalorder %s24, 0
    %s27 = sadd.s32 %s26, 1
    %s28 = scalar_select %p25, %s26, %s27
    %p31 = pneg %p25
    %p32 = scmp.eq.s32.totalorder %s16, 1
    %p33 = por %p31, %p32
    %p34 = scmp.ne.s32.totalorder %s26, %s29
    %p35 = scmp.eq.s32.totalorder %s16, 0
    %p36 = por %p34, %p35
    %p37 = scmp.ne.s32.totalorder %s26, %s29
    %p38 = scmp.eq.s32.totalorder %s21, 1
    %p39 = por %p37, %p38
    %p40 = scmp.ne.s32.totalorder %s29, %s30
    %p41 = scmp.eq.s32.totalorder %s21, 0
    %p42 = por %p40, %p41
    %p43 = scmp.ne.s32.totalorder %s29, %s30
    %p44 = scmp.eq.s32.totalorder %s22, 1
    %p45 = por %p43, %p44
    %p47 = scmp.ne.s32.totalorder %s30, %s46
    %p48 = scmp.eq.s32.totalorder %s22, 0
    %p49 = por %p47, %p48
    %s51 = sadd.s32 %s50, 1
    %p54 = scmp.eq.s32.totalorder %s16, 1
    %p55 = scmp.ne.s32.totalorder %s50, %s52
    %p56 = scmp.eq.s32.totalorder %s16, 0
    %p57 = por %p55, %p56
    %p58 = scmp.ne.s32.totalorder %s50, %s52
    %p59 = scmp.eq.s32.totalorder %s21, 1
    %p60 = por %p58, %p59
    %p61 = scmp.ne.s32.totalorder %s52, %s53
    %p62 = scmp.eq.s32.totalorder %s21, 0
    %p63 = por %p61, %p62
    %p64 = scmp.ne.s32.totalorder %s52, %s53
    %p65 = scmp.eq.s32.totalorder %s22, 1
    %p66 = por %p64, %p65
    %p68 = scmp.ne.s32.totalorder %s53, %s67
    %p69 = scmp.eq.s32.totalorder %s22, 0
    %p70 = por %p68, %p69
    %s72 = sadd.s32 %s71, 1
    %p75 = scmp.eq.s32.totalorder %s16, 1
    %p76 = scmp.ne.s32.totalorder %s71, %s73
    %p77 = scmp.eq.s32.totalorder %s16, 0
    %p78 = por %p76, %p77
    %p79 = scmp.ne.s32.totalorder %s71, %s73
    %p80 = scmp.eq.s32.totalorder %s21, 1
    %p81 = por %p79, %p80
    %p82 = scmp.ne.s32.totalorder %s73, %s74
    %p83 = scmp.eq.s32.totalorder %s21, 0
    %p84 = por %p82, %p83
    %p85 = scmp.ne.s32.totalorder %s73, %s74
    %p86 = scmp.eq.s32.totalorder %s22, 1
    %p87 = por %p85, %p86
    %p89 = scmp.ne.s32.totalorder %s74, %s88
    %p90 = scmp.eq.s32.totalorder %s22, 0
    %p91 = por %p89, %p90
    %s93 = sadd.s32 %s92, 1
    %p96 = scmp.eq.s32.totalorder %s16, 1
    %p97 = scmp.ne.s32.totalorder %s92, %s94
    %p98 = scmp.eq.s32.totalorder %s16, 0
    %p99 = por %p97, %p98
    %p100 = scmp.ne.s32.totalorder %s92, %s94
    %p101 = scmp.eq.s32.totalorder %s21, 1
    %p102 = por %p100, %p101
    %p103 = scmp.ne.s32.totalorder %s94, %s95
    %p104 = scmp.eq.s32.totalorder %s21, 0
    %p105 = por %p103, %p104
    %p106 = scmp.ne.s32.totalorder %s94, %s95
    %p107 = scmp.eq.s32.totalorder %s22, 1
    %p108 = por %p106, %p107
    %p110 = scmp.ne.s32.totalorder %s95, %s109
    %p111 = scmp.eq.s32.totalorder %s22, 0
    %p112 = por %p110, %p111
    %s114 = sadd.s32 %s113, 1
    %p117 = scmp.eq.s32.totalorder %s16, 1
    %p118 = scmp.ne.s32.totalorder %s113, %s115
    %p119 = scmp.eq.s32.totalorder %s16, 0
    %p120 = por %p118, %p119
    %p121 = scmp.ne.s32.totalorder %s113, %s115
    %p122 = scmp.eq.s32.totalorder %s21, 1
    %p123 = por %p121, %p122
    %p124 = scmp.ne.s32.totalorder %s115, %s116
    %p125 = scmp.eq.s32.totalorder %s21, 0
    %p126 = por %p124, %p125
    %p127 = scmp.ne.s32.totalorder %s115, %s116
    %p128 = scmp.eq.s32.totalorder %s22, 1
    %p129 = por %p127, %p128
    %p131 = scmp.ne.s32.totalorder %s116, %s130
    %p132 = scmp.eq.s32.totalorder %s22, 0
    %p133 = por %p131, %p132
    %s135 = sadd.s32 %s134, 1
    %p138 = scmp.eq.s32.totalorder %s16, 1
    %p139 = scmp.ne.s32.totalorder %s134, %s136
    %p140 = scmp.eq.s32.totalorder %s16, 0
    %p141 = por %p139, %p140
    %p142 = scmp.ne.s32.totalorder %s134, %s136
    %p143 = scmp.eq.s32.totalorder %s21, 1
    %p144 = por %p142, %p143
    %p145 = scmp.ne.s32.totalorder %s136, %s137
    %p146 = scmp.eq.s32.totalorder %s21, 0
    %p147 = por %p145, %p146
    %p148 = scmp.ne.s32.totalorder %s136, %s137
    %p149 = scmp.eq.s32.totalorder %s22, 1
    %p150 = por %p148, %p149
    %p152 = scmp.ne.s32.totalorder %s137, %s151
    %p153 = scmp.eq.s32.totalorder %s22, 0
    %p154 = por %p152, %p153
    %s156 = sadd.s32 %s155, 1
    %p159 = scmp.eq.s32.totalorder %s16, 1
    %p160 = scmp.ne.s32.totalorder %s155, %s157
    %p161 = scmp.eq.s32.totalorder %s16, 0
    %p162 = por %p160, %p161
    %p163 = scmp.ne.s32.totalorder %s155, %s157
    %p164 = scmp.eq.s32.totalorder %s21, 1
    %p165 = por %p163, %p164
    %p166 = scmp.ne.s32.totalorder %s157, %s158
    %p167 = scmp.eq.s32.totalorder %s21, 0
    %p168 = por %p166, %p167
    %p169 = scmp.ne.s32.totalorder %s157, %s158
    %p170 = scmp.eq.s32.totalorder %s22, 1
    %p171 = por %p169, %p170
    %p173 = scmp.ne.s32.totalorder %s158, %s172
    %p174 = scmp.eq.s32.totalorder %s22, 0
    %p175 = por %p173, %p174
    %s177 = sadd.s32 %s176, 1
    %p180 = scmp.eq.s32.totalorder %s16, 1
    %p181 = scmp.ne.s32.totalorder %s176, %s178
    %p182 = scmp.eq.s32.totalorder %s16, 0
    %p183 = por %p181, %p182
    %p184 = scmp.ne.s32.totalorder %s176, %s178
    %p185 = scmp.eq.s32.totalorder %s21, 1
    %p186 = por %p184, %p185
    %p187 = scmp.ne.s32.totalorder %s178, %s179
    %p188 = scmp.eq.s32.totalorder %s21, 0
    %p189 = por %p187, %p188
    %p190 = scmp.ne.s32.totalorder %s178, %s179
    %p191 = scmp.eq.s32.totalorder %s22, 1
    %p192 = por %p190, %p191
    %p194 = scmp.ne.s32.totalorder %s179, %s193
    %p195 = scmp.eq.s32.totalorder %s22, 0
    %p196 = por %p194, %p195
    %s198 = sadd.s32 %s197, 1
    %p201 = scmp.eq.s32.totalorder %s16, 1
    %p202 = scmp.ne.s32.totalorder %s197, %s199
    %p203 = scmp.eq.s32.totalorder %s16, 0
    %p204 = por %p202, %p203
    %p205 = scmp.ne.s32.totalorder %s197, %s199
    %p206 = scmp.eq.s32.totalorder %s21, 1
    %p207 = por %p205, %p206
    %p208 = scmp.ne.s32.totalorder %s199, %s200
    %p209 = scmp.eq.s32.totalorder %s21, 0
    %p210 = por %p208, %p209
    %p211 = scmp.ne.s32.totalorder %s199, %s200
    %p212 = scmp.eq.s32.totalorder %s22, 1
    %p213 = por %p211, %p212
    %p215 = scmp.ne.s32.totalorder %s200, %s214
    %p216 = scmp.eq.s32.totalorder %s22, 0
    %p217 = por %p215, %p216
    %s219 = sadd.s32 %s218, 1
    %p222 = scmp.eq.s32.totalorder %s16, 1
    %p223 = scmp.ne.s32.totalorder %s218, %s220
    %p224 = scmp.eq.s32.totalorder %s16, 0
    %p225 = por %p223, %p224
    %p226 = scmp.ne.s32.totalorder %s218, %s220
    %p227 = scmp.eq.s32.totalorder %s21, 1
    %p228 = por %p226, %p227
    %p229 = scmp.ne.s32.totalorder %s220, %s221
    %p230 = scmp.eq.s32.totalorder %s21, 0
    %p231 = por %p229, %p230
    %p232 = scmp.ne.s32.totalorder %s220, %s221
    %p233 = scmp.eq.s32.totalorder %s22, 1
    %p234 = por %p232, %p233
    %p236 = scmp.ne.s32.totalorder %s221, %s235
    %p237 = scmp.eq.s32.totalorder %s22, 0
    %p238 = por %p236, %p237
    %s239 = ssub.s32 %s16, %s23
    %p240 = scmp.eq.s32.totalorder %s239, 0
    %s242 = sadd.s32 %s241, 1
    %s243 = scalar_select %p240, %s241, %s242
    %p246 = pneg %p240
    %p247 = scmp.eq.s32.totalorder %s16, 1
    %p248 = por %p246, %p247
    %p249 = scmp.ne.s32.totalorder %s241, %s244
    %p250 = scmp.eq.s32.totalorder %s16, 0
    %p251 = por %p249, %p250
    %p252 = scmp.ne.s32.totalorder %s241, %s244
    %p253 = scmp.eq.s32.totalorder %s21, 1
    %p254 = por %p252, %p253
    %p255 = scmp.ne.s32.totalorder %s244, %s245
    %p256 = scmp.eq.s32.totalorder %s21, 0
    %p257 = por %p255, %p256
    %p258 = scmp.ne.s32.totalorder %s244, %s245
    %p259 = scmp.eq.s32.totalorder %s22, 1
    %p260 = por %p258, %p259
    %p262 = scmp.ne.s32.totalorder %s245, %s261
    %p263 = scmp.eq.s32.totalorder %s22, 0
    %p264 = por %p262, %p263
    %p265 = scmp.le.s32.totalorder 1, %s16
    %p266 = scmp.lt.s32.totalorder %s16, 3
    %p267 = pnand %p265, %p266
    %p268 = pneg %p267
    // Predicated region
    $region9: #{_lambda_.1} parent=5 // pred_check
      _
    $region10: #{_lambda_.1} parent=5 // pred_check_branch
      %270 = sbr.rel (%p267) target = $region12
    $region11: #{_lambda_.1} parent=5 // pred_region
      %s271 = ssub.s32 %s16, 1
      // Predicated region
      $region13: #{_lambda_.1} parent=11 // pred_check
        %p272 = pneg %p63
      $region14: #{_lambda_.1} parent=11 // pred_check_branch
        %274 = sbr.rel (%p272) target = $region16
      $region15: #{_lambda_.1} parent=11 // pred_region
        _
      $region16: #{_lambda_.1} parent=11 // pred_fallthru
        _
      // Predicated region
      $region17: #{_lambda_.1} parent=11 // pred_check
        %p275 = pneg %p84
      $region18: #{_lambda_.1} parent=11 // pred_check_branch
        %277 = sbr.rel (%p275) target = $region20
      $region19: #{_lambda_.1} parent=11 // pred_region
        _
      $region20: #{_lambda_.1} parent=11 // pred_fallthru
        _
      // Predicated region
      $region21: #{_lambda_.1} parent=11 // pred_check
        %p278 = pneg %p105
      $region22: #{_lambda_.1} parent=11 // pred_check_branch
        %280 = sbr.rel (%p278) target = $region24
      $region23: #{_lambda_.1} parent=11 // pred_region
        _
      $region24: #{_lambda_.1} parent=11 // pred_fallthru
        _
      // Predicated region
      $region25: #{_lambda_.1} parent=11 // pred_check
        %p281 = pneg %p126
      $region26: #{_lambda_.1} parent=11 // pred_check_branch
        %283 = sbr.rel (%p281) target = $region28
      $region27: #{_lambda_.1} parent=11 // pred_region
        _
      $region28: #{_lambda_.1} parent=11 // pred_fallthru
        _
      // Predicated region
      $region29: #{_lambda_.1} parent=11 // pred_check
        %p284 = pneg %p147
      $region30: #{_lambda_.1} parent=11 // pred_check_branch
        %286 = sbr.rel (%p284) target = $region32
      $region31: #{_lambda_.1} parent=11 // pred_region
        _
      $region32: #{_lambda_.1} parent=11 // pred_fallthru
        _
      // Predicated region
      $region33: #{_lambda_.1} parent=11 // pred_check
        %p287 = pneg %p168
      $region34: #{_lambda_.1} parent=11 // pred_check_branch
        %289 = sbr.rel (%p287) target = $region36
      $region35: #{_lambda_.1} parent=11 // pred_region
        _
      $region36: #{_lambda_.1} parent=11 // pred_fallthru
        _
      // Predicated region
      $region37: #{_lambda_.1} parent=11 // pred_check
        %p290 = pneg %p189
      $region38: #{_lambda_.1} parent=11 // pred_check_branch
        %292 = sbr.rel (%p290) target = $region40
      $region39: #{_lambda_.1} parent=11 // pred_region
        _
      $region40: #{_lambda_.1} parent=11 // pred_fallthru
        _
      // Predicated region
      $region41: #{_lambda_.1} parent=11 // pred_check
        %p293 = pneg %p210
      $region42: #{_lambda_.1} parent=11 // pred_check_branch
        %295 = sbr.rel (%p293) target = $region44
      $region43: #{_lambda_.1} parent=11 // pred_region
        _
      $region44: #{_lambda_.1} parent=11 // pred_fallthru
        _
      // Predicated region
      $region45: #{_lambda_.1} parent=11 // pred_check
        %p296 = pneg %p231
      $region46: #{_lambda_.1} parent=11 // pred_check_branch
        %298 = sbr.rel (%p296) target = $region48
      $region47: #{_lambda_.1} parent=11 // pred_region
        _
      $region48: #{_lambda_.1} parent=11 // pred_fallthru
        _
    $region12: #{_lambda_.1} parent=5 // pred_fallthru
      _
    %p299 = scmp.lt.s32.totalorder %s16, 2
    // Predicated region
    $region49: #{_lambda_.1} parent=5 // pred_check
      %p300 = pneg %p299
    $region50: #{_lambda_.1} parent=5 // pred_check_branch
      %302 = sbr.rel (%p300) target = $region52
    $region51: #{_lambda_.1} parent=5 // pred_region
      // Predicated region
      $region53: #{_lambda_.1} parent=51 // pred_check
        %p303 = pneg %p36
      $region54: #{_lambda_.1} parent=51 // pred_check_branch
        %305 = sbr.rel (%p303) target = $region56
      $region55: #{_lambda_.1} parent=51 // pred_region
        %p306 = scmp.lt.s32.totalorder %s16, 1
        %s307 = scalar_select %p306, %s16, 1
        %s308 = smul.addr %s307, 3
        %s309 = smul.addr %s308, 4
        %s310 = scalar_lea.vmem %s0, %s309
      $region56: #{_lambda_.1} parent=51 // pred_fallthru
        _
    $region52: #{_lambda_.1} parent=5 // pred_fallthru
      _
    %p311 = scmp.le.s32.totalorder 1, %s16
    %p312 = scmp.lt.s32.totalorder %s16, 3
    %p313 = pnand %p311, %p312
    %p314 = pneg %p313
    // Predicated region
    $region57: #{_lambda_.1} parent=5 // pred_check
      _
    $region58: #{_lambda_.1} parent=5 // pred_check_branch
      %316 = sbr.rel (%p313) target = $region60
    $region59: #{_lambda_.1} parent=5 // pred_region
      %s317 = ssub.s32 %s16, 1
      %p318 = scmp.lt.s32.totalorder %s21, 1
      %s319 = scalar_select %p318, %s21, 1
      %s320 = smul.addr %s319, 3
      %s321 = smul.addr %s320, 4
      %s322 = scalar_lea.vmem %s0, %s321
      %p323 = pneg %p42
      %p324 = pneg %p39
      %p325 = pneg %p63
      %p326 = pneg %p60
      %p327 = pneg %p84
      %p328 = pneg %p81
      %p329 = pneg %p105
      %p330 = pneg %p102
      %p331 = pneg %p126
      %p332 = pneg %p123
      %p333 = pneg %p147
      %p334 = pneg %p144
      %p335 = pneg %p168
      %p336 = pneg %p165
      %p337 = pneg %p189
      %p338 = pneg %p186
      %p339 = pneg %p210
      %p340 = pneg %p207
      %p341 = pneg %p231
      %p342 = pneg %p228
      %p343 = pneg %p257
      %p344 = pneg %p254
      %p345 = scmp.lt.s32.totalorder %s21, 1
      %s346 = scalar_select %p345, %s21, 1
      %s347 = smul.addr %s346, 3
      %s348 = smul.addr %s347, 8
      %s349 = scalar_lea.vmem %s10, %s348
      %p350 = scmp.lt.s32.totalorder %s21, 1
      %s351 = scalar_select %p350, %s21, 1
      %s352 = smul.addr %s351, 3
      %s353 = smul.addr %s352, 4
      %s354 = scalar_lea.vmem %s0, %s353
      %p355 = scmp.lt.s32.totalorder %s21, 1
      %s356 = scalar_select %p355, %s21, 1
      %s357 = smul.addr %s356, 3
      %s358 = smul.addr %s357, 8
      %s359 = scalar_lea.vmem %s10, %s358
      %v361 = vld [vmem:[%s9] sm:$0x7]
      %362 = vst [vmem:[#allocation2] sm:$0xff] 0
      %vm363 = vcmask 549888
      %364 = vst.msk [vmem:[#allocation2 + $0x8] sm:$0x3] %vm363, 0
      %v365 = vld [vmem:[%s354] sm:$0xff]
      %v366 = vld [vmem:[%s354 + $0x8] sm:$0xf]
      %369 = vst [vmem:[#allocation1] ss:$2 sm:$0xff] %v365
      %s370 = scalar_lea.vmem [#allocation1], 16
      %371 = vst [vmem:[%s370] ss:$2 sm:$0xff] %v366
      %v372 = vld.sshfl [vmem:[#allocation1] sm:$0xff pattern:$0x75316420]
      %v373 = vld.sshfl [vmem:[#allocation1 + $0x8] sm:$0xff pattern:$0x75316420]
      %v374 = vld.sshfl [vmem:[#allocation1 + $0x10] sm:$0xff pattern:$0x75316420]
      %v378 = vpack.c.bf16 %v372, %v372
      %v379 = vpack.c.bf16 %v373, %v373
      %v380 = vpack.c.bf16 %v374, %v374
      %v381 = vld [vmem:[%s1] sm:$0x3]
      %v382 = vld [vmem:[%s2] sm:$0xf]
      %384 = vset.pattern.permute.xlu0 0
      %385 = vperm.xlu0 %384, %v382
      %v386 = vpop.permute.xlu0 %385
      %vm388 = vcmask 31744
      %v390 = vsel %vm388, %v381, 0
      %vm392 = vcmask 1041408
      %v394 = vsel %vm392, %v378, 0
      %v397 = vsel %vm392, %v379, 0
      %v400 = vsel %vm392, %v380, 0
      %402 = vmatpush.bf16.msra.mxu0 0
      %403 = vmatpush.bf16.msra.mxu0 0
      %404 = vmatpush.bf16.msra.mxu0 0
      %405 = vmatpush.bf16.msra.mxu0 0
      %406 = vmatpush.bf16.msra.mxu0 0
      %407 = vmatpush.bf16.msra.mxu0 0
      %408 = vmatpush.bf16.msra.mxu0 0
      %409 = vmatpush.bf16.msra.mxu0 %v394
      %410 = vmatmul.bf16.gmra.mxu0 %v390
      %v411 = vpop.f32.mrf.mxu0
      %v412 = vadd.f32 %v386, %v411
      %v413 = vpop.f32.mrf.mxu0
      %414 = vdwg.mxu0
      %415 = vmatpush.bf16.msra.mxu0 0
      %416 = vmatpush.bf16.msra.mxu0 0
      %417 = vmatpush.bf16.msra.mxu0 0
      %418 = vmatpush.bf16.msra.mxu0 0
      %419 = vmatpush.bf16.msra.mxu0 0
      %420 = vmatpush.bf16.msra.mxu0 0
      %421 = vmatpush.bf16.msra.mxu0 0
      %422 = vmatpush.bf16.msra.mxu0 %v397
      %423 = vmatmul.bf16.gmra.mxu0 %v390
      %v424 = vpop.f32.mrf.mxu0
      %v425 = vadd.f32 %v386, %v424
      %v426 = vpop.f32.mrf.mxu0
      %427 = vdwg.mxu0
      %428 = vmatpush.bf16.msra.mxu0 0
      %429 = vmatpush.bf16.msra.mxu0 0
      %430 = vmatpush.bf16.msra.mxu0 0
      %431 = vmatpush.bf16.msra.mxu0 0
      %432 = vmatpush.bf16.msra.mxu0 0
      %433 = vmatpush.bf16.msra.mxu0 0
      %434 = vmatpush.bf16.msra.mxu0 0
      %435 = vmatpush.bf16.msra.mxu0 %v400
      %436 = vmatmul.bf16.gmra.mxu0 %v390
      %v437 = vpop.f32.mrf.mxu0
      %v438 = vadd.f32 %v386, %v437
      %v439 = vpop.f32.mrf.mxu0
      %440 = vdwg.mxu0
      %v441 = vsub.f32 0.0, %v412
      %v442 = vsub.f32 0.0, %v425
      %v443 = vsub.f32 0.0, %v438
      %v444 = vmul.f32 %v441, 1.442695
      %v445 = vpow.pop %v444
      %v446 = vmul.f32 %v442, 1.442695
      %v447 = vpow.pop %v446
      %v448 = vmul.f32 %v443, 1.442695
      %v449 = vpow.pop %v448
      %v450 = vadd.f32 %v445, 1.0
      %v451 = vadd.f32 %v447, 1.0
      %v452 = vadd.f32 %v449, 1.0
      %v453 = vrcp.pop %v450
      %v454 = vmul.f32 %v450, %v453
      %v455 = vsub.f32 1.0, %v454
      %v456 = vmul.f32 %v453, %v455
      %v457 = vadd.f32 %v453, %v456
      %vm458 = vweird.f32 %v450
      %vm459 = vweird.f32 %v453
      %vm460 = vmor %vm458, %vm459
      %v461 = vsel %vm460, %v453, %v457
      %v462 = vand.u32 2147483647, %v450
      %vm463 = vcmp.eq.f32.partialorder %v462, 8.507059e+37
      %v464 = vand.u32 %v450, 2147483648
      %v465 = vor.u32 1.1754944e-38, %v464
      %v466 = vsel %vm463, %v465, %v461
      %v467 = vmul.f32 1.0, %v466
      %v468 = vrcp.pop %v451
      %v469 = vmul.f32 %v451, %v468
      %v470 = vsub.f32 1.0, %v469
      %v471 = vmul.f32 %v468, %v470
      %v472 = vadd.f32 %v468, %v471
      %vm473 = vweird.f32 %v451
      %vm474 = vweird.f32 %v468
      %vm475 = vmor %vm473, %vm474
      %v476 = vsel %vm475, %v468, %v472
      %v477 = vand.u32 2147483647, %v451
      %vm478 = vcmp.eq.f32.partialorder %v477, 8.507059e+37
      %v479 = vand.u32 %v451, 2147483648
      %v480 = vor.u32 1.1754944e-38, %v479
      %v481 = vsel %vm478, %v480, %v476
      %v482 = vmul.f32 1.0, %v481
      %v483 = vrcp.pop %v452
      %v484 = vmul.f32 %v452, %v483
      %v485 = vsub.f32 1.0, %v484
      %v486 = vmul.f32 %v483, %v485
      %v487 = vadd.f32 %v483, %v486
      %vm488 = vweird.f32 %v452
      %vm489 = vweird.f32 %v483
      %vm490 = vmor %vm488, %vm489
      %v491 = vsel %vm490, %v483, %v487
      %v492 = vand.u32 2147483647, %v452
      %vm493 = vcmp.eq.f32.partialorder %v492, 8.507059e+37
      %v494 = vand.u32 %v452, 2147483648
      %v495 = vor.u32 1.1754944e-38, %v494
      %v496 = vsel %vm493, %v495, %v491
      %v497 = vmul.f32 1.0, %v496
      %v498 = vmul.f32 %v412, %v467
      %v499 = vmul.f32 %v425, %v482
      %v500 = vmul.f32 %v438, %v497
      %s501 = scalar_lea.vmem %s1, 2
      %v502 = vld [vmem:[%s501] sm:$0x3]
      %s503 = scalar_lea.vmem %s2, 4
      %v504 = vld [vmem:[%s503] sm:$0xf]
      %506 = vset.pattern.permute.xlu0 0
      %507 = vperm.xlu0 %506, %v504
      %v508 = vpop.permute.xlu0 %507
      %v511 = vsel %vm388, %v502, 0
      %513 = vmatpush.bf16.msra.mxu0 0
      %514 = vmatpush.bf16.msra.mxu0 0
      %515 = vmatpush.bf16.msra.mxu0 0
      %516 = vmatpush.bf16.msra.mxu0 0
      %517 = vmatpush.bf16.msra.mxu0 0
      %518 = vmatpush.bf16.msra.mxu0 0
      %519 = vmatpush.bf16.msra.mxu0 0
      %520 = vmatpush.bf16.msra.mxu0 %v394
      %521 = vmatmul.bf16.gmra.mxu0 %v511
      %v522 = vpop.f32.mrf.mxu0
      %v523 = vadd.f32 %v508, %v522
      %v524 = vpop.f32.mrf.mxu0
      %525 = vdwg.mxu0
      %526 = vmatpush.bf16.msra.mxu0 0
      %527 = vmatpush.bf16.msra.mxu0 0
      %528 = vmatpush.bf16.msra.mxu0 0
      %529 = vmatpush.bf16.msra.mxu0 0
      %530 = vmatpush.bf16.msra.mxu0 0
      %531 = vmatpush.bf16.msra.mxu0 0
      %532 = vmatpush.bf16.msra.mxu0 0
      %533 = vmatpush.bf16.msra.mxu0 %v397
      %534 = vmatmul.bf16.gmra.mxu0 %v511
      %v535 = vpop.f32.mrf.mxu0
      %v536 = vadd.f32 %v508, %v535
      %v537 = vpop.f32.mrf.mxu0
      %538 = vdwg.mxu0
      %539 = vmatpush.bf16.msra.mxu0 0
      %540 = vmatpush.bf16.msra.mxu0 0
      %541 = vmatpush.bf16.msra.mxu0 0
      %542 = vmatpush.bf16.msra.mxu0 0
      %543 = vmatpush.bf16.msra.mxu0 0
      %544 = vmatpush.bf16.msra.mxu0 0
      %545 = vmatpush.bf16.msra.mxu0 0
      %546 = vmatpush.bf16.msra.mxu0 %v400
      %547 = vmatmul.bf16.gmra.mxu0 %v511
      %v548 = vpop.f32.mrf.mxu0
      %v549 = vadd.f32 %v508, %v548
      %v550 = vpop.f32.mrf.mxu0
      %551 = vdwg.mxu0
      %v552 = vsub.f32 0.0, %v523
      %v553 = vsub.f32 0.0, %v536
      %v554 = vsub.f32 0.0, %v549
      %v555 = vmul.f32 %v552, 1.442695
      %v556 = vpow.pop %v555
      %v557 = vmul.f32 %v553, 1.442695
      %v558 = vpow.pop %v557
      %v559 = vmul.f32 %v554, 1.442695
      %v560 = vpow.pop %v559
      %v561 = vadd.f32 %v556, 1.0
      %v562 = vadd.f32 %v558, 1.0
      %v563 = vadd.f32 %v560, 1.0
      %v564 = vrcp.pop %v561
      %v565 = vmul.f32 %v561, %v564
      %v566 = vsub.f32 1.0, %v565
      %v567 = vmul.f32 %v564, %v566
      %v568 = vadd.f32 %v564, %v567
      %vm569 = vweird.f32 %v561
      %vm570 = vweird.f32 %v564
      %vm571 = vmor %vm569, %vm570
      %v572 = vsel %vm571, %v564, %v568
      %v573 = vand.u32 2147483647, %v561
      %vm574 = vcmp.eq.f32.partialorder %v573, 8.507059e+37
      %v575 = vand.u32 %v561, 2147483648
      %v576 = vor.u32 1.1754944e-38, %v575
      %v577 = vsel %vm574, %v576, %v572
      %v578 = vmul.f32 1.0, %v577
      %v579 = vrcp.pop %v562
      %v580 = vmul.f32 %v562, %v579
      %v581 = vsub.f32 1.0, %v580
      %v582 = vmul.f32 %v579, %v581
      %v583 = vadd.f32 %v579, %v582
      %vm584 = vweird.f32 %v562
      %vm585 = vweird.f32 %v579
      %vm586 = vmor %vm584, %vm585
      %v587 = vsel %vm586, %v579, %v583
      %v588 = vand.u32 2147483647, %v562
      %vm589 = vcmp.eq.f32.partialorder %v588, 8.507059e+37
      %v590 = vand.u32 %v562, 2147483648
      %v591 = vor.u32 1.1754944e-38, %v590
      %v592 = vsel %vm589, %v591, %v587
      %v593 = vmul.f32 1.0, %v592
      %v594 = vrcp.pop %v563
      %v595 = vmul.f32 %v563, %v594
      %v596 = vsub.f32 1.0, %v595
      %v597 = vmul.f32 %v594, %v596
      %v598 = vadd.f32 %v594, %v597
      %vm599 = vweird.f32 %v563
      %vm600 = vweird.f32 %v594
      %vm601 = vmor %vm599, %vm600
      %v602 = vsel %vm601, %v594, %v598
      %v603 = vand.u32 2147483647, %v563
      %vm604 = vcmp.eq.f32.partialorder %v603, 8.507059e+37
      %v605 = vand.u32 %v563, 2147483648
      %v606 = vor.u32 1.1754944e-38, %v605
      %v607 = vsel %vm604, %v606, %v602
      %v608 = vmul.f32 1.0, %v607
      %v609 = vmul.f32 %v523, %v578
      %v610 = vmul.f32 %v536, %v593
      %v611 = vmul.f32 %v549, %v608
      %v612 = vld [vmem:[%s7] sm:$0xf]
      %v613 = vpack.c.bf16 %v498, %v498
      %v614 = vpack.c.bf16 %v499, %v499
      %v615 = vpack.c.bf16 %v500, %v500
      %s616 = scalar_lea.vmem %s7, 4
      %v617 = vld [vmem:[%s616] sm:$0xf]
      %v618 = vpack.c.bf16 %v609, %v609
      %v619 = vpack.c.bf16 %v610, %v610
      %v620 = vpack.c.bf16 %v611, %v611
      %v622 = vsel %vm388, %v617, 0
      %v625 = vsel %vm392, %v618, 0
      %v628 = vsel %vm392, %v619, 0
      %v631 = vsel %vm392, %v620, 0
      %633 = vmatpush.bf16.msra.mxu0 0
      %634 = vmatpush.bf16.msra.mxu0 0
      %635 = vmatpush.bf16.msra.mxu0 0
      %636 = vmatpush.bf16.msra.mxu0 0
      %637 = vmatpush.bf16.msra.mxu0 0
      %638 = vmatpush.bf16.msra.mxu0 0
      %639 = vmatpush.bf16.msra.mxu0 0
      %640 = vmatpush.bf16.msra.mxu0 %v625
      %641 = vmatmul.bf16.gmra.mxu0 %v622
      %v642 = vpop.f32.mrf.mxu0
      %v643 = vadd.f32 0.0, %v642
      %v644 = vpop.f32.mrf.mxu0
      %645 = vdwg.mxu0
      %646 = vmatpush.bf16.msra.mxu0 0
      %647 = vmatpush.bf16.msra.mxu0 0
      %648 = vmatpush.bf16.msra.mxu0 0
      %649 = vmatpush.bf16.msra.mxu0 0
      %650 = vmatpush.bf16.msra.mxu0 0
      %651 = vmatpush.bf16.msra.mxu0 0
      %652 = vmatpush.bf16.msra.mxu0 0
      %653 = vmatpush.bf16.msra.mxu0 %v628
      %654 = vmatmul.bf16.gmra.mxu0 %v622
      %v655 = vpop.f32.mrf.mxu0
      %v656 = vadd.f32 0.0, %v655
      %v657 = vpop.f32.mrf.mxu0
      %658 = vdwg.mxu0
      %659 = vmatpush.bf16.msra.mxu0 0
      %660 = vmatpush.bf16.msra.mxu0 0
      %661 = vmatpush.bf16.msra.mxu0 0
      %662 = vmatpush.bf16.msra.mxu0 0
      %663 = vmatpush.bf16.msra.mxu0 0
      %664 = vmatpush.bf16.msra.mxu0 0
      %665 = vmatpush.bf16.msra.mxu0 0
      %666 = vmatpush.bf16.msra.mxu0 %v631
      %667 = vmatmul.bf16.gmra.mxu0 %v622
      %v668 = vpop.f32.mrf.mxu0
      %v669 = vadd.f32 0.0, %v668
      %v670 = vpop.f32.mrf.mxu0
      %671 = vdwg.mxu0
      %v673 = vsel %vm388, %v612, 0
      %v676 = vsel %vm392, %v613, 0
      %v679 = vsel %vm392, %v614, 0
      %v682 = vsel %vm392, %v615, 0
      %684 = vmatpush.bf16.msra.mxu0 0
      %685 = vmatpush.bf16.msra.mxu0 0
      %686 = vmatpush.bf16.msra.mxu0 0
      %687 = vmatpush.bf16.msra.mxu0 0
      %688 = vmatpush.bf16.msra.mxu0 0
      %689 = vmatpush.bf16.msra.mxu0 0
      %690 = vmatpush.bf16.msra.mxu0 0
      %691 = vmatpush.bf16.msra.mxu0 %v676
      %692 = vmatmul.bf16.gmra.mxu0 %v673
      %v693 = vpop.f32.mrf.mxu0
      %v694 = vadd.f32 %v643, %v693
      %v695 = vpop.f32.mrf.mxu0
      %696 = vdwg.mxu0
      %697 = vmatpush.bf16.msra.mxu0 0
      %698 = vmatpush.bf16.msra.mxu0 0
      %699 = vmatpush.bf16.msra.mxu0 0
      %700 = vmatpush.bf16.msra.mxu0 0
      %701 = vmatpush.bf16.msra.mxu0 0
      %702 = vmatpush.bf16.msra.mxu0 0
      %703 = vmatpush.bf16.msra.mxu0 0
      %704 = vmatpush.bf16.msra.mxu0 %v679
      %705 = vmatmul.bf16.gmra.mxu0 %v673
      %v706 = vpop.f32.mrf.mxu0
      %v707 = vadd.f32 %v656, %v706
      %v708 = vpop.f32.mrf.mxu0
      %709 = vdwg.mxu0
      %710 = vmatpush.bf16.msra.mxu0 0
      %711 = vmatpush.bf16.msra.mxu0 0
      %712 = vmatpush.bf16.msra.mxu0 0
      %713 = vmatpush.bf16.msra.mxu0 0
      %714 = vmatpush.bf16.msra.mxu0 0
      %715 = vmatpush.bf16.msra.mxu0 0
      %716 = vmatpush.bf16.msra.mxu0 0
      %717 = vmatpush.bf16.msra.mxu0 %v682
      %718 = vmatmul.bf16.gmra.mxu0 %v673
      %v719 = vpop.f32.mrf.mxu0
      %v720 = vadd.f32 %v669, %v719
      %v721 = vpop.f32.mrf.mxu0
      %722 = vdwg.mxu0
      %v724 = vperm.slane %v361, 0
      %v725 = vperm.slane %v361, 1
      %v726 = vperm.slane %v361, 2
      %v730 = vmul.f32 %v609, %v724
      %v731 = vmul.f32 %v610, %v725
      %v732 = vmul.f32 %v611, %v726
      %v733 = vpack.c.bf16 %v731, %v730
      %v734 = vpack.c.bf16 %v732, %v732
      %v737 = vrot.slane %v733, 2
      %v738 = vrot.slane %v734, 4
      %v739 = vrot.slane %v734, 6
      %v742 = vsel %vm392, %v733, %v737
      %vm743 = vcmask 1045508
      %v746 = vsel %vm743, %v738, %v739
      %vm747 = vcmask 1043456
      %v748 = vsel %vm747, %v742, %v746
      %vm750 = vcmask 1043458
      %vm751 = vmor %vm750, %vm392
      %vm752 = vcmask 553988
      %vm753 = vmor %vm752, %vm751
      %754 = vst.msk [vmem:[#allocation2 + $0x2] sm:$0x3f] %vm753, %v748
      %v755 = vld [vmem:[%s4] sm:$0xf]
      %v756 = vld [vmem:[%s3] sm:$0x3]
      %v757 = vld [vmem:[#allocation2] sm:$0xff]
      %s758 = scalar_lea.vmem %s3, 2
      %v759 = vld [vmem:[%s758] sm:$0x3]
      %761 = vst [vmem:[#allocation1] ss:$4 sm:$0xff] %v757
      %v762 = vld.sshfl [vmem:[#allocation1] sm:$0xff pattern:$0x73625140]
      %v764 = vld.sshfl [vmem:[#allocation1 + $0x8] sm:$0xff pattern:$0x73625140]
      %v766 = vld.sshfl [vmem:[#allocation1 + $0x10] sm:$0xff pattern:$0x73625140]
      %v768 = vld.sshfl [vmem:[#allocation1 + $0x18] sm:$0xff pattern:$0x73625140]
      %770 = vrot.lane.b32.xlu0 %v762, 18
      %v771 = vpop.permute.xlu0 %770
      %772 = vrot.lane.b32.xlu0 %v764, 18
      %v773 = vpop.permute.xlu0 %772
      %774 = vrot.lane.b32.xlu0 %v766, 18
      %v775 = vpop.permute.xlu0 %774
      %776 = vrot.lane.b32.xlu0 %v768, 18
      %v777 = vpop.permute.xlu0 %776
      %vm778 = vcmask 146432
      %v779 = vsel %vm778, %v771, %v773
      %v780 = vsel %vm778, %v773, %v775
      %v781 = vsel %vm778, %v775, %v777
      %v783 = vsel %vm388, %v759, 0
      %v786 = vsel %vm392, %v779, 0
      %v789 = vsel %vm392, %v780, 0
      %v792 = vsel %vm392, %v781, 0
      %794 = vmatpush.bf16.msra.mxu0 0
      %795 = vmatpush.bf16.msra.mxu0 0
      %796 = vmatpush.bf16.msra.mxu0 0
      %797 = vmatpush.bf16.msra.mxu0 0
      %798 = vmatpush.bf16.msra.mxu0 0
      %799 = vmatpush.bf16.msra.mxu0 0
      %800 = vmatpush.bf16.msra.mxu0 0
      %801 = vmatpush.bf16.msra.mxu0 %v786
      %802 = vmatmul.bf16.gmra.mxu0 %v783
      %v803 = vpop.f32.mrf.mxu0
      %v804 = vadd.f32 0.0, %v803
      %v805 = vpop.f32.mrf.mxu0
      %806 = vdwg.mxu0
      %807 = vmatpush.bf16.msra.mxu0 0
      %808 = vmatpush.bf16.msra.mxu0 0
      %809 = vmatpush.bf16.msra.mxu0 0
      %810 = vmatpush.bf16.msra.mxu0 0
      %811 = vmatpush.bf16.msra.mxu0 0
      %812 = vmatpush.bf16.msra.mxu0 0
      %813 = vmatpush.bf16.msra.mxu0 0
      %814 = vmatpush.bf16.msra.mxu0 %v789
      %815 = vmatmul.bf16.gmra.mxu0 %v783
      %v816 = vpop.f32.mrf.mxu0
      %v817 = vadd.f32 0.0, %v816
      %v818 = vpop.f32.mrf.mxu0
      %819 = vdwg.mxu0
      %820 = vmatpush.bf16.msra.mxu0 0
      %821 = vmatpush.bf16.msra.mxu0 0
      %822 = vmatpush.bf16.msra.mxu0 0
      %823 = vmatpush.bf16.msra.mxu0 0
      %824 = vmatpush.bf16.msra.mxu0 0
      %825 = vmatpush.bf16.msra.mxu0 0
      %826 = vmatpush.bf16.msra.mxu0 0
      %827 = vmatpush.bf16.msra.mxu0 %v792
      %828 = vmatmul.bf16.gmra.mxu0 %v783
      %v829 = vpop.f32.mrf.mxu0
      %v830 = vadd.f32 0.0, %v829
      %v831 = vpop.f32.mrf.mxu0
      %832 = vdwg.mxu0
      %833 = vst [vmem:[#allocation1] ss:$4 sm:$0xff] %v757
      %v834 = vld.sshfl [vmem:[#allocation1] sm:$0xff pattern:$0x73625140]
      %v836 = vld.sshfl [vmem:[#allocation1 + $0x8] sm:$0xff pattern:$0x73625140]
      %v838 = vld.sshfl [vmem:[#allocation1 + $0x10] sm:$0xff pattern:$0x73625140]
      %v840 = vld.sshfl [vmem:[#allocation1 + $0x18] sm:$0xff pattern:$0x73625140]
      %842 = vrot.lane.b32.xlu0 %v834, 19
      %v843 = vpop.permute.xlu0 %842
      %844 = vrot.lane.b32.xlu0 %v836, 19
      %v845 = vpop.permute.xlu0 %844
      %846 = vrot.lane.b32.xlu0 %v838, 19
      %v847 = vpop.permute.xlu0 %846
      %848 = vrot.lane.b32.xlu0 %v840, 19
      %v849 = vpop.permute.xlu0 %848
      %vm850 = vcmask 154624
      %v851 = vsel %vm850, %v843, %v845
      %v852 = vsel %vm850, %v845, %v847
      %v853 = vsel %vm850, %v847, %v849
      %v855 = vsel %vm388, %v756, 0
      %v858 = vsel %vm392, %v851, 0
      %v861 = vsel %vm392, %v852, 0
      %v864 = vsel %vm392, %v853, 0
      %866 = vmatpush.bf16.msra.mxu0 0
      %867 = vmatpush.bf16.msra.mxu0 0
      %868 = vmatpush.bf16.msra.mxu0 0
      %869 = vmatpush.bf16.msra.mxu0 0
      %870 = vmatpush.bf16.msra.mxu0 0
      %871 = vmatpush.bf16.msra.mxu0 0
      %872 = vmatpush.bf16.msra.mxu0 0
      %873 = vmatpush.bf16.msra.mxu0 %v858
      %874 = vmatmul.bf16.gmra.mxu0 %v855
      %v875 = vpop.f32.mrf.mxu0
      %v876 = vadd.f32 %v804, %v875
      %v877 = vpop.f32.mrf.mxu0
      %878 = vdwg.mxu0
      %879 = vmatpush.bf16.msra.mxu0 0
      %880 = vmatpush.bf16.msra.mxu0 0
      %881 = vmatpush.bf16.msra.mxu0 0
      %882 = vmatpush.bf16.msra.mxu0 0
      %883 = vmatpush.bf16.msra.mxu0 0
      %884 = vmatpush.bf16.msra.mxu0 0
      %885 = vmatpush.bf16.msra.mxu0 0
      %886 = vmatpush.bf16.msra.mxu0 %v861
      %887 = vmatmul.bf16.gmra.mxu0 %v855
      %v888 = vpop.f32.mrf.mxu0
      %v889 = vadd.f32 %v817, %v888
      %v890 = vpop.f32.mrf.mxu0
      %891 = vdwg.mxu0
      %892 = vmatpush.bf16.msra.mxu0 0
      %893 = vmatpush.bf16.msra.mxu0 0
      %894 = vmatpush.bf16.msra.mxu0 0
      %895 = vmatpush.bf16.msra.mxu0 0
      %896 = vmatpush.bf16.msra.mxu0 0
      %897 = vmatpush.bf16.msra.mxu0 0
      %898 = vmatpush.bf16.msra.mxu0 0
      %899 = vmatpush.bf16.msra.mxu0 %v864
      %900 = vmatmul.bf16.gmra.mxu0 %v855
      %v901 = vpop.f32.mrf.mxu0
      %v902 = vadd.f32 %v830, %v901
      %v903 = vpop.f32.mrf.mxu0
      %904 = vdwg.mxu0
      %s905 = scalar_lea.vmem %s3, 4
      %v906 = vld [vmem:[%s905] sm:$0x3]
      %v907 = vld [vmem:[#allocation2] sm:$0xff]
      %909 = vst [vmem:[#allocation1] ss:$4 sm:$0xff] %v907
      %v910 = vld.sshfl [vmem:[#allocation1] sm:$0xff pattern:$0x73625140]
      %v912 = vld.sshfl [vmem:[#allocation1 + $0x8] sm:$0xff pattern:$0x73625140]
      %v914 = vld.sshfl [vmem:[#allocation1 + $0x10] sm:$0xff pattern:$0x73625140]
      %v916 = vld.sshfl [vmem:[#allocation1 + $0x18] sm:$0xff pattern:$0x73625140]
      %918 = vrot.lane.b32.xlu0 %v910, 17
      %v919 = vpop.permute.xlu0 %918
      %920 = vrot.lane.b32.xlu0 %v912, 17
      %v921 = vpop.permute.xlu0 %920
      %922 = vrot.lane.b32.xlu0 %v914, 17
      %v923 = vpop.permute.xlu0 %922
      %924 = vrot.lane.b32.xlu0 %v916, 17
      %v925 = vpop.permute.xlu0 %924
      %vm926 = vcmask 138240
      %v927 = vsel %vm926, %v919, %v921
      %v928 = vsel %vm926, %v921, %v923
      %v929 = vsel %vm926, %v923, %v925
      %v931 = vsel %vm388, %v906, 0
      %v934 = vsel %vm392, %v927, 0
      %v937 = vsel %vm392, %v928, 0
      %v940 = vsel %vm392, %v929, 0
      %942 = vmatpush.bf16.msra.mxu0 0
      %943 = vmatpush.bf16.msra.mxu0 0
      %944 = vmatpush.bf16.msra.mxu0 0
      %945 = vmatpush.bf16.msra.mxu0 0
      %946 = vmatpush.bf16.msra.mxu0 0
      %947 = vmatpush.bf16.msra.mxu0 0
      %948 = vmatpush.bf16.msra.mxu0 0
      %949 = vmatpush.bf16.msra.mxu0 %v934
      %950 = vmatmul.bf16.gmra.mxu0 %v931
      %v951 = vpop.f32.mrf.mxu0
      %v952 = vadd.f32 0.0, %v951
      %v953 = vpop.f32.mrf.mxu0
      %954 = vdwg.mxu0
      %955 = vmatpush.bf16.msra.mxu0 0
      %956 = vmatpush.bf16.msra.mxu0 0
      %957 = vmatpush.bf16.msra.mxu0 0
      %958 = vmatpush.bf16.msra.mxu0 0
      %959 = vmatpush.bf16.msra.mxu0 0
      %960 = vmatpush.bf16.msra.mxu0 0
      %961 = vmatpush.bf16.msra.mxu0 0
      %962 = vmatpush.bf16.msra.mxu0 %v937
      %963 = vmatmul.bf16.gmra.mxu0 %v931
      %v964 = vpop.f32.mrf.mxu0
      %v965 = vadd.f32 0.0, %v964
      %v966 = vpop.f32.mrf.mxu0
      %967 = vdwg.mxu0
      %968 = vmatpush.bf16.msra.mxu0 0
      %969 = vmatpush.bf16.msra.mxu0 0
      %970 = vmatpush.bf16.msra.mxu0 0
      %971 = vmatpush.bf16.msra.mxu0 0
      %972 = vmatpush.bf16.msra.mxu0 0
      %973 = vmatpush.bf16.msra.mxu0 0
      %974 = vmatpush.bf16.msra.mxu0 0
      %975 = vmatpush.bf16.msra.mxu0 %v940
      %976 = vmatmul.bf16.gmra.mxu0 %v931
      %v977 = vpop.f32.mrf.mxu0
      %v978 = vadd.f32 0.0, %v977
      %v979 = vpop.f32.mrf.mxu0
      %980 = vdwg.mxu0
      %v981 = vadd.f32 %v876, %v952
      %v982 = vadd.f32 %v889, %v965
      %v983 = vadd.f32 %v902, %v978
      %s984 = scalar_lea.vmem %s3, 6
      %v985 = vld [vmem:[%s984] sm:$0x3]
      %v986 = vld [vmem:[#allocation2] sm:$0xff]
      %988 = vst [vmem:[#allocation1] ss:$4 sm:$0xff] %v986
      %v989 = vld.sshfl [vmem:[#allocation1] sm:$0xff pattern:$0x73625140]
      %v991 = vld.sshfl [vmem:[#allocation1 + $0x8] sm:$0xff pattern:$0x73625140]
      %v993 = vld.sshfl [vmem:[#allocation1 + $0x10] sm:$0xff pattern:$0x73625140]
      %v995 = vld.sshfl [vmem:[#allocation1 + $0x18] sm:$0xff pattern:$0x73625140]
      %997 = vrot.lane.b32.xlu0 %v989, 1
      %v998 = vpop.permute.xlu0 %997
      %999 = vrot.lane.b32.xlu0 %v991, 1
      %v1000 = vpop.permute.xlu0 %999
      %1001 = vrot.lane.b32.xlu0 %v993, 1
      %v1002 = vpop.permute.xlu0 %1001
      %1003 = vrot.lane.b32.xlu0 %v995, 1
      %v1004 = vpop.permute.xlu0 %1003
      %vm1005 = vcmask 7168
      %v1006 = vsel %vm1005, %v998, %v1000
      %v1007 = vsel %vm1005, %v1000, %v1002
      %v1008 = vsel %vm1005, %v1002, %v1004
      %v1010 = vsel %vm388, %v985, 0
      %v1013 = vsel %vm392, %v1006, 0
      %v1016 = vsel %vm392, %v1007, 0
      %v1019 = vsel %vm392, %v1008, 0
      %1021 = vmatpush.bf16.msra.mxu0 0
      %1022 = vmatpush.bf16.msra.mxu0 0
      %1023 = vmatpush.bf16.msra.mxu0 0
      %1024 = vmatpush.bf16.msra.mxu0 0
      %1025 = vmatpush.bf16.msra.mxu0 0
      %1026 = vmatpush.bf16.msra.mxu0 0
      %1027 = vmatpush.bf16.msra.mxu0 0
      %1028 = vmatpush.bf16.msra.mxu0 %v1013
      %1029 = vmatmul.bf16.gmra.mxu0 %v1010
      %v1030 = vpop.f32.mrf.mxu0
      %v1031 = vadd.f32 0.0, %v1030
      %v1032 = vpop.f32.mrf.mxu0
      %1033 = vdwg.mxu0
      %1034 = vmatpush.bf16.msra.mxu0 0
      %1035 = vmatpush.bf16.msra.mxu0 0
      %1036 = vmatpush.bf16.msra.mxu0 0
      %1037 = vmatpush.bf16.msra.mxu0 0
      %1038 = vmatpush.bf16.msra.mxu0 0
      %1039 = vmatpush.bf16.msra.mxu0 0
      %1040 = vmatpush.bf16.msra.mxu0 0
      %1041 = vmatpush.bf16.msra.mxu0 %v1016
      %1042 = vmatmul.bf16.gmra.mxu0 %v1010
      %v1043 = vpop.f32.mrf.mxu0
      %v1044 = vadd.f32 0.0, %v1043
      %v1045 = vpop.f32.mrf.mxu0
      %1046 = vdwg.mxu0
      %1047 = vmatpush.bf16.msra.mxu0 0
      %1048 = vmatpush.bf16.msra.mxu0 0
      %1049 = vmatpush.bf16.msra.mxu0 0
      %1050 = vmatpush.bf16.msra.mxu0 0
      %1051 = vmatpush.bf16.msra.mxu0 0
      %1052 = vmatpush.bf16.msra.mxu0 0
      %1053 = vmatpush.bf16.msra.mxu0 0
      %1054 = vmatpush.bf16.msra.mxu0 %v1019
      %1055 = vmatmul.bf16.gmra.mxu0 %v1010
      %v1056 = vpop.f32.mrf.mxu0
      %v1057 = vadd.f32 0.0, %v1056
      %v1058 = vpop.f32.mrf.mxu0
      %1059 = vdwg.mxu0
      %v1060 = vadd.f32 %v981, %v1031
      %v1061 = vadd.f32 %v982, %v1044
      %v1062 = vadd.f32 %v983, %v1057
      %s1063 = scalar_lea.vmem %s3, 8
      %v1064 = vld [vmem:[%s1063] sm:$0x3]
      %v1065 = vld [vmem:[#allocation2 + $0x2] sm:$0x3f]
      %1067 = vst [vmem:[#allocation1] ss:$4 sm:$0xff] %v1065
      %v1068 = vld.sshfl [vmem:[#allocation1] sm:$0xff pattern:$0x73625140]
      %v1069 = vld.sshfl [vmem:[#allocation1 + $0x8] sm:$0xff pattern:$0x73625140]
      %v1070 = vld.sshfl [vmem:[#allocation1 + $0x10] sm:$0xff pattern:$0x73625140]
      %v1072 = vsel %vm388, %v1064, 0
      %v1074 = vsel %vm392, %v1068, 0
      %v1076 = vsel %vm392, %v1069, 0
      %v1078 = vsel %vm392, %v1070, 0
      %1080 = vmatpush.bf16.msra.mxu0 0
      %1081 = vmatpush.bf16.msra.mxu0 0
      %1082 = vmatpush.bf16.msra.mxu0 0
      %1083 = vmatpush.bf16.msra.mxu0 0
      %1084 = vmatpush.bf16.msra.mxu0 0
      %1085 = vmatpush.bf16.msra.mxu0 0
      %1086 = vmatpush.bf16.msra.mxu0 0
      %1087 = vmatpush.bf16.msra.mxu0 %v1074
      %1088 = vmatmul.bf16.gmra.mxu0 %v1072
      %v1089 = vpop.f32.mrf.mxu0
      %v1090 = vadd.f32 0.0, %v1089
      %v1091 = vpop.f32.mrf.mxu0
      %1092 = vdwg.mxu0
      %1093 = vmatpush.bf16.msra.mxu0 0
      %1094 = vmatpush.bf16.msra.mxu0 0
      %1095 = vmatpush.bf16.msra.mxu0 0
      %1096 = vmatpush.bf16.msra.mxu0 0
      %1097 = vmatpush.bf16.msra.mxu0 0
      %1098 = vmatpush.bf16.msra.mxu0 0
      %1099 = vmatpush.bf16.msra.mxu0 0
      %1100 = vmatpush.bf16.msra.mxu0 %v1076
      %1101 = vmatmul.bf16.gmra.mxu0 %v1072
      %v1102 = vpop.f32.mrf.mxu0
      %v1103 = vadd.f32 0.0, %v1102
      %v1104 = vpop.f32.mrf.mxu0
      %1105 = vdwg.mxu0
      %1106 = vmatpush.bf16.msra.mxu0 0
      %1107 = vmatpush.bf16.msra.mxu0 0
      %1108 = vmatpush.bf16.msra.mxu0 0
      %1109 = vmatpush.bf16.msra.mxu0 0
      %1110 = vmatpush.bf16.msra.mxu0 0
      %1111 = vmatpush.bf16.msra.mxu0 0
      %1112 = vmatpush.bf16.msra.mxu0 0
      %1113 = vmatpush.bf16.msra.mxu0 %v1078
      %1114 = vmatmul.bf16.gmra.mxu0 %v1072
      %v1115 = vpop.f32.mrf.mxu0
      %v1116 = vadd.f32 0.0, %v1115
      %v1117 = vpop.f32.mrf.mxu0
      %1118 = vdwg.mxu0
      %v1119 = vadd.f32 %v1060, %v1090
      %v1120 = vadd.f32 %v1061, %v1103
      %v1121 = vadd.f32 %v1062, %v1116
      %s1122 = scalar_lea.vmem %s3, 10
      %v1123 = vld [vmem:[%s1122] sm:$0x3]
      %v1124 = vld [vmem:[#allocation2 + $0x2] sm:$0x3f]
      %1126 = vst [vmem:[#allocation1] ss:$4 sm:$0xff] %v1124
      %v1127 = vld.sshfl [vmem:[#allocation1] sm:$0xff pattern:$0x73625140]
      %v1129 = vld.sshfl [vmem:[#allocation1 + $0x8] sm:$0xff pattern:$0x73625140]
      %v1131 = vld.sshfl [vmem:[#allocation1 + $0x10] sm:$0xff pattern:$0x73625140]
      %1133 = vrot.lane.b32.xlu0 %v1127, 127
      %v1134 = vpop.permute.xlu0 %1133
      %1135 = vrot.lane.b32.xlu0 %v1129, 127
      %v1136 = vpop.permute.xlu0 %1135
      %1137 = vrot.lane.b32.xlu0 %v1131, 127
      %v1138 = vpop.permute.xlu0 %1137
      %vm1139 = vcmask 1039360
      %v1140 = vsel %vm1139, %v1134, %v1136
      %v1141 = vsel %vm1139, %v1136, %v1138
      %v1143 = vsel %vm388, %v1123, 0
      %v1146 = vsel %vm392, %v1140, 0
      %v1149 = vsel %vm392, %v1141, 0
      %v1152 = vsel %vm392, %v1138, 0
      %1154 = vmatpush.bf16.msra.mxu0 0
      %1155 = vmatpush.bf16.msra.mxu0 0
      %1156 = vmatpush.bf16.msra.mxu0 0
      %1157 = vmatpush.bf16.msra.mxu0 0
      %1158 = vmatpush.bf16.msra.mxu0 0
      %1159 = vmatpush.bf16.msra.mxu0 0
      %1160 = vmatpush.bf16.msra.mxu0 0
      %1161 = vmatpush.bf16.msra.mxu0 %v1146
      %1162 = vmatmul.bf16.gmra.mxu0 %v1143
      %v1163 = vpop.f32.mrf.mxu0
      %v1164 = vadd.f32 0.0, %v1163
      %v1165 = vpop.f32.mrf.mxu0
      %1166 = vdwg.mxu0
      %1167 = vmatpush.bf16.msra.mxu0 0
      %1168 = vmatpush.bf16.msra.mxu0 0
      %1169 = vmatpush.bf16.msra.mxu0 0
      %1170 = vmatpush.bf16.msra.mxu0 0
      %1171 = vmatpush.bf16.msra.mxu0 0
      %1172 = vmatpush.bf16.msra.mxu0 0
      %1173 = vmatpush.bf16.msra.mxu0 0
      %1174 = vmatpush.bf16.msra.mxu0 %v1149
      %1175 = vmatmul.bf16.gmra.mxu0 %v1143
      %v1176 = vpop.f32.mrf.mxu0
      %v1177 = vadd.f32 0.0, %v1176
      %v1178 = vpop.f32.mrf.mxu0
      %1179 = vdwg.mxu0
      %1180 = vmatpush.bf16.msra.mxu0 0
      %1181 = vmatpush.bf16.msra.mxu0 0
      %1182 = vmatpush.bf16.msra.mxu0 0
      %1183 = vmatpush.bf16.msra.mxu0 0
      %1184 = vmatpush.bf16.msra.mxu0 0
      %1185 = vmatpush.bf16.msra.mxu0 0
      %1186 = vmatpush.bf16.msra.mxu0 0
      %1187 = vmatpush.bf16.msra.mxu0 %v1152
      %1188 = vmatmul.bf16.gmra.mxu0 %v1143
      %v1189 = vpop.f32.mrf.mxu0
      %v1190 = vadd.f32 0.0, %v1189
      %v1191 = vpop.f32.mrf.mxu0
      %1192 = vdwg.mxu0
      %v1193 = vadd.f32 %v1119, %v1164
      %v1194 = vadd.f32 %v1120, %v1177
      %v1195 = vadd.f32 %v1121, %v1190
      %s1196 = scalar_lea.vmem %s3, 12
      %v1197 = vld [vmem:[%s1196] sm:$0x3]
      %v1198 = vld [vmem:[#allocation2 + $0x2] sm:$0x3f]
      %1200 = vst [vmem:[#allocation1] ss:$4 sm:$0xff] %v1198
      %v1201 = vld.sshfl [vmem:[#allocation1] sm:$0xff pattern:$0x73625140]
      %v1203 = vld.sshfl [vmem:[#allocation1 + $0x8] sm:$0xff pattern:$0x73625140]
      %v1205 = vld.sshfl [vmem:[#allocation1 + $0x10] sm:$0xff pattern:$0x73625140]
      %1207 = vrot.lane.b32.xlu0 %v1201, 111
      %v1208 = vpop.permute.xlu0 %1207
      %1209 = vrot.lane.b32.xlu0 %v1203, 111
      %v1210 = vpop.permute.xlu0 %1209
      %1211 = vrot.lane.b32.xlu0 %v1205, 111
      %v1212 = vpop.permute.xlu0 %1211
      %vm1213 = vcmask 908288
      %v1214 = vsel %vm1213, %v1208, %v1210
      %v1215 = vsel %vm1213, %v1210, %v1212
      %v1217 = vsel %vm388, %v1197, 0
      %v1220 = vsel %vm392, %v1214, 0
      %v1223 = vsel %vm392, %v1215, 0
      %v1226 = vsel %vm392, %v1212, 0
      %1228 = vmatpush.bf16.msra.mxu0 0
      %1229 = vmatpush.bf16.msra.mxu0 0
      %1230 = vmatpush.bf16.msra.mxu0 0
      %1231 = vmatpush.bf16.msra.mxu0 0
      %1232 = vmatpush.bf16.msra.mxu0 0
      %1233 = vmatpush.bf16.msra.mxu0 0
      %1234 = vmatpush.bf16.msra.mxu0 0
      %1235 = vmatpush.bf16.msra.mxu0 %v1220
      %1236 = vmatmul.bf16.gmra.mxu0 %v1217
      %v1237 = vpop.f32.mrf.mxu0
      %v1238 = vadd.f32 0.0, %v1237
      %v1239 = vpop.f32.mrf.mxu0
      %1240 = vdwg.mxu0
      %1241 = vmatpush.bf16.msra.mxu0 0
      %1242 = vmatpush.bf16.msra.mxu0 0
      %1243 = vmatpush.bf16.msra.mxu0 0
      %1244 = vmatpush.bf16.msra.mxu0 0
      %1245 = vmatpush.bf16.msra.mxu0 0
      %1246 = vmatpush.bf16.msra.mxu0 0
      %1247 = vmatpush.bf16.msra.mxu0 0
      %1248 = vmatpush.bf16.msra.mxu0 %v1223
      %1249 = vmatmul.bf16.gmra.mxu0 %v1217
      %v1250 = vpop.f32.mrf.mxu0
      %v1251 = vadd.f32 0.0, %v1250
      %v1252 = vpop.f32.mrf.mxu0
      %1253 = vdwg.mxu0
      %1254 = vmatpush.bf16.msra.mxu0 0
      %1255 = vmatpush.bf16.msra.mxu0 0
      %1256 = vmatpush.bf16.msra.mxu0 0
      %1257 = vmatpush.bf16.msra.mxu0 0
      %1258 = vmatpush.bf16.msra.mxu0 0
      %1259 = vmatpush.bf16.msra.mxu0 0
      %1260 = vmatpush.bf16.msra.mxu0 0
      %1261 = vmatpush.bf16.msra.mxu0 %v1226
      %1262 = vmatmul.bf16.gmra.mxu0 %v1217
      %v1263 = vpop.f32.mrf.mxu0
      %v1264 = vadd.f32 0.0, %v1263
      %v1265 = vpop.f32.mrf.mxu0
      %1266 = vdwg.mxu0
      %v1267 = vadd.f32 %v1193, %v1238
      %v1268 = vadd.f32 %v1194, %v1251
      %v1269 = vadd.f32 %v1195, %v1264
      %s1270 = scalar_lea.vmem %s3, 14
      %v1271 = vld [vmem:[%s1270] sm:$0x3]
      %v1272 = vld [vmem:[#allocation2 + $0x2] sm:$0x3f]
      %1274 = vst [vmem:[#allocation1] ss:$4 sm:$0xff] %v1272
      %v1275 = vld.sshfl [vmem:[#allocation1] sm:$0xff pattern:$0x73625140]
      %v1277 = vld.sshfl [vmem:[#allocation1 + $0x8] sm:$0xff pattern:$0x73625140]
      %v1279 = vld.sshfl [vmem:[#allocation1 + $0x10] sm:$0xff pattern:$0x73625140]
      %1281 = vrot.lane.b32.xlu0 %v1275, 110
      %v1282 = vpop.permute.xlu0 %1281
      %1283 = vrot.lane.b32.xlu0 %v1277, 110
      %v1284 = vpop.permute.xlu0 %1283
      %1285 = vrot.lane.b32.xlu0 %v1279, 110
      %v1286 = vpop.permute.xlu0 %1285
      %vm1287 = vcmask 900096
      %v1288 = vsel %vm1287, %v1282, %v1284
      %v1289 = vsel %vm1287, %v1284, %v1286
      %v1291 = vsel %vm388, %v1271, 0
      %v1294 = vsel %vm392, %v1288, 0
      %v1297 = vsel %vm392, %v1289, 0
      %v1300 = vsel %vm392, %v1286, 0
      %1302 = vmatpush.bf16.msra.mxu0 0
      %1303 = vmatpush.bf16.msra.mxu0 0
      %1304 = vmatpush.bf16.msra.mxu0 0
      %1305 = vmatpush.bf16.msra.mxu0 0
      %1306 = vmatpush.bf16.msra.mxu0 0
      %1307 = vmatpush.bf16.msra.mxu0 0
      %1308 = vmatpush.bf16.msra.mxu0 0
      %1309 = vmatpush.bf16.msra.mxu0 %v1294
      %1310 = vmatmul.bf16.gmra.mxu0 %v1291
      %v1311 = vpop.f32.mrf.mxu0
      %v1312 = vadd.f32 0.0, %v1311
      %v1313 = vpop.f32.mrf.mxu0
      %1314 = vdwg.mxu0
      %1315 = vmatpush.bf16.msra.mxu0 0
      %1316 = vmatpush.bf16.msra.mxu0 0
      %1317 = vmatpush.bf16.msra.mxu0 0
      %1318 = vmatpush.bf16.msra.mxu0 0
      %1319 = vmatpush.bf16.msra.mxu0 0
      %1320 = vmatpush.bf16.msra.mxu0 0
      %1321 = vmatpush.bf16.msra.mxu0 0
      %1322 = vmatpush.bf16.msra.mxu0 %v1297
      %1323 = vmatmul.bf16.gmra.mxu0 %v1291
      %v1324 = vpop.f32.mrf.mxu0
      %v1325 = vadd.f32 0.0, %v1324
      %v1326 = vpop.f32.mrf.mxu0
      %1327 = vdwg.mxu0
      %1328 = vmatpush.bf16.msra.mxu0 0
      %1329 = vmatpush.bf16.msra.mxu0 0
      %1330 = vmatpush.bf16.msra.mxu0 0
      %1331 = vmatpush.bf16.msra.mxu0 0
      %1332 = vmatpush.bf16.msra.mxu0 0
      %1333 = vmatpush.bf16.msra.mxu0 0
      %1334 = vmatpush.bf16.msra.mxu0 0
      %1335 = vmatpush.bf16.msra.mxu0 %v1300
      %1336 = vmatmul.bf16.gmra.mxu0 %v1291
      %v1337 = vpop.f32.mrf.mxu0
      %v1338 = vadd.f32 0.0, %v1337
      %v1339 = vpop.f32.mrf.mxu0
      %1340 = vdwg.mxu0
      %v1341 = vadd.f32 %v1267, %v1312
      %v1342 = vadd.f32 %v1268, %v1325
      %v1343 = vadd.f32 %v1269, %v1338
      %s1344 = scalar_lea.vmem %s3, 16
      %v1345 = vld [vmem:[%s1344] sm:$0x3]
      %v1346 = vld [vmem:[#allocation2 + $0x2] sm:$0x3f]
      %1348 = vst [vmem:[#allocation1] ss:$4 sm:$0xff] %v1346
      %v1349 = vld.sshfl [vmem:[#allocation1] sm:$0xff pattern:$0x73625140]
      %v1351 = vld.sshfl [vmem:[#allocation1 + $0x8] sm:$0xff pattern:$0x73625140]
      %v1353 = vld.sshfl [vmem:[#allocation1 + $0x10] sm:$0xff pattern:$0x73625140]
      %1355 = vrot.lane.b32.xlu0 %v1349, 109
      %v1356 = vpop.permute.xlu0 %1355
      %1357 = vrot.lane.b32.xlu0 %v1351, 109
      %v1358 = vpop.permute.xlu0 %1357
      %1359 = vrot.lane.b32.xlu0 %v1353, 109
      %v1360 = vpop.permute.xlu0 %1359
      %vm1361 = vcmask 891904
      %v1362 = vsel %vm1361, %v1356, %v1358
      %v1363 = vsel %vm1361, %v1358, %v1360
      %v1365 = vsel %vm388, %v1345, 0
      %v1368 = vsel %vm392, %v1362, 0
      %v1371 = vsel %vm392, %v1363, 0
      %v1374 = vsel %vm392, %v1360, 0
      %1376 = vmatpush.bf16.msra.mxu0 0
      %1377 = vmatpush.bf16.msra.mxu0 0
      %1378 = vmatpush.bf16.msra.mxu0 0
      %1379 = vmatpush.bf16.msra.mxu0 0
      %1380 = vmatpush.bf16.msra.mxu0 0
      %1381 = vmatpush.bf16.msra.mxu0 0
      %1382 = vmatpush.bf16.msra.mxu0 0
      %1383 = vmatpush.bf16.msra.mxu0 %v1368
      %1384 = vmatmul.bf16.gmra.mxu0 %v1365
      %v1385 = vpop.f32.mrf.mxu0
      %v1386 = vadd.f32 0.0, %v1385
      %v1387 = vpop.f32.mrf.mxu0
      %1388 = vdwg.mxu0
      %1389 = vmatpush.bf16.msra.mxu0 0
      %1390 = vmatpush.bf16.msra.mxu0 0
      %1391 = vmatpush.bf16.msra.mxu0 0
      %1392 = vmatpush.bf16.msra.mxu0 0
      %1393 = vmatpush.bf16.msra.mxu0 0
      %1394 = vmatpush.bf16.msra.mxu0 0
      %1395 = vmatpush.bf16.msra.mxu0 0
      %1396 = vmatpush.bf16.msra.mxu0 %v1371
      %1397 = vmatmul.bf16.gmra.mxu0 %v1365
      %v1398 = vpop.f32.mrf.mxu0
      %v1399 = vadd.f32 0.0, %v1398
      %v1400 = vpop.f32.mrf.mxu0
      %1401 = vdwg.mxu0
      %1402 = vmatpush.bf16.msra.mxu0 0
      %1403 = vmatpush.bf16.msra.mxu0 0
      %1404 = vmatpush.bf16.msra.mxu0 0
      %1405 = vmatpush.bf16.msra.mxu0 0
      %1406 = vmatpush.bf16.msra.mxu0 0
      %1407 = vmatpush.bf16.msra.mxu0 0
      %1408 = vmatpush.bf16.msra.mxu0 0
      %1409 = vmatpush.bf16.msra.mxu0 %v1374
      %1410 = vmatmul.bf16.gmra.mxu0 %v1365
      %v1411 = vpop.f32.mrf.mxu0
      %v1412 = vadd.f32 0.0, %v1411
      %v1413 = vpop.f32.mrf.mxu0
      %1414 = vdwg.mxu0
      %v1415 = vadd.f32 %v1341, %v1386
      %v1416 = vadd.f32 %v1342, %v1399
      %v1417 = vadd.f32 %v1343, %v1412
      %1419 = vset.pattern.permute.xlu0 0
      %1420 = vperm.xlu0 %1419, %v755
      %v1421 = vpop.permute.xlu0 %1420
      %v1423 = vadd.f32 %v1415, %v1421
      %v1424 = vadd.f32 %v1416, %v1421
      %v1425 = vadd.f32 %v1417, %v1421
      %v1426 = vsub.f32 0.0, %v1423
      %v1427 = vsub.f32 0.0, %v1424
      %v1428 = vsub.f32 0.0, %v1425
      %v1429 = vmul.f32 %v1426, 1.442695
      %v1430 = vpow.pop %v1429
      %v1431 = vmul.f32 %v1427, 1.442695
      %v1432 = vpow.pop %v1431
      %v1433 = vmul.f32 %v1428, 1.442695
      %v1434 = vpow.pop %v1433
      %v1435 = vadd.f32 %v1430, 1.0
      %v1436 = vadd.f32 %v1432, 1.0
      %v1437 = vadd.f32 %v1434, 1.0
      %v1438 = vrcp.pop %v1435
      %v1439 = vmul.f32 %v1435, %v1438
      %v1440 = vsub.f32 1.0, %v1439
      %v1441 = vmul.f32 %v1438, %v1440
      %v1442 = vadd.f32 %v1438, %v1441
      %vm1443 = vweird.f32 %v1435
      %vm1444 = vweird.f32 %v1438
      %vm1445 = vmor %vm1443, %vm1444
      %v1446 = vsel %vm1445, %v1438, %v1442
      %v1447 = vand.u32 2147483647, %v1435
      %vm1448 = vcmp.eq.f32.partialorder %v1447, 8.507059e+37
      %v1449 = vand.u32 %v1435, 2147483648
      %v1450 = vor.u32 1.1754944e-38, %v1449
      %v1451 = vsel %vm1448, %v1450, %v1446
      %v1452 = vmul.f32 1.0, %v1451
      %v1453 = vrcp.pop %v1436
      %v1454 = vmul.f32 %v1436, %v1453
      %v1455 = vsub.f32 1.0, %v1454
      %v1456 = vmul.f32 %v1453, %v1455
      %v1457 = vadd.f32 %v1453, %v1456
      %vm1458 = vweird.f32 %v1436
      %vm1459 = vweird.f32 %v1453
      %vm1460 = vmor %vm1458, %vm1459
      %v1461 = vsel %vm1460, %v1453, %v1457
      %v1462 = vand.u32 2147483647, %v1436
      %vm1463 = vcmp.eq.f32.partialorder %v1462, 8.507059e+37
      %v1464 = vand.u32 %v1436, 2147483648
      %v1465 = vor.u32 1.1754944e-38, %v1464
      %v1466 = vsel %vm1463, %v1465, %v1461
      %v1467 = vmul.f32 1.0, %v1466
      %v1468 = vrcp.pop %v1437
      %v1469 = vmul.f32 %v1437, %v1468
      %v1470 = vsub.f32 1.0, %v1469
      %v1471 = vmul.f32 %v1468, %v1470
      %v1472 = vadd.f32 %v1468, %v1471
      %vm1473 = vweird.f32 %v1437
      %vm1474 = vweird.f32 %v1468
      %vm1475 = vmor %vm1473, %vm1474
      %v1476 = vsel %vm1475, %v1468, %v1472
      %v1477 = vand.u32 2147483647, %v1437
      %vm1478 = vcmp.eq.f32.partialorder %v1477, 8.507059e+37
      %v1479 = vand.u32 %v1437, 2147483648
      %v1480 = vor.u32 1.1754944e-38, %v1479
      %v1481 = vsel %vm1478, %v1480, %v1476
      %v1482 = vmul.f32 1.0, %v1481
      %v1483 = vmul.f32 %v1423, %v1452
      %v1484 = vmul.f32 %v1424, %v1467
      %v1485 = vmul.f32 %v1425, %v1482
      %v1486 = vmul.f32 %v1483, %v724
      %v1487 = vmul.f32 %v1484, %v725
      %v1488 = vmul.f32 %v1485, %v726
      %v1489 = vpack.c.bf16 %v1487, %v1486
      %v1490 = vpack.c.bf16 %v1488, %v1488
      %v1493 = vrot.slane %v1489, 2
      %v1494 = vrot.slane %v1490, 4
      %v1495 = vrot.slane %v1490, 6
      %v1498 = vsel %vm392, %v1489, %v1493
      %v1501 = vsel %vm743, %v1494, %v1495
      %v1502 = vsel %vm747, %v1498, %v1501
      %1504 = vst.msk [vmem:[#allocation2 + $0x2] sm:$0x3f] %vm753, %v1502
      %v1505 = vld [vmem:[%s6] sm:$0xf]
      %v1506 = vld [vmem:[%s5] sm:$0x3]
      %v1507 = vld [vmem:[#allocation2] sm:$0xff]
      %s1508 = scalar_lea.vmem %s5, 2
      %v1509 = vld [vmem:[%s1508] sm:$0x3]
      %1511 = vst [vmem:[#allocation1] ss:$4 sm:$0xff] %v1507
      %v1512 = vld.sshfl [vmem:[#allocation1] sm:$0xff pattern:$0x73625140]
      %v1514 = vld.sshfl [vmem:[#allocation1 + $0x8] sm:$0xff pattern:$0x73625140]
      %v1516 = vld.sshfl [vmem:[#allocation1 + $0x10] sm:$0xff pattern:$0x73625140]
      %v1518 = vld.sshfl [vmem:[#allocation1 + $0x18] sm:$0xff pattern:$0x73625140]
      %1520 = vrot.lane.b32.xlu0 %v1512, 18
      %v1521 = vpop.permute.xlu0 %1520
      %1522 = vrot.lane.b32.xlu0 %v1514, 18
      %v1523 = vpop.permute.xlu0 %1522
      %1524 = vrot.lane.b32.xlu0 %v1516, 18
      %v1525 = vpop.permute.xlu0 %1524
      %1526 = vrot.lane.b32.xlu0 %v1518, 18
      %v1527 = vpop.permute.xlu0 %1526
      %v1528 = vsel %vm778, %v1521, %v1523
      %v1529 = vsel %vm778, %v1523, %v1525
      %v1530 = vsel %vm778, %v1525, %v1527
      %v1532 = vsel %vm388, %v1509, 0
      %v1535 = vsel %vm392, %v1528, 0
      %v1538 = vsel %vm392, %v1529, 0
      %v1541 = vsel %vm392, %v1530, 0
      %1543 = vmatpush.bf16.msra.mxu0 0
      %1544 = vmatpush.bf16.msra.mxu0 0
      %1545 = vmatpush.bf16.msra.mxu0 0
      %1546 = vmatpush.bf16.msra.mxu0 0
      %1547 = vmatpush.bf16.msra.mxu0 0
      %1548 = vmatpush.bf16.msra.mxu0 0
      %1549 = vmatpush.bf16.msra.mxu0 0
      %1550 = vmatpush.bf16.msra.mxu0 %v1535
      %1551 = vmatmul.bf16.gmra.mxu0 %v1532
      %v1552 = vpop.f32.mrf.mxu0
      %v1553 = vadd.f32 0.0, %v1552
      %v1554 = vpop.f32.mrf.mxu0
      %1555 = vdwg.mxu0
      %1556 = vmatpush.bf16.msra.mxu0 0
      %1557 = vmatpush.bf16.msra.mxu0 0
      %1558 = vmatpush.bf16.msra.mxu0 0
      %1559 = vmatpush.bf16.msra.mxu0 0
      %1560 = vmatpush.bf16.msra.mxu0 0
      %1561 = vmatpush.bf16.msra.mxu0 0
      %1562 = vmatpush.bf16.msra.mxu0 0
      %1563 = vmatpush.bf16.msra.mxu0 %v1538
      %1564 = vmatmul.bf16.gmra.mxu0 %v1532
      %v1565 = vpop.f32.mrf.mxu0
      %v1566 = vadd.f32 0.0, %v1565
      %v1567 = vpop.f32.mrf.mxu0
      %1568 = vdwg.mxu0
      %1569 = vmatpush.bf16.msra.mxu0 0
      %1570 = vmatpush.bf16.msra.mxu0 0
      %1571 = vmatpush.bf16.msra.mxu0 0
      %1572 = vmatpush.bf16.msra.mxu0 0
      %1573 = vmatpush.bf16.msra.mxu0 0
      %1574 = vmatpush.bf16.msra.mxu0 0
      %1575 = vmatpush.bf16.msra.mxu0 0
      %1576 = vmatpush.bf16.msra.mxu0 %v1541
      %1577 = vmatmul.bf16.gmra.mxu0 %v1532
      %v1578 = vpop.f32.mrf.mxu0
      %v1579 = vadd.f32 0.0, %v1578
      %v1580 = vpop.f32.mrf.mxu0
      %1581 = vdwg.mxu0
      %1582 = vst [vmem:[#allocation1] ss:$4 sm:$0xff] %v1507
      %v1583 = vld.sshfl [vmem:[#allocation1] sm:$0xff pattern:$0x73625140]
      %v1585 = vld.sshfl [vmem:[#allocation1 + $0x8] sm:$0xff pattern:$0x73625140]
      %v1587 = vld.sshfl [vmem:[#allocation1 + $0x10] sm:$0xff pattern:$0x73625140]
      %v1589 = vld.sshfl [vmem:[#allocation1 + $0x18] sm:$0xff pattern:$0x73625140]
      %1591 = vrot.lane.b32.xlu0 %v1583, 19
      %v1592 = vpop.permute.xlu0 %1591
      %1593 = vrot.lane.b32.xlu0 %v1585, 19
      %v1594 = vpop.permute.xlu0 %1593
      %1595 = vrot.lane.b32.xlu0 %v1587, 19
      %v1596 = vpop.permute.xlu0 %1595
      %1597 = vrot.lane.b32.xlu0 %v1589, 19
      %v1598 = vpop.permute.xlu0 %1597
      %v1599 = vsel %vm850, %v1592, %v1594
      %v1600 = vsel %vm850, %v1594, %v1596
      %v1601 = vsel %vm850, %v1596, %v1598
      %v1603 = vsel %vm388, %v1506, 0
      %v1606 = vsel %vm392, %v1599, 0
      %v1609 = vsel %vm392, %v1600, 0
      %v1612 = vsel %vm392, %v1601, 0
      %1614 = vmatpush.bf16.msra.mxu0 0
      %1615 = vmatpush.bf16.msra.mxu0 0
      %1616 = vmatpush.bf16.msra.mxu0 0
      %1617 = vmatpush.bf16.msra.mxu0 0
      %1618 = vmatpush.bf16.msra.mxu0 0
      %1619 = vmatpush.bf16.msra.mxu0 0
      %1620 = vmatpush.bf16.msra.mxu0 0
      %1621 = vmatpush.bf16.msra.mxu0 %v1606
      %1622 = vmatmul.bf16.gmra.mxu0 %v1603
      %v1623 = vpop.f32.mrf.mxu0
      %v1624 = vadd.f32 %v1553, %v1623
      %v1625 = vpop.f32.mrf.mxu0
      %1626 = vdwg.mxu0
      %1627 = vmatpush.bf16.msra.mxu0 0
      %1628 = vmatpush.bf16.msra.mxu0 0
      %1629 = vmatpush.bf16.msra.mxu0 0
      %1630 = vmatpush.bf16.msra.mxu0 0
      %1631 = vmatpush.bf16.msra.mxu0 0
      %1632 = vmatpush.bf16.msra.mxu0 0
      %1633 = vmatpush.bf16.msra.mxu0 0
      %1634 = vmatpush.bf16.msra.mxu0 %v1609
      %1635 = vmatmul.bf16.gmra.mxu0 %v1603
      %v1636 = vpop.f32.mrf.mxu0
      %v1637 = vadd.f32 %v1566, %v1636
      %v1638 = vpop.f32.mrf.mxu0
      %1639 = vdwg.mxu0
      %1640 = vmatpush.bf16.msra.mxu0 0
      %1641 = vmatpush.bf16.msra.mxu0 0
      %1642 = vmatpush.bf16.msra.mxu0 0
      %1643 = vmatpush.bf16.msra.mxu0 0
      %1644 = vmatpush.bf16.msra.mxu0 0
      %1645 = vmatpush.bf16.msra.mxu0 0
      %1646 = vmatpush.bf16.msra.mxu0 0
      %1647 = vmatpush.bf16.msra.mxu0 %v1612
      %1648 = vmatmul.bf16.gmra.mxu0 %v1603
      %v1649 = vpop.f32.mrf.mxu0
      %v1650 = vadd.f32 %v1579, %v1649
      %v1651 = vpop.f32.mrf.mxu0
      %1652 = vdwg.mxu0
      %s1653 = scalar_lea.vmem %s5, 4
      %v1654 = vld [vmem:[%s1653] sm:$0x3]
      %v1655 = vld [vmem:[#allocation2] sm:$0xff]
      %1657 = vst [vmem:[#allocation1] ss:$4 sm:$0xff] %v1655
      %v1658 = vld.sshfl [vmem:[#allocation1] sm:$0xff pattern:$0x73625140]
      %v1660 = vld.sshfl [vmem:[#allocation1 + $0x8] sm:$0xff pattern:$0x73625140]
      %v1662 = vld.sshfl [vmem:[#allocation1 + $0x10] sm:$0xff pattern:$0x73625140]
      %v1664 = vld.sshfl [vmem:[#allocation1 + $0x18] sm:$0xff pattern:$0x73625140]
      %1666 = vrot.lane.b32.xlu0 %v1658, 17
      %v1667 = vpop.permute.xlu0 %1666
      %1668 = vrot.lane.b32.xlu0 %v1660, 17
      %v1669 = vpop.permute.xlu0 %1668
      %1670 = vrot.lane.b32.xlu0 %v1662, 17
      %v1671 = vpop.permute.xlu0 %1670
      %1672 = vrot.lane.b32.xlu0 %v1664, 17
      %v1673 = vpop.permute.xlu0 %1672
      %v1674 = vsel %vm926, %v1667, %v1669
      %v1675 = vsel %vm926, %v1669, %v1671
      %v1676 = vsel %vm926, %v1671, %v1673
      %v1678 = vsel %vm388, %v1654, 0
      %v1681 = vsel %vm392, %v1674, 0
      %v1684 = vsel %vm392, %v1675, 0
      %v1687 = vsel %vm392, %v1676, 0
      %1689 = vmatpush.bf16.msra.mxu0 0
      %1690 = vmatpush.bf16.msra.mxu0 0
      %1691 = vmatpush.bf16.msra.mxu0 0
      %1692 = vmatpush.bf16.msra.mxu0 0
      %1693 = vmatpush.bf16.msra.mxu0 0
      %1694 = vmatpush.bf16.msra.mxu0 0
      %1695 = vmatpush.bf16.msra.mxu0 0
      %1696 = vmatpush.bf16.msra.mxu0 %v1681
      %1697 = vmatmul.bf16.gmra.mxu0 %v1678
      %v1698 = vpop.f32.mrf.mxu0
      %v1699 = vadd.f32 0.0, %v1698
      %v1700 = vpop.f32.mrf.mxu0
      %1701 = vdwg.mxu0
      %1702 = vmatpush.bf16.msra.mxu0 0
      %1703 = vmatpush.bf16.msra.mxu0 0
      %1704 = vmatpush.bf16.msra.mxu0 0
      %1705 = vmatpush.bf16.msra.mxu0 0
      %1706 = vmatpush.bf16.msra.mxu0 0
      %1707 = vmatpush.bf16.msra.mxu0 0
      %1708 = vmatpush.bf16.msra.mxu0 0
      %1709 = vmatpush.bf16.msra.mxu0 %v1684
      %1710 = vmatmul.bf16.gmra.mxu0 %v1678
      %v1711 = vpop.f32.mrf.mxu0
      %v1712 = vadd.f32 0.0, %v1711
      %v1713 = vpop.f32.mrf.mxu0
      %1714 = vdwg.mxu0
      %1715 = vmatpush.bf16.msra.mxu0 0
      %1716 = vmatpush.bf16.msra.mxu0 0
      %1717 = vmatpush.bf16.msra.mxu0 0
      %1718 = vmatpush.bf16.msra.mxu0 0
      %1719 = vmatpush.bf16.msra.mxu0 0
      %1720 = vmatpush.bf16.msra.mxu0 0
      %1721 = vmatpush.bf16.msra.mxu0 0
      %1722 = vmatpush.bf16.msra.mxu0 %v1687
      %1723 = vmatmul.bf16.gmra.mxu0 %v1678
      %v1724 = vpop.f32.mrf.mxu0
      %v1725 = vadd.f32 0.0, %v1724
      %v1726 = vpop.f32.mrf.mxu0
      %1727 = vdwg.mxu0
      %v1728 = vadd.f32 %v1624, %v1699
      %v1729 = vadd.f32 %v1637, %v1712
      %v1730 = vadd.f32 %v1650, %v1725
      %s1731 = scalar_lea.vmem %s5, 6
      %v1732 = vld [vmem:[%s1731] sm:$0x3]
      %v1733 = vld [vmem:[#allocation2] sm:$0xff]
      %1735 = vst [vmem:[#allocation1] ss:$4 sm:$0xff] %v1733
      %v1736 = vld.sshfl [vmem:[#allocation1] sm:$0xff pattern:$0x73625140]
      %v1738 = vld.sshfl [vmem:[#allocation1 + $0x8] sm:$0xff pattern:$0x73625140]
      %v1740 = vld.sshfl [vmem:[#allocation1 + $0x10] sm:$0xff pattern:$0x73625140]
      %v1742 = vld.sshfl [vmem:[#allocation1 + $0x18] sm:$0xff pattern:$0x73625140]
      %1744 = vrot.lane.b32.xlu0 %v1736, 1
      %v1745 = vpop.permute.xlu0 %1744
      %1746 = vrot.lane.b32.xlu0 %v1738, 1
      %v1747 = vpop.permute.xlu0 %1746
      %1748 = vrot.lane.b32.xlu0 %v1740, 1
      %v1749 = vpop.permute.xlu0 %1748
      %1750 = vrot.lane.b32.xlu0 %v1742, 1
      %v1751 = vpop.permute.xlu0 %1750
      %v1752 = vsel %vm1005, %v1745, %v1747
      %v1753 = vsel %vm1005, %v1747, %v1749
      %v1754 = vsel %vm1005, %v1749, %v1751
      %v1756 = vsel %vm388, %v1732, 0
      %v1759 = vsel %vm392, %v1752, 0
      %v1762 = vsel %vm392, %v1753, 0
      %v1765 = vsel %vm392, %v1754, 0
      %1767 = vmatpush.bf16.msra.mxu0 0
      %1768 = vmatpush.bf16.msra.mxu0 0
      %1769 = vmatpush.bf16.msra.mxu0 0
      %1770 = vmatpush.bf16.msra.mxu0 0
      %1771 = vmatpush.bf16.msra.mxu0 0
      %1772 = vmatpush.bf16.msra.mxu0 0
      %1773 = vmatpush.bf16.msra.mxu0 0
      %1774 = vmatpush.bf16.msra.mxu0 %v1759
      %1775 = vmatmul.bf16.gmra.mxu0 %v1756
      %v1776 = vpop.f32.mrf.mxu0
      %v1777 = vadd.f32 0.0, %v1776
      %v1778 = vpop.f32.mrf.mxu0
      %1779 = vdwg.mxu0
      %1780 = vmatpush.bf16.msra.mxu0 0
      %1781 = vmatpush.bf16.msra.mxu0 0
      %1782 = vmatpush.bf16.msra.mxu0 0
      %1783 = vmatpush.bf16.msra.mxu0 0
      %1784 = vmatpush.bf16.msra.mxu0 0
      %1785 = vmatpush.bf16.msra.mxu0 0
      %1786 = vmatpush.bf16.msra.mxu0 0
      %1787 = vmatpush.bf16.msra.mxu0 %v1762
      %1788 = vmatmul.bf16.gmra.mxu0 %v1756
      %v1789 = vpop.f32.mrf.mxu0
      %v1790 = vadd.f32 0.0, %v1789
      %v1791 = vpop.f32.mrf.mxu0
      %1792 = vdwg.mxu0
      %1793 = vmatpush.bf16.msra.mxu0 0
      %1794 = vmatpush.bf16.msra.mxu0 0
      %1795 = vmatpush.bf16.msra.mxu0 0
      %1796 = vmatpush.bf16.msra.mxu0 0
      %1797 = vmatpush.bf16.msra.mxu0 0
      %1798 = vmatpush.bf16.msra.mxu0 0
      %1799 = vmatpush.bf16.msra.mxu0 0
      %1800 = vmatpush.bf16.msra.mxu0 %v1765
      %1801 = vmatmul.bf16.gmra.mxu0 %v1756
      %v1802 = vpop.f32.mrf.mxu0
      %v1803 = vadd.f32 0.0, %v1802
      %v1804 = vpop.f32.mrf.mxu0
      %1805 = vdwg.mxu0
      %v1806 = vadd.f32 %v1728, %v1777
      %v1807 = vadd.f32 %v1729, %v1790
      %v1808 = vadd.f32 %v1730, %v1803
      %s1809 = scalar_lea.vmem %s5, 8
      %v1810 = vld [vmem:[%s1809] sm:$0x3]
      %v1811 = vld [vmem:[#allocation2 + $0x2] sm:$0x3f]
      %1813 = vst [vmem:[#allocation1] ss:$4 sm:$0xff] %v1811
      %v1814 = vld.sshfl [vmem:[#allocation1] sm:$0xff pattern:$0x73625140]
      %v1815 = vld.sshfl [vmem:[#allocation1 + $0x8] sm:$0xff pattern:$0x73625140]
      %v1816 = vld.sshfl [vmem:[#allocation1 + $0x10] sm:$0xff pattern:$0x73625140]
      %v1818 = vsel %vm388, %v1810, 0
      %v1820 = vsel %vm392, %v1814, 0
      %v1822 = vsel %vm392, %v1815, 0
      %v1824 = vsel %vm392, %v1816, 0
      %1826 = vmatpush.bf16.msra.mxu0 0
      %1827 = vmatpush.bf16.msra.mxu0 0
      %1828 = vmatpush.bf16.msra.mxu0 0
      %1829 = vmatpush.bf16.msra.mxu0 0
      %1830 = vmatpush.bf16.msra.mxu0 0
      %1831 = vmatpush.bf16.msra.mxu0 0
      %1832 = vmatpush.bf16.msra.mxu0 0
      %1833 = vmatpush.bf16.msra.mxu0 %v1820
      %1834 = vmatmul.bf16.gmra.mxu0 %v1818
      %v1835 = vpop.f32.mrf.mxu0
      %v1836 = vadd.f32 0.0, %v1835
      %v1837 = vpop.f32.mrf.mxu0
      %1838 = vdwg.mxu0
      %1839 = vmatpush.bf16.msra.mxu0 0
      %1840 = vmatpush.bf16.msra.mxu0 0
      %1841 = vmatpush.bf16.msra.mxu0 0
      %1842 = vmatpush.bf16.msra.mxu0 0
      %1843 = vmatpush.bf16.msra.mxu0 0
      %1844 = vmatpush.bf16.msra.mxu0 0
      %1845 = vmatpush.bf16.msra.mxu0 0
      %1846 = vmatpush.bf16.msra.mxu0 %v1822
      %1847 = vmatmul.bf16.gmra.mxu0 %v1818
      %v1848 = vpop.f32.mrf.mxu0
      %v1849 = vadd.f32 0.0, %v1848
      %v1850 = vpop.f32.mrf.mxu0
      %1851 = vdwg.mxu0
      %1852 = vmatpush.bf16.msra.mxu0 0
      %1853 = vmatpush.bf16.msra.mxu0 0
      %1854 = vmatpush.bf16.msra.mxu0 0
      %1855 = vmatpush.bf16.msra.mxu0 0
      %1856 = vmatpush.bf16.msra.mxu0 0
      %1857 = vmatpush.bf16.msra.mxu0 0
      %1858 = vmatpush.bf16.msra.mxu0 0
      %1859 = vmatpush.bf16.msra.mxu0 %v1824
      %1860 = vmatmul.bf16.gmra.mxu0 %v1818
      %v1861 = vpop.f32.mrf.mxu0
      %v1862 = vadd.f32 0.0, %v1861
      %v1863 = vpop.f32.mrf.mxu0
      %1864 = vdwg.mxu0
      %v1865 = vadd.f32 %v1806, %v1836
      %v1866 = vadd.f32 %v1807, %v1849
      %v1867 = vadd.f32 %v1808, %v1862
      %s1868 = scalar_lea.vmem %s5, 10
      %v1869 = vld [vmem:[%s1868] sm:$0x3]
      %v1870 = vld [vmem:[#allocation2 + $0x2] sm:$0x3f]
      %1872 = vst [vmem:[#allocation1] ss:$4 sm:$0xff] %v1870
      %v1873 = vld.sshfl [vmem:[#allocation1] sm:$0xff pattern:$0x73625140]
      %v1875 = vld.sshfl [vmem:[#allocation1 + $0x8] sm:$0xff pattern:$0x73625140]
      %v1877 = vld.sshfl [vmem:[#allocation1 + $0x10] sm:$0xff pattern:$0x73625140]
      %1879 = vrot.lane.b32.xlu0 %v1873, 127
      %v1880 = vpop.permute.xlu0 %1879
      %1881 = vrot.lane.b32.xlu0 %v1875, 127
      %v1882 = vpop.permute.xlu0 %1881
      %1883 = vrot.lane.b32.xlu0 %v1877, 127
      %v1884 = vpop.permute.xlu0 %1883
      %v1885 = vsel %vm1139, %v1880, %v1882
      %v1886 = vsel %vm1139, %v1882, %v1884
      %v1888 = vsel %vm388, %v1869, 0
      %v1891 = vsel %vm392, %v1885, 0
      %v1894 = vsel %vm392, %v1886, 0
      %v1897 = vsel %vm392, %v1884, 0
      %1899 = vmatpush.bf16.msra.mxu0 0
      %1900 = vmatpush.bf16.msra.mxu0 0
      %1901 = vmatpush.bf16.msra.mxu0 0
      %1902 = vmatpush.bf16.msra.mxu0 0
      %1903 = vmatpush.bf16.msra.mxu0 0
      %1904 = vmatpush.bf16.msra.mxu0 0
      %1905 = vmatpush.bf16.msra.mxu0 0
      %1906 = vmatpush.bf16.msra.mxu0 %v1891
      %1907 = vmatmul.bf16.gmra.mxu0 %v1888
      %v1908 = vpop.f32.mrf.mxu0
      %v1909 = vadd.f32 0.0, %v1908
      %v1910 = vpop.f32.mrf.mxu0
      %1911 = vdwg.mxu0
      %1912 = vmatpush.bf16.msra.mxu0 0
      %1913 = vmatpush.bf16.msra.mxu0 0
      %1914 = vmatpush.bf16.msra.mxu0 0
      %1915 = vmatpush.bf16.msra.mxu0 0
      %1916 = vmatpush.bf16.msra.mxu0 0
      %1917 = vmatpush.bf16.msra.mxu0 0
      %1918 = vmatpush.bf16.msra.mxu0 0
      %1919 = vmatpush.bf16.msra.mxu0 %v1894
      %1920 = vmatmul.bf16.gmra.mxu0 %v1888
      %v1921 = vpop.f32.mrf.mxu0
      %v1922 = vadd.f32 0.0, %v1921
      %v1923 = vpop.f32.mrf.mxu0
      %1924 = vdwg.mxu0
      %1925 = vmatpush.bf16.msra.mxu0 0
      %1926 = vmatpush.bf16.msra.mxu0 0
      %1927 = vmatpush.bf16.msra.mxu0 0
      %1928 = vmatpush.bf16.msra.mxu0 0
      %1929 = vmatpush.bf16.msra.mxu0 0
      %1930 = vmatpush.bf16.msra.mxu0 0
      %1931 = vmatpush.bf16.msra.mxu0 0
      %1932 = vmatpush.bf16.msra.mxu0 %v1897
      %1933 = vmatmul.bf16.gmra.mxu0 %v1888
      %v1934 = vpop.f32.mrf.mxu0
      %v1935 = vadd.f32 0.0, %v1934
      %v1936 = vpop.f32.mrf.mxu0
      %1937 = vdwg.mxu0
      %v1938 = vadd.f32 %v1865, %v1909
      %v1939 = vadd.f32 %v1866, %v1922
      %v1940 = vadd.f32 %v1867, %v1935
      %s1941 = scalar_lea.vmem %s5, 12
      %v1942 = vld [vmem:[%s1941] sm:$0x3]
      %v1943 = vld [vmem:[#allocation2 + $0x2] sm:$0x3f]
      %1945 = vst [vmem:[#allocation1] ss:$4 sm:$0xff] %v1943
      %v1946 = vld.sshfl [vmem:[#allocation1] sm:$0xff pattern:$0x73625140]
      %v1948 = vld.sshfl [vmem:[#allocation1 + $0x8] sm:$0xff pattern:$0x73625140]
      %v1950 = vld.sshfl [vmem:[#allocation1 + $0x10] sm:$0xff pattern:$0x73625140]
      %1952 = vrot.lane.b32.xlu0 %v1946, 111
      %v1953 = vpop.permute.xlu0 %1952
      %1954 = vrot.lane.b32.xlu0 %v1948, 111
      %v1955 = vpop.permute.xlu0 %1954
      %1956 = vrot.lane.b32.xlu0 %v1950, 111
      %v1957 = vpop.permute.xlu0 %1956
      %v1958 = vsel %vm1213, %v1953, %v1955
      %v1959 = vsel %vm1213, %v1955, %v1957
      %v1961 = vsel %vm388, %v1942, 0
      %v1964 = vsel %vm392, %v1958, 0
      %v1967 = vsel %vm392, %v1959, 0
      %v1970 = vsel %vm392, %v1957, 0
      %1972 = vmatpush.bf16.msra.mxu0 0
      %1973 = vmatpush.bf16.msra.mxu0 0
      %1974 = vmatpush.bf16.msra.mxu0 0
      %1975 = vmatpush.bf16.msra.mxu0 0
      %1976 = vmatpush.bf16.msra.mxu0 0
      %1977 = vmatpush.bf16.msra.mxu0 0
      %1978 = vmatpush.bf16.msra.mxu0 0
      %1979 = vmatpush.bf16.msra.mxu0 %v1964
      %1980 = vmatmul.bf16.gmra.mxu0 %v1961
      %v1981 = vpop.f32.mrf.mxu0
      %v1982 = vadd.f32 0.0, %v1981
      %v1983 = vpop.f32.mrf.mxu0
      %1984 = vdwg.mxu0
      %1985 = vmatpush.bf16.msra.mxu0 0
      %1986 = vmatpush.bf16.msra.mxu0 0
      %1987 = vmatpush.bf16.msra.mxu0 0
      %1988 = vmatpush.bf16.msra.mxu0 0
      %1989 = vmatpush.bf16.msra.mxu0 0
      %1990 = vmatpush.bf16.msra.mxu0 0
      %1991 = vmatpush.bf16.msra.mxu0 0
      %1992 = vmatpush.bf16.msra.mxu0 %v1967
      %1993 = vmatmul.bf16.gmra.mxu0 %v1961
      %v1994 = vpop.f32.mrf.mxu0
      %v1995 = vadd.f32 0.0, %v1994
      %v1996 = vpop.f32.mrf.mxu0
      %1997 = vdwg.mxu0
      %1998 = vmatpush.bf16.msra.mxu0 0
      %1999 = vmatpush.bf16.msra.mxu0 0
      %2000 = vmatpush.bf16.msra.mxu0 0
      %2001 = vmatpush.bf16.msra.mxu0 0
      %2002 = vmatpush.bf16.msra.mxu0 0
      %2003 = vmatpush.bf16.msra.mxu0 0
      %2004 = vmatpush.bf16.msra.mxu0 0
      %2005 = vmatpush.bf16.msra.mxu0 %v1970
      %2006 = vmatmul.bf16.gmra.mxu0 %v1961
      %v2007 = vpop.f32.mrf.mxu0
      %v2008 = vadd.f32 0.0, %v2007
      %v2009 = vpop.f32.mrf.mxu0
      %2010 = vdwg.mxu0
      %v2011 = vadd.f32 %v1938, %v1982
      %v2012 = vadd.f32 %v1939, %v1995
      %v2013 = vadd.f32 %v1940, %v2008
      %s2014 = scalar_lea.vmem %s5, 14
      %v2015 = vld [vmem:[%s2014] sm:$0x3]
      %v2016 = vld [vmem:[#allocation2 + $0x2] sm:$0x3f]
      %2018 = vst [vmem:[#allocation1] ss:$4 sm:$0xff] %v2016
      %v2019 = vld.sshfl [vmem:[#allocation1] sm:$0xff pattern:$0x73625140]
      %v2021 = vld.sshfl [vmem:[#allocation1 + $0x8] sm:$0xff pattern:$0x73625140]
      %v2023 = vld.sshfl [vmem:[#allocation1 + $0x10] sm:$0xff pattern:$0x73625140]
      %2025 = vrot.lane.b32.xlu0 %v2019, 110
      %v2026 = vpop.permute.xlu0 %2025
      %2027 = vrot.lane.b32.xlu0 %v2021, 110
      %v2028 = vpop.permute.xlu0 %2027
      %2029 = vrot.lane.b32.xlu0 %v2023, 110
      %v2030 = vpop.permute.xlu0 %2029
      %v2031 = vsel %vm1287, %v2026, %v2028
      %v2032 = vsel %vm1287, %v2028, %v2030
      %v2034 = vsel %vm388, %v2015, 0
      %v2037 = vsel %vm392, %v2031, 0
      %v2040 = vsel %vm392, %v2032, 0
      %v2043 = vsel %vm392, %v2030, 0
      %2045 = vmatpush.bf16.msra.mxu0 0
      %2046 = vmatpush.bf16.msra.mxu0 0
      %2047 = vmatpush.bf16.msra.mxu0 0
      %2048 = vmatpush.bf16.msra.mxu0 0
      %2049 = vmatpush.bf16.msra.mxu0 0
      %2050 = vmatpush.bf16.msra.mxu0 0
      %2051 = vmatpush.bf16.msra.mxu0 0
      %2052 = vmatpush.bf16.msra.mxu0 %v2037
      %2053 = vmatmul.bf16.gmra.mxu0 %v2034
      %v2054 = vpop.f32.mrf.mxu0
      %v2055 = vadd.f32 0.0, %v2054
      %v2056 = vpop.f32.mrf.mxu0
      %2057 = vdwg.mxu0
      %2058 = vmatpush.bf16.msra.mxu0 0
      %2059 = vmatpush.bf16.msra.mxu0 0
      %2060 = vmatpush.bf16.msra.mxu0 0
      %2061 = vmatpush.bf16.msra.mxu0 0
      %2062 = vmatpush.bf16.msra.mxu0 0
      %2063 = vmatpush.bf16.msra.mxu0 0
      %2064 = vmatpush.bf16.msra.mxu0 0
      %2065 = vmatpush.bf16.msra.mxu0 %v2040
      %2066 = vmatmul.bf16.gmra.mxu0 %v2034
      %v2067 = vpop.f32.mrf.mxu0
      %v2068 = vadd.f32 0.0, %v2067
      %v2069 = vpop.f32.mrf.mxu0
      %2070 = vdwg.mxu0
      %2071 = vmatpush.bf16.msra.mxu0 0
      %2072 = vmatpush.bf16.msra.mxu0 0
      %2073 = vmatpush.bf16.msra.mxu0 0
      %2074 = vmatpush.bf16.msra.mxu0 0
      %2075 = vmatpush.bf16.msra.mxu0 0
      %2076 = vmatpush.bf16.msra.mxu0 0
      %2077 = vmatpush.bf16.msra.mxu0 0
      %2078 = vmatpush.bf16.msra.mxu0 %v2043
      %2079 = vmatmul.bf16.gmra.mxu0 %v2034
      %v2080 = vpop.f32.mrf.mxu0
      %v2081 = vadd.f32 0.0, %v2080
      %v2082 = vpop.f32.mrf.mxu0
      %2083 = vdwg.mxu0
      %v2084 = vadd.f32 %v2011, %v2055
      %v2085 = vadd.f32 %v2012, %v2068
      %v2086 = vadd.f32 %v2013, %v2081
      %s2087 = scalar_lea.vmem %s5, 16
      %v2088 = vld [vmem:[%s2087] sm:$0x3]
      %v2089 = vld [vmem:[#allocation2 + $0x2] sm:$0x3f]
      %2091 = vst [vmem:[#allocation1] ss:$4 sm:$0xff] %v2089
      %v2092 = vld.sshfl [vmem:[#allocation1] sm:$0xff pattern:$0x73625140]
      %v2094 = vld.sshfl [vmem:[#allocation1 + $0x8] sm:$0xff pattern:$0x73625140]
      %v2096 = vld.sshfl [vmem:[#allocation1 + $0x10] sm:$0xff pattern:$0x73625140]
      %2098 = vrot.lane.b32.xlu0 %v2092, 109
      %v2099 = vpop.permute.xlu0 %2098
      %2100 = vrot.lane.b32.xlu0 %v2094, 109
      %v2101 = vpop.permute.xlu0 %2100
      %2102 = vrot.lane.b32.xlu0 %v2096, 109
      %v2103 = vpop.permute.xlu0 %2102
      %v2104 = vsel %vm1361, %v2099, %v2101
      %v2105 = vsel %vm1361, %v2101, %v2103
      %v2107 = vsel %vm388, %v2088, 0
      %v2110 = vsel %vm392, %v2104, 0
      %v2113 = vsel %vm392, %v2105, 0
      %v2116 = vsel %vm392, %v2103, 0
      %2118 = vmatpush.bf16.msra.mxu0 0
      %2119 = vmatpush.bf16.msra.mxu0 0
      %2120 = vmatpush.bf16.msra.mxu0 0
      %2121 = vmatpush.bf16.msra.mxu0 0
      %2122 = vmatpush.bf16.msra.mxu0 0
      %2123 = vmatpush.bf16.msra.mxu0 0
      %2124 = vmatpush.bf16.msra.mxu0 0
      %2125 = vmatpush.bf16.msra.mxu0 %v2110
      %2126 = vmatmul.bf16.gmra.mxu0 %v2107
      %v2127 = vpop.f32.mrf.mxu0
      %v2128 = vadd.f32 0.0, %v2127
      %v2129 = vpop.f32.mrf.mxu0
      %2130 = vdwg.mxu0
      %2131 = vmatpush.bf16.msra.mxu0 0
      %2132 = vmatpush.bf16.msra.mxu0 0
      %2133 = vmatpush.bf16.msra.mxu0 0
      %2134 = vmatpush.bf16.msra.mxu0 0
      %2135 = vmatpush.bf16.msra.mxu0 0
      %2136 = vmatpush.bf16.msra.mxu0 0
      %2137 = vmatpush.bf16.msra.mxu0 0
      %2138 = vmatpush.bf16.msra.mxu0 %v2113
      %2139 = vmatmul.bf16.gmra.mxu0 %v2107
      %v2140 = vpop.f32.mrf.mxu0
      %v2141 = vadd.f32 0.0, %v2140
      %v2142 = vpop.f32.mrf.mxu0
      %2143 = vdwg.mxu0
      %2144 = vmatpush.bf16.msra.mxu0 0
      %2145 = vmatpush.bf16.msra.mxu0 0
      %2146 = vmatpush.bf16.msra.mxu0 0
      %2147 = vmatpush.bf16.msra.mxu0 0
      %2148 = vmatpush.bf16.msra.mxu0 0
      %2149 = vmatpush.bf16.msra.mxu0 0
      %2150 = vmatpush.bf16.msra.mxu0 0
      %2151 = vmatpush.bf16.msra.mxu0 %v2116
      %2152 = vmatmul.bf16.gmra.mxu0 %v2107
      %v2153 = vpop.f32.mrf.mxu0
      %v2154 = vadd.f32 0.0, %v2153
      %v2155 = vpop.f32.mrf.mxu0
      %2156 = vdwg.mxu0
      %v2157 = vadd.f32 %v2084, %v2128
      %v2158 = vadd.f32 %v2085, %v2141
      %v2159 = vadd.f32 %v2086, %v2154
      %2161 = vset.pattern.permute.xlu0 0
      %2162 = vperm.xlu0 %2161, %v1505
      %v2163 = vpop.permute.xlu0 %2162
      %v2165 = vadd.f32 %v2157, %v2163
      %v2166 = vadd.f32 %v2158, %v2163
      %v2167 = vadd.f32 %v2159, %v2163
      %v2168 = vsub.f32 0.0, %v2165
      %v2169 = vsub.f32 0.0, %v2166
      %v2170 = vsub.f32 0.0, %v2167
      %v2171 = vmul.f32 %v2168, 1.442695
      %v2172 = vpow.pop %v2171
      %v2173 = vmul.f32 %v2169, 1.442695
      %v2174 = vpow.pop %v2173
      %v2175 = vmul.f32 %v2170, 1.442695
      %v2176 = vpow.pop %v2175
      %v2177 = vadd.f32 %v2172, 1.0
      %v2178 = vadd.f32 %v2174, 1.0
      %v2179 = vadd.f32 %v2176, 1.0
      %v2180 = vrcp.pop %v2177
      %v2181 = vmul.f32 %v2177, %v2180
      %v2182 = vsub.f32 1.0, %v2181
      %v2183 = vmul.f32 %v2180, %v2182
      %v2184 = vadd.f32 %v2180, %v2183
      %vm2185 = vweird.f32 %v2177
      %vm2186 = vweird.f32 %v2180
      %vm2187 = vmor %vm2185, %vm2186
      %v2188 = vsel %vm2187, %v2180, %v2184
      %v2189 = vand.u32 2147483647, %v2177
      %vm2190 = vcmp.eq.f32.partialorder %v2189, 8.507059e+37
      %v2191 = vand.u32 %v2177, 2147483648
      %v2192 = vor.u32 1.1754944e-38, %v2191
      %v2193 = vsel %vm2190, %v2192, %v2188
      %v2194 = vmul.f32 1.0, %v2193
      %v2195 = vrcp.pop %v2178
      %v2196 = vmul.f32 %v2178, %v2195
      %v2197 = vsub.f32 1.0, %v2196
      %v2198 = vmul.f32 %v2195, %v2197
      %v2199 = vadd.f32 %v2195, %v2198
      %vm2200 = vweird.f32 %v2178
      %vm2201 = vweird.f32 %v2195
      %vm2202 = vmor %vm2200, %vm2201
      %v2203 = vsel %vm2202, %v2195, %v2199
      %v2204 = vand.u32 2147483647, %v2178
      %vm2205 = vcmp.eq.f32.partialorder %v2204, 8.507059e+37
      %v2206 = vand.u32 %v2178, 2147483648
      %v2207 = vor.u32 1.1754944e-38, %v2206
      %v2208 = vsel %vm2205, %v2207, %v2203
      %v2209 = vmul.f32 1.0, %v2208
      %v2210 = vrcp.pop %v2179
      %v2211 = vmul.f32 %v2179, %v2210
      %v2212 = vsub.f32 1.0, %v2211
      %v2213 = vmul.f32 %v2210, %v2212
      %v2214 = vadd.f32 %v2210, %v2213
      %vm2215 = vweird.f32 %v2179
      %vm2216 = vweird.f32 %v2210
      %vm2217 = vmor %vm2215, %vm2216
      %v2218 = vsel %vm2217, %v2210, %v2214
      %v2219 = vand.u32 2147483647, %v2179
      %vm2220 = vcmp.eq.f32.partialorder %v2219, 8.507059e+37
      %v2221 = vand.u32 %v2179, 2147483648
      %v2222 = vor.u32 1.1754944e-38, %v2221
      %v2223 = vsel %vm2220, %v2222, %v2218
      %v2224 = vmul.f32 1.0, %v2223
      %v2225 = vmul.f32 %v2165, %v2194
      %v2226 = vmul.f32 %v2166, %v2209
      %v2227 = vmul.f32 %v2167, %v2224
      %v2228 = vadd.f32 %v2225, %v609
      %v2229 = vadd.f32 %v2226, %v610
      %v2230 = vadd.f32 %v2227, %v611
      %s2231 = scalar_lea.vmem %s7, 8
      %v2232 = vld [vmem:[%s2231] sm:$0xf]
      %v2233 = vpack.c.bf16 %v2228, %v2228
      %v2234 = vpack.c.bf16 %v2229, %v2229
      %v2235 = vpack.c.bf16 %v2230, %v2230
      %v2237 = vsel %vm388, %v2232, 0
      %v2240 = vsel %vm392, %v2233, 0
      %v2243 = vsel %vm392, %v2234, 0
      %v2246 = vsel %vm392, %v2235, 0
      %2248 = vmatpush.bf16.msra.mxu0 0
      %2249 = vmatpush.bf16.msra.mxu0 0
      %2250 = vmatpush.bf16.msra.mxu0 0
      %2251 = vmatpush.bf16.msra.mxu0 0
      %2252 = vmatpush.bf16.msra.mxu0 0
      %2253 = vmatpush.bf16.msra.mxu0 0
      %2254 = vmatpush.bf16.msra.mxu0 0
      %2255 = vmatpush.bf16.msra.mxu0 %v2240
      %2256 = vmatmul.bf16.gmra.mxu0 %v2237
      %v2257 = vpop.f32.mrf.mxu0
      %v2258 = vadd.f32 0.0, %v2257
      %v2259 = vpop.f32.mrf.mxu0
      %2260 = vdwg.mxu0
      %2261 = vmatpush.bf16.msra.mxu0 0
      %2262 = vmatpush.bf16.msra.mxu0 0
      %2263 = vmatpush.bf16.msra.mxu0 0
      %2264 = vmatpush.bf16.msra.mxu0 0
      %2265 = vmatpush.bf16.msra.mxu0 0
      %2266 = vmatpush.bf16.msra.mxu0 0
      %2267 = vmatpush.bf16.msra.mxu0 0
      %2268 = vmatpush.bf16.msra.mxu0 %v2243
      %2269 = vmatmul.bf16.gmra.mxu0 %v2237
      %v2270 = vpop.f32.mrf.mxu0
      %v2271 = vadd.f32 0.0, %v2270
      %v2272 = vpop.f32.mrf.mxu0
      %2273 = vdwg.mxu0
      %2274 = vmatpush.bf16.msra.mxu0 0
      %2275 = vmatpush.bf16.msra.mxu0 0
      %2276 = vmatpush.bf16.msra.mxu0 0
      %2277 = vmatpush.bf16.msra.mxu0 0
      %2278 = vmatpush.bf16.msra.mxu0 0
      %2279 = vmatpush.bf16.msra.mxu0 0
      %2280 = vmatpush.bf16.msra.mxu0 0
      %2281 = vmatpush.bf16.msra.mxu0 %v2246
      %2282 = vmatmul.bf16.gmra.mxu0 %v2237
      %v2283 = vpop.f32.mrf.mxu0
      %v2284 = vadd.f32 0.0, %v2283
      %v2285 = vpop.f32.mrf.mxu0
      %2286 = vdwg.mxu0
      %v2287 = vadd.f32 %v694, %v2258
      %v2288 = vadd.f32 %v707, %v2271
      %v2289 = vadd.f32 %v720, %v2284
      %v2290 = vmul.f32 %v2228, %v724
      %v2291 = vmul.f32 %v2229, %v725
      %v2292 = vmul.f32 %v2230, %v726
      %v2293 = vpack.c.bf16 %v2291, %v2290
      %v2294 = vpack.c.bf16 %v2292, %v2292
      %v2297 = vrot.slane %v2293, 2
      %v2298 = vrot.slane %v2294, 4
      %v2299 = vrot.slane %v2294, 6
      %v2302 = vsel %vm392, %v2293, %v2297
      %v2305 = vsel %vm743, %v2298, %v2299
      %v2306 = vsel %vm747, %v2302, %v2305
      %2308 = vst.msk [vmem:[#allocation2 + $0x2] sm:$0x3f] %vm753, %v2306
      %s2309 = scalar_lea.vmem %s4, 4
      %v2310 = vld [vmem:[%s2309] sm:$0xf]
      %s2311 = scalar_lea.vmem %s3, 18
      %v2312 = vld [vmem:[%s2311] sm:$0x3]
      %v2313 = vld [vmem:[#allocation2] sm:$0xff]
      %s2314 = scalar_lea.vmem %s3, 20
      %v2315 = vld [vmem:[%s2314] sm:$0x3]
      %2317 = vst [vmem:[#allocation1] ss:$4 sm:$0xff] %v2313
      %v2318 = vld.sshfl [vmem:[#allocation1] sm:$0xff pattern:$0x73625140]
      %v2320 = vld.sshfl [vmem:[#allocation1 + $0x8] sm:$0xff pattern:$0x73625140]
      %v2322 = vld.sshfl [vmem:[#allocation1 + $0x10] sm:$0xff pattern:$0x73625140]
      %v2324 = vld.sshfl [vmem:[#allocation1 + $0x18] sm:$0xff pattern:$0x73625140]
      %2326 = vrot.lane.b32.xlu0 %v2318, 18
      %v2327 = vpop.permute.xlu0 %2326
      %2328 = vrot.lane.b32.xlu0 %v2320, 18
      %v2329 = vpop.permute.xlu0 %2328
      %2330 = vrot.lane.b32.xlu0 %v2322, 18
      %v2331 = vpop.permute.xlu0 %2330
      %2332 = vrot.lane.b32.xlu0 %v2324, 18
      %v2333 = vpop.permute.xlu0 %2332
      %v2334 = vsel %vm778, %v2327, %v2329
      %v2335 = vsel %vm778, %v2329, %v2331
      %v2336 = vsel %vm778, %v2331, %v2333
      %v2338 = vsel %vm388, %v2315, 0
      %v2341 = vsel %vm392, %v2334, 0
      %v2344 = vsel %vm392, %v2335, 0
      %v2347 = vsel %vm392, %v2336, 0
      %2349 = vmatpush.bf16.msra.mxu0 0
      %2350 = vmatpush.bf16.msra.mxu0 0
      %2351 = vmatpush.bf16.msra.mxu0 0
      %2352 = vmatpush.bf16.msra.mxu0 0
      %2353 = vmatpush.bf16.msra.mxu0 0
      %2354 = vmatpush.bf16.msra.mxu0 0
      %2355 = vmatpush.bf16.msra.mxu0 0
      %2356 = vmatpush.bf16.msra.mxu0 %v2341
      %2357 = vmatmul.bf16.gmra.mxu0 %v2338
      %v2358 = vpop.f32.mrf.mxu0
      %v2359 = vadd.f32 0.0, %v2358
      %v2360 = vpop.f32.mrf.mxu0
      %2361 = vdwg.mxu0
      %2362 = vmatpush.bf16.msra.mxu0 0
      %2363 = vmatpush.bf16.msra.mxu0 0
      %2364 = vmatpush.bf16.msra.mxu0 0
      %2365 = vmatpush.bf16.msra.mxu0 0
      %2366 = vmatpush.bf16.msra.mxu0 0
      %2367 = vmatpush.bf16.msra.mxu0 0
      %2368 = vmatpush.bf16.msra.mxu0 0
      %2369 = vmatpush.bf16.msra.mxu0 %v2344
      %2370 = vmatmul.bf16.gmra.mxu0 %v2338
      %v2371 = vpop.f32.mrf.mxu0
      %v2372 = vadd.f32 0.0, %v2371
      %v2373 = vpop.f32.mrf.mxu0
      %2374 = vdwg.mxu0
      %2375 = vmatpush.bf16.msra.mxu0 0
      %2376 = vmatpush.bf16.msra.mxu0 0
      %2377 = vmatpush.bf16.msra.mxu0 0
      %2378 = vmatpush.bf16.msra.mxu0 0
      %2379 = vmatpush.bf16.msra.mxu0 0
      %2380 = vmatpush.bf16.msra.mxu0 0
      %2381 = vmatpush.bf16.msra.mxu0 0
      %2382 = vmatpush.bf16.msra.mxu0 %v2347
      %2383 = vmatmul.bf16.gmra.mxu0 %v2338
      %v2384 = vpop.f32.mrf.mxu0
      %v2385 = vadd.f32 0.0, %v2384
      %v2386 = vpop.f32.mrf.mxu0
      %2387 = vdwg.mxu0
      %2388 = vst [vmem:[#allocation1] ss:$4 sm:$0xff] %v2313
      %v2389 = vld.sshfl [vmem:[#allocation1] sm:$0xff pattern:$0x73625140]
      %v2391 = vld.sshfl [vmem:[#allocation1 + $0x8] sm:$0xff pattern:$0x73625140]
      %v2393 = vld.sshfl [vmem:[#allocation1 + $0x10] sm:$0xff pattern:$0x73625140]
      %v2395 = vld.sshfl [vmem:[#allocation1 + $0x18] sm:$0xff pattern:$0x73625140]
      %2397 = vrot.lane.b32.xlu0 %v2389, 19
      %v2398 = vpop.permute.xlu0 %2397
      %2399 = vrot.lane.b32.xlu0 %v2391, 19
      %v2400 = vpop.permute.xlu0 %2399
      %2401 = vrot.lane.b32.xlu0 %v2393, 19
      %v2402 = vpop.permute.xlu0 %2401
      %2403 = vrot.lane.b32.xlu0 %v2395, 19
      %v2404 = vpop.permute.xlu0 %2403
      %v2405 = vsel %vm850, %v2398, %v2400
      %v2406 = vsel %vm850, %v2400, %v2402
      %v2407 = vsel %vm850, %v2402, %v2404
      %v2409 = vsel %vm388, %v2312, 0
      %v2412 = vsel %vm392, %v2405, 0
      %v2415 = vsel %vm392, %v2406, 0
      %v2418 = vsel %vm392, %v2407, 0
      %2420 = vmatpush.bf16.msra.mxu0 0
      %2421 = vmatpush.bf16.msra.mxu0 0
      %2422 = vmatpush.bf16.msra.mxu0 0
      %2423 = vmatpush.bf16.msra.mxu0 0
      %2424 = vmatpush.bf16.msra.mxu0 0
      %2425 = vmatpush.bf16.msra.mxu0 0
      %2426 = vmatpush.bf16.msra.mxu0 0
      %2427 = vmatpush.bf16.msra.mxu0 %v2412
      %2428 = vmatmul.bf16.gmra.mxu0 %v2409
      %v2429 = vpop.f32.mrf.mxu0
      %v2430 = vadd.f32 %v2359, %v2429
      %v2431 = vpop.f32.mrf.mxu0
      %2432 = vdwg.mxu0
      %2433 = vmatpush.bf16.msra.mxu0 0
      %2434 = vmatpush.bf16.msra.mxu0 0
      %2435 = vmatpush.bf16.msra.mxu0 0
      %2436 = vmatpush.bf16.msra.mxu0 0
      %2437 = vmatpush.bf16.msra.mxu0 0
      %2438 = vmatpush.bf16.msra.mxu0 0
      %2439 = vmatpush.bf16.msra.mxu0 0
      %2440 = vmatpush.bf16.msra.mxu0 %v2415
      %2441 = vmatmul.bf16.gmra.mxu0 %v2409
      %v2442 = vpop.f32.mrf.mxu0
      %v2443 = vadd.f32 %v2372, %v2442
      %v2444 = vpop.f32.mrf.mxu0
      %2445 = vdwg.mxu0
      %2446 = vmatpush.bf16.msra.mxu0 0
      %2447 = vmatpush.bf16.msra.mxu0 0
      %2448 = vmatpush.bf16.msra.mxu0 0
      %2449 = vmatpush.bf16.msra.mxu0 0
      %2450 = vmatpush.bf16.msra.mxu0 0
      %2451 = vmatpush.bf16.msra.mxu0 0
      %2452 = vmatpush.bf16.msra.mxu0 0
      %2453 = vmatpush.bf16.msra.mxu0 %v2418
      %2454 = vmatmul.bf16.gmra.mxu0 %v2409
      %v2455 = vpop.f32.mrf.mxu0
      %v2456 = vadd.f32 %v2385, %v2455
      %v2457 = vpop.f32.mrf.mxu0
      %2458 = vdwg.mxu0
      %s2459 = scalar_lea.vmem %s3, 22
      %v2460 = vld [vmem:[%s2459] sm:$0x3]
      %v2461 = vld [vmem:[#allocation2] sm:$0xff]
      %2463 = vst [vmem:[#allocation1] ss:$4 sm:$0xff] %v2461
      %v2464 = vld.sshfl [vmem:[#allocation1] sm:$0xff pattern:$0x73625140]
      %v2466 = vld.sshfl [vmem:[#allocation1 + $0x8] sm:$0xff pattern:$0x73625140]
      %v2468 = vld.sshfl [vmem:[#allocation1 + $0x10] sm:$0xff pattern:$0x73625140]
      %v2470 = vld.sshfl [vmem:[#allocation1 + $0x18] sm:$0xff pattern:$0x73625140]
      %2472 = vrot.lane.b32.xlu0 %v2464, 17
      %v2473 = vpop.permute.xlu0 %2472
      %2474 = vrot.lane.b32.xlu0 %v2466, 17
      %v2475 = vpop.permute.xlu0 %2474
      %2476 = vrot.lane.b32.xlu0 %v2468, 17
      %v2477 = vpop.permute.xlu0 %2476
      %2478 = vrot.lane.b32.xlu0 %v2470, 17
      %v2479 = vpop.permute.xlu0 %2478
      %v2480 = vsel %vm926, %v2473, %v2475
      %v2481 = vsel %vm926, %v2475, %v2477
      %v2482 = vsel %vm926, %v2477, %v2479
      %v2484 = vsel %vm388, %v2460, 0
      %v2487 = vsel %vm392, %v2480, 0
      %v2490 = vsel %vm392, %v2481, 0
      %v2493 = vsel %vm392, %v2482, 0
      %2495 = vmatpush.bf16.msra.mxu0 0
      %2496 = vmatpush.bf16.msra.mxu0 0
      %2497 = vmatpush.bf16.msra.mxu0 0
      %2498 = vmatpush.bf16.msra.mxu0 0
      %2499 = vmatpush.bf16.msra.mxu0 0
      %2500 = vmatpush.bf16.msra.mxu0 0
      %2501 = vmatpush.bf16.msra.mxu0 0
      %2502 = vmatpush.bf16.msra.mxu0 %v2487
      %2503 = vmatmul.bf16.gmra.mxu0 %v2484
      %v2504 = vpop.f32.mrf.mxu0
      %v2505 = vadd.f32 0.0, %v2504
      %v2506 = vpop.f32.mrf.mxu0
      %2507 = vdwg.mxu0
      %2508 = vmatpush.bf16.msra.mxu0 0
      %2509 = vmatpush.bf16.msra.mxu0 0
      %2510 = vmatpush.bf16.msra.mxu0 0
      %2511 = vmatpush.bf16.msra.mxu0 0
      %2512 = vmatpush.bf16.msra.mxu0 0
      %2513 = vmatpush.bf16.msra.mxu0 0
      %2514 = vmatpush.bf16.msra.mxu0 0
      %2515 = vmatpush.bf16.msra.mxu0 %v2490
      %2516 = vmatmul.bf16.gmra.mxu0 %v2484
      %v2517 = vpop.f32.mrf.mxu0
      %v2518 = vadd.f32 0.0, %v2517
      %v2519 = vpop.f32.mrf.mxu0
      %2520 = vdwg.mxu0
      %2521 = vmatpush.bf16.msra.mxu0 0
      %2522 = vmatpush.bf16.msra.mxu0 0
      %2523 = vmatpush.bf16.msra.mxu0 0
      %2524 = vmatpush.bf16.msra.mxu0 0
      %2525 = vmatpush.bf16.msra.mxu0 0
      %2526 = vmatpush.bf16.msra.mxu0 0
      %2527 = vmatpush.bf16.msra.mxu0 0
      %2528 = vmatpush.bf16.msra.mxu0 %v2493
      %2529 = vmatmul.bf16.gmra.mxu0 %v2484
      %v2530 = vpop.f32.mrf.mxu0
      %v2531 = vadd.f32 0.0, %v2530
      %v2532 = vpop.f32.mrf.mxu0
      %2533 = vdwg.mxu0
      %v2534 = vadd.f32 %v2430, %v2505
      %v2535 = vadd.f32 %v2443, %v2518
      %v2536 = vadd.f32 %v2456, %v2531
      %s2537 = scalar_lea.vmem %s3, 24
      %v2538 = vld [vmem:[%s2537] sm:$0x3]
      %v2539 = vld [vmem:[#allocation2] sm:$0xff]
      %2541 = vst [vmem:[#allocation1] ss:$4 sm:$0xff] %v2539
      %v2542 = vld.sshfl [vmem:[#allocation1] sm:$0xff pattern:$0x73625140]
      %v2544 = vld.sshfl [vmem:[#allocation1 + $0x8] sm:$0xff pattern:$0x73625140]
      %v2546 = vld.sshfl [vmem:[#allocation1 + $0x10] sm:$0xff pattern:$0x73625140]
      %v2548 = vld.sshfl [vmem:[#allocation1 + $0x18] sm:$0xff pattern:$0x73625140]
      %2550 = vrot.lane.b32.xlu0 %v2542, 1
      %v2551 = vpop.permute.xlu0 %2550
      %2552 = vrot.lane.b32.xlu0 %v2544, 1
      %v2553 = vpop.permute.xlu0 %2552
      %2554 = vrot.lane.b32.xlu0 %v2546, 1
      %v2555 = vpop.permute.xlu0 %2554
      %2556 = vrot.lane.b32.xlu0 %v2548, 1
      %v2557 = vpop.permute.xlu0 %2556
      %v2558 = vsel %vm1005, %v2551, %v2553
      %v2559 = vsel %vm1005, %v2553, %v2555
      %v2560 = vsel %vm1005, %v2555, %v2557
      %v2562 = vsel %vm388, %v2538, 0
      %v2565 = vsel %vm392, %v2558, 0
      %v2568 = vsel %vm392, %v2559, 0
      %v2571 = vsel %vm392, %v2560, 0
      %2573 = vmatpush.bf16.msra.mxu0 0
      %2574 = vmatpush.bf16.msra.mxu0 0
      %2575 = vmatpush.bf16.msra.mxu0 0
      %2576 = vmatpush.bf16.msra.mxu0 0
      %2577 = vmatpush.bf16.msra.mxu0 0
      %2578 = vmatpush.bf16.msra.mxu0 0
      %2579 = vmatpush.bf16.msra.mxu0 0
      %2580 = vmatpush.bf16.msra.mxu0 %v2565
      %2581 = vmatmul.bf16.gmra.mxu0 %v2562
      %v2582 = vpop.f32.mrf.mxu0
      %v2583 = vadd.f32 0.0, %v2582
      %v2584 = vpop.f32.mrf.mxu0
      %2585 = vdwg.mxu0
      %2586 = vmatpush.bf16.msra.mxu0 0
      %2587 = vmatpush.bf16.msra.mxu0 0
      %2588 = vmatpush.bf16.msra.mxu0 0
      %2589 = vmatpush.bf16.msra.mxu0 0
      %2590 = vmatpush.bf16.msra.mxu0 0
      %2591 = vmatpush.bf16.msra.mxu0 0
      %2592 = vmatpush.bf16.msra.mxu0 0
      %2593 = vmatpush.bf16.msra.mxu0 %v2568
      %2594 = vmatmul.bf16.gmra.mxu0 %v2562
      %v2595 = vpop.f32.mrf.mxu0
      %v2596 = vadd.f32 0.0, %v2595
      %v2597 = vpop.f32.mrf.mxu0
      %2598 = vdwg.mxu0
      %2599 = vmatpush.bf16.msra.mxu0 0
      %2600 = vmatpush.bf16.msra.mxu0 0
      %2601 = vmatpush.bf16.msra.mxu0 0
      %2602 = vmatpush.bf16.msra.mxu0 0
      %2603 = vmatpush.bf16.msra.mxu0 0
      %2604 = vmatpush.bf16.msra.mxu0 0
      %2605 = vmatpush.bf16.msra.mxu0 0
      %2606 = vmatpush.bf16.msra.mxu0 %v2571
      %2607 = vmatmul.bf16.gmra.mxu0 %v2562
      %v2608 = vpop.f32.mrf.mxu0
      %v2609 = vadd.f32 0.0, %v2608
      %v2610 = vpop.f32.mrf.mxu0
      %2611 = vdwg.mxu0
      %v2612 = vadd.f32 %v2534, %v2583
      %v2613 = vadd.f32 %v2535, %v2596
      %v2614 = vadd.f32 %v2536, %v2609
      %s2615 = scalar_lea.vmem %s3, 26
      %v2616 = vld [vmem:[%s2615] sm:$0x3]
      %v2617 = vld [vmem:[#allocation2 + $0x2] sm:$0x3f]
      %2619 = vst [vmem:[#allocation1] ss:$4 sm:$0xff] %v2617
      %v2620 = vld.sshfl [vmem:[#allocation1] sm:$0xff pattern:$0x73625140]
      %v2621 = vld.sshfl [vmem:[#allocation1 + $0x8] sm:$0xff pattern:$0x73625140]
      %v2622 = vld.sshfl [vmem:[#allocation1 + $0x10] sm:$0xff pattern:$0x73625140]
      %v2624 = vsel %vm388, %v2616, 0
      %v2626 = vsel %vm392, %v2620, 0
      %v2628 = vsel %vm392, %v2621, 0
      %v2630 = vsel %vm392, %v2622, 0
      %2632 = vmatpush.bf16.msra.mxu0 0
      %2633 = vmatpush.bf16.msra.mxu0 0
      %2634 = vmatpush.bf16.msra.mxu0 0
      %2635 = vmatpush.bf16.msra.mxu0 0
      %2636 = vmatpush.bf16.msra.mxu0 0
      %2637 = vmatpush.bf16.msra.mxu0 0
      %2638 = vmatpush.bf16.msra.mxu0 0
      %2639 = vmatpush.bf16.msra.mxu0 %v2626
      %2640 = vmatmul.bf16.gmra.mxu0 %v2624
      %v2641 = vpop.f32.mrf.mxu0
      %v2642 = vadd.f32 0.0, %v2641
      %v2643 = vpop.f32.mrf.mxu0
      %2644 = vdwg.mxu0
      %2645 = vmatpush.bf16.msra.mxu0 0
      %2646 = vmatpush.bf16.msra.mxu0 0
      %2647 = vmatpush.bf16.msra.mxu0 0
      %2648 = vmatpush.bf16.msra.mxu0 0
      %2649 = vmatpush.bf16.msra.mxu0 0
      %2650 = vmatpush.bf16.msra.mxu0 0
      %2651 = vmatpush.bf16.msra.mxu0 0
      %2652 = vmatpush.bf16.msra.mxu0 %v2628
      %2653 = vmatmul.bf16.gmra.mxu0 %v2624
      %v2654 = vpop.f32.mrf.mxu0
      %v2655 = vadd.f32 0.0, %v2654
      %v2656 = vpop.f32.mrf.mxu0
      %2657 = vdwg.mxu0
      %2658 = vmatpush.bf16.msra.mxu0 0
      %2659 = vmatpush.bf16.msra.mxu0 0
      %2660 = vmatpush.bf16.msra.mxu0 0
      %2661 = vmatpush.bf16.msra.mxu0 0
      %2662 = vmatpush.bf16.msra.mxu0 0
      %2663 = vmatpush.bf16.msra.mxu0 0
      %2664 = vmatpush.bf16.msra.mxu0 0
      %2665 = vmatpush.bf16.msra.mxu0 %v2630
      %2666 = vmatmul.bf16.gmra.mxu0 %v2624
      %v2667 = vpop.f32.mrf.mxu0
      %v2668 = vadd.f32 0.0, %v2667
      %v2669 = vpop.f32.mrf.mxu0
      %2670 = vdwg.mxu0
      %v2671 = vadd.f32 %v2612, %v2642
      %v2672 = vadd.f32 %v2613, %v2655
      %v2673 = vadd.f32 %v2614, %v2668
      %s2674 = scalar_lea.vmem %s3, 28
      %v2675 = vld [vmem:[%s2674] sm:$0x3]
      %v2676 = vld [vmem:[#allocation2 + $0x2] sm:$0x3f]
      %2678 = vst [vmem:[#allocation1] ss:$4 sm:$0xff] %v2676
      %v2679 = vld.sshfl [vmem:[#allocation1] sm:$0xff pattern:$0x73625140]
      %v2681 = vld.sshfl [vmem:[#allocation1 + $0x8] sm:$0xff pattern:$0x73625140]
      %v2683 = vld.sshfl [vmem:[#allocation1 + $0x10] sm:$0xff pattern:$0x73625140]
      %2685 = vrot.lane.b32.xlu0 %v2679, 127
      %v2686 = vpop.permute.xlu0 %2685
      %2687 = vrot.lane.b32.xlu0 %v2681, 127
      %v2688 = vpop.permute.xlu0 %2687
      %2689 = vrot.lane.b32.xlu0 %v2683, 127
      %v2690 = vpop.permute.xlu0 %2689
      %v2691 = vsel %vm1139, %v2686, %v2688
      %v2692 = vsel %vm1139, %v2688, %v2690
      %v2694 = vsel %vm388, %v2675, 0
      %v2697 = vsel %vm392, %v2691, 0
      %v2700 = vsel %vm392, %v2692, 0
      %v2703 = vsel %vm392, %v2690, 0
      %2705 = vmatpush.bf16.msra.mxu0 0
      %2706 = vmatpush.bf16.msra.mxu0 0
      %2707 = vmatpush.bf16.msra.mxu0 0
      %2708 = vmatpush.bf16.msra.mxu0 0
      %2709 = vmatpush.bf16.msra.mxu0 0
      %2710 = vmatpush.bf16.msra.mxu0 0
      %2711 = vmatpush.bf16.msra.mxu0 0
      %2712 = vmatpush.bf16.msra.mxu0 %v2697
      %2713 = vmatmul.bf16.gmra.mxu0 %v2694
      %v2714 = vpop.f32.mrf.mxu0
      %v2715 = vadd.f32 0.0, %v2714
      %v2716 = vpop.f32.mrf.mxu0
      %2717 = vdwg.mxu0
      %2718 = vmatpush.bf16.msra.mxu0 0
      %2719 = vmatpush.bf16.msra.mxu0 0
      %2720 = vmatpush.bf16.msra.mxu0 0
      %2721 = vmatpush.bf16.msra.mxu0 0
      %2722 = vmatpush.bf16.msra.mxu0 0
      %2723 = vmatpush.bf16.msra.mxu0 0
      %2724 = vmatpush.bf16.msra.mxu0 0
      %2725 = vmatpush.bf16.msra.mxu0 %v2700
      %2726 = vmatmul.bf16.gmra.mxu0 %v2694
      %v2727 = vpop.f32.mrf.mxu0
      %v2728 = vadd.f32 0.0, %v2727
      %v2729 = vpop.f32.mrf.mxu0
      %2730 = vdwg.mxu0
      %2731 = vmatpush.bf16.msra.mxu0 0
      %2732 = vmatpush.bf16.msra.mxu0 0
      %2733 = vmatpush.bf16.msra.mxu0 0
      %2734 = vmatpush.bf16.msra.mxu0 0
      %2735 = vmatpush.bf16.msra.mxu0 0
      %2736 = vmatpush.bf16.msra.mxu0 0
      %2737 = vmatpush.bf16.msra.mxu0 0
      %2738 = vmatpush.bf16.msra.mxu0 %v2703
      %2739 = vmatmul.bf16.gmra.mxu0 %v2694
      %v2740 = vpop.f32.mrf.mxu0
      %v2741 = vadd.f32 0.0, %v2740
      %v2742 = vpop.f32.mrf.mxu0
      %2743 = vdwg.mxu0
      %v2744 = vadd.f32 %v2671, %v2715
      %v2745 = vadd.f32 %v2672, %v2728
      %v2746 = vadd.f32 %v2673, %v2741
      %s2747 = scalar_lea.vmem %s3, 30
      %v2748 = vld [vmem:[%s2747] sm:$0x3]
      %v2749 = vld [vmem:[#allocation2 + $0x2] sm:$0x3f]
      %2751 = vst [vmem:[#allocation1] ss:$4 sm:$0xff] %v2749
      %v2752 = vld.sshfl [vmem:[#allocation1] sm:$0xff pattern:$0x73625140]
      %v2754 = vld.sshfl [vmem:[#allocation1 + $0x8] sm:$0xff pattern:$0x73625140]
      %v2756 = vld.sshfl [vmem:[#allocation1 + $0x10] sm:$0xff pattern:$0x73625140]
      %2758 = vrot.lane.b32.xlu0 %v2752, 111
      %v2759 = vpop.permute.xlu0 %2758
      %2760 = vrot.lane.b32.xlu0 %v2754, 111
      %v2761 = vpop.permute.xlu0 %2760
      %2762 = vrot.lane.b32.xlu0 %v2756, 111
      %v2763 = vpop.permute.xlu0 %2762
      %v2764 = vsel %vm1213, %v2759, %v2761
      %v2765 = vsel %vm1213, %v2761, %v2763
      %v2767 = vsel %vm388, %v2748, 0
      %v2770 = vsel %vm392, %v2764, 0
      %v2773 = vsel %vm392, %v2765, 0
      %v2776 = vsel %vm392, %v2763, 0
      %2778 = vmatpush.bf16.msra.mxu0 0
      %2779 = vmatpush.bf16.msra.mxu0 0
      %2780 = vmatpush.bf16.msra.mxu0 0
      %2781 = vmatpush.bf16.msra.mxu0 0
      %2782 = vmatpush.bf16.msra.mxu0 0
      %2783 = vmatpush.bf16.msra.mxu0 0
      %2784 = vmatpush.bf16.msra.mxu0 0
      %2785 = vmatpush.bf16.msra.mxu0 %v2770
      %2786 = vmatmul.bf16.gmra.mxu0 %v2767
      %v2787 = vpop.f32.mrf.mxu0
      %v2788 = vadd.f32 0.0, %v2787
      %v2789 = vpop.f32.mrf.mxu0
      %2790 = vdwg.mxu0
      %2791 = vmatpush.bf16.msra.mxu0 0
      %2792 = vmatpush.bf16.msra.mxu0 0
      %2793 = vmatpush.bf16.msra.mxu0 0
      %2794 = vmatpush.bf16.msra.mxu0 0
      %2795 = vmatpush.bf16.msra.mxu0 0
      %2796 = vmatpush.bf16.msra.mxu0 0
      %2797 = vmatpush.bf16.msra.mxu0 0
      %2798 = vmatpush.bf16.msra.mxu0 %v2773
      %2799 = vmatmul.bf16.gmra.mxu0 %v2767
      %v2800 = vpop.f32.mrf.mxu0
      %v2801 = vadd.f32 0.0, %v2800
      %v2802 = vpop.f32.mrf.mxu0
      %2803 = vdwg.mxu0
      %2804 = vmatpush.bf16.msra.mxu0 0
      %2805 = vmatpush.bf16.msra.mxu0 0
      %2806 = vmatpush.bf16.msra.mxu0 0
      %2807 = vmatpush.bf16.msra.mxu0 0
      %2808 = vmatpush.bf16.msra.mxu0 0
      %2809 = vmatpush.bf16.msra.mxu0 0
      %2810 = vmatpush.bf16.msra.mxu0 0
      %2811 = vmatpush.bf16.msra.mxu0 %v2776
      %2812 = vmatmul.bf16.gmra.mxu0 %v2767
      %v2813 = vpop.f32.mrf.mxu0
      %v2814 = vadd.f32 0.0, %v2813
      %v2815 = vpop.f32.mrf.mxu0
      %2816 = vdwg.mxu0
      %v2817 = vadd.f32 %v2744, %v2788
      %v2818 = vadd.f32 %v2745, %v2801
      %v2819 = vadd.f32 %v2746, %v2814
      %s2820 = scalar_lea.vmem %s3, 32
      %v2821 = vld [vmem:[%s2820] sm:$0x3]
      %v2822 = vld [vmem:[#allocation2 + $0x2] sm:$0x3f]
      %2824 = vst [vmem:[#allocation1] ss:$4 sm:$0xff] %v2822
      %v2825 = vld.sshfl [vmem:[#allocation1] sm:$0xff pattern:$0x73625140]
      %v2827 = vld.sshfl [vmem:[#allocation1 + $0x8] sm:$0xff pattern:$0x73625140]
      %v2829 = vld.sshfl [vmem:[#allocation1 + $0x10] sm:$0xff pattern:$0x73625140]
      %2831 = vrot.lane.b32.xlu0 %v2825, 110
      %v2832 = vpop.permute.xlu0 %2831
      %2833 = vrot.lane.b32.xlu0 %v2827, 110
      %v2834 = vpop.permute.xlu0 %2833
      %2835 = vrot.lane.b32.xlu0 %v2829, 110
      %v2836 = vpop.permute.xlu0 %2835
      %v2837 = vsel %vm1287, %v2832, %v2834
      %v2838 = vsel %vm1287, %v2834, %v2836
      %v2840 = vsel %vm388, %v2821, 0
      %v2843 = vsel %vm392, %v2837, 0
      %v2846 = vsel %vm392, %v2838, 0
      %v2849 = vsel %vm392, %v2836, 0
      %2851 = vmatpush.bf16.msra.mxu0 0
      %2852 = vmatpush.bf16.msra.mxu0 0
      %2853 = vmatpush.bf16.msra.mxu0 0
      %2854 = vmatpush.bf16.msra.mxu0 0
      %2855 = vmatpush.bf16.msra.mxu0 0
      %2856 = vmatpush.bf16.msra.mxu0 0
      %2857 = vmatpush.bf16.msra.mxu0 0
      %2858 = vmatpush.bf16.msra.mxu0 %v2843
      %2859 = vmatmul.bf16.gmra.mxu0 %v2840
      %v2860 = vpop.f32.mrf.mxu0
      %v2861 = vadd.f32 0.0, %v2860
      %v2862 = vpop.f32.mrf.mxu0
      %2863 = vdwg.mxu0
      %2864 = vmatpush.bf16.msra.mxu0 0
      %2865 = vmatpush.bf16.msra.mxu0 0
      %2866 = vmatpush.bf16.msra.mxu0 0
      %2867 = vmatpush.bf16.msra.mxu0 0
      %2868 = vmatpush.bf16.msra.mxu0 0
      %2869 = vmatpush.bf16.msra.mxu0 0
      %2870 = vmatpush.bf16.msra.mxu0 0
      %2871 = vmatpush.bf16.msra.mxu0 %v2846
      %2872 = vmatmul.bf16.gmra.mxu0 %v2840
      %v2873 = vpop.f32.mrf.mxu0
      %v2874 = vadd.f32 0.0, %v2873
      %v2875 = vpop.f32.mrf.mxu0
      %2876 = vdwg.mxu0
      %2877 = vmatpush.bf16.msra.mxu0 0
      %2878 = vmatpush.bf16.msra.mxu0 0
      %2879 = vmatpush.bf16.msra.mxu0 0
      %2880 = vmatpush.bf16.msra.mxu0 0
      %2881 = vmatpush.bf16.msra.mxu0 0
      %2882 = vmatpush.bf16.msra.mxu0 0
      %2883 = vmatpush.bf16.msra.mxu0 0
      %2884 = vmatpush.bf16.msra.mxu0 %v2849
      %2885 = vmatmul.bf16.gmra.mxu0 %v2840
      %v2886 = vpop.f32.mrf.mxu0
      %v2887 = vadd.f32 0.0, %v2886
      %v2888 = vpop.f32.mrf.mxu0
      %2889 = vdwg.mxu0
      %v2890 = vadd.f32 %v2817, %v2861
      %v2891 = vadd.f32 %v2818, %v2874
      %v2892 = vadd.f32 %v2819, %v2887
      %s2893 = scalar_lea.vmem %s3, 34
      %v2894 = vld [vmem:[%s2893] sm:$0x3]
      %v2895 = vld [vmem:[#allocation2 + $0x2] sm:$0x3f]
      %2897 = vst [vmem:[#allocation1] ss:$4 sm:$0xff] %v2895
      %v2898 = vld.sshfl [vmem:[#allocation1] sm:$0xff pattern:$0x73625140]
      %v2900 = vld.sshfl [vmem:[#allocation1 + $0x8] sm:$0xff pattern:$0x73625140]
      %v2902 = vld.sshfl [vmem:[#allocation1 + $0x10] sm:$0xff pattern:$0x73625140]
      %2904 = vrot.lane.b32.xlu0 %v2898, 109
      %v2905 = vpop.permute.xlu0 %2904
      %2906 = vrot.lane.b32.xlu0 %v2900, 109
      %v2907 = vpop.permute.xlu0 %2906
      %2908 = vrot.lane.b32.xlu0 %v2902, 109
      %v2909 = vpop.permute.xlu0 %2908
      %v2910 = vsel %vm1361, %v2905, %v2907
      %v2911 = vsel %vm1361, %v2907, %v2909
      %v2913 = vsel %vm388, %v2894, 0
      %v2916 = vsel %vm392, %v2910, 0
      %v2919 = vsel %vm392, %v2911, 0
      %v2922 = vsel %vm392, %v2909, 0
      %2924 = vmatpush.bf16.msra.mxu0 0
      %2925 = vmatpush.bf16.msra.mxu0 0
      %2926 = vmatpush.bf16.msra.mxu0 0
      %2927 = vmatpush.bf16.msra.mxu0 0
      %2928 = vmatpush.bf16.msra.mxu0 0
      %2929 = vmatpush.bf16.msra.mxu0 0
      %2930 = vmatpush.bf16.msra.mxu0 0
      %2931 = vmatpush.bf16.msra.mxu0 %v2916
      %2932 = vmatmul.bf16.gmra.mxu0 %v2913
      %v2933 = vpop.f32.mrf.mxu0
      %v2934 = vadd.f32 0.0, %v2933
      %v2935 = vpop.f32.mrf.mxu0
      %2936 = vdwg.mxu0
      %2937 = vmatpush.bf16.msra.mxu0 0
      %2938 = vmatpush.bf16.msra.mxu0 0
      %2939 = vmatpush.bf16.msra.mxu0 0
      %2940 = vmatpush.bf16.msra.mxu0 0
      %2941 = vmatpush.bf16.msra.mxu0 0
      %2942 = vmatpush.bf16.msra.mxu0 0
      %2943 = vmatpush.bf16.msra.mxu0 0
      %2944 = vmatpush.bf16.msra.mxu0 %v2919
      %2945 = vmatmul.bf16.gmra.mxu0 %v2913
      %v2946 = vpop.f32.mrf.mxu0
      %v2947 = vadd.f32 0.0, %v2946
      %v2948 = vpop.f32.mrf.mxu0
      %2949 = vdwg.mxu0
      %2950 = vmatpush.bf16.msra.mxu0 0
      %2951 = vmatpush.bf16.msra.mxu0 0
      %2952 = vmatpush.bf16.msra.mxu0 0
      %2953 = vmatpush.bf16.msra.mxu0 0
      %2954 = vmatpush.bf16.msra.mxu0 0
      %2955 = vmatpush.bf16.msra.mxu0 0
      %2956 = vmatpush.bf16.msra.mxu0 0
      %2957 = vmatpush.bf16.msra.mxu0 %v2922
      %2958 = vmatmul.bf16.gmra.mxu0 %v2913
      %v2959 = vpop.f32.mrf.mxu0
      %v2960 = vadd.f32 0.0, %v2959
      %v2961 = vpop.f32.mrf.mxu0
      %2962 = vdwg.mxu0
      %v2963 = vadd.f32 %v2890, %v2934
      %v2964 = vadd.f32 %v2891, %v2947
      %v2965 = vadd.f32 %v2892, %v2960
      %2967 = vset.pattern.permute.xlu0 0
      %2968 = vperm.xlu0 %2967, %v2310
      %v2969 = vpop.permute.xlu0 %2968
      %v2971 = vadd.f32 %v2963, %v2969
      %v2972 = vadd.f32 %v2964, %v2969
      %v2973 = vadd.f32 %v2965, %v2969
      %v2974 = vsub.f32 0.0, %v2971
      %v2975 = vsub.f32 0.0, %v2972
      %v2976 = vsub.f32 0.0, %v2973
      %v2977 = vmul.f32 %v2974, 1.442695
      %v2978 = vpow.pop %v2977
      %v2979 = vmul.f32 %v2975, 1.442695
      %v2980 = vpow.pop %v2979
      %v2981 = vmul.f32 %v2976, 1.442695
      %v2982 = vpow.pop %v2981
      %v2983 = vadd.f32 %v2978, 1.0
      %v2984 = vadd.f32 %v2980, 1.0
      %v2985 = vadd.f32 %v2982, 1.0
      %v2986 = vrcp.pop %v2983
      %v2987 = vmul.f32 %v2983, %v2986
      %v2988 = vsub.f32 1.0, %v2987
      %v2989 = vmul.f32 %v2986, %v2988
      %v2990 = vadd.f32 %v2986, %v2989
      %vm2991 = vweird.f32 %v2983
      %vm2992 = vweird.f32 %v2986
      %vm2993 = vmor %vm2991, %vm2992
      %v2994 = vsel %vm2993, %v2986, %v2990
      %v2995 = vand.u32 2147483647, %v2983
      %vm2996 = vcmp.eq.f32.partialorder %v2995, 8.507059e+37
      %v2997 = vand.u32 %v2983, 2147483648
      %v2998 = vor.u32 1.1754944e-38, %v2997
      %v2999 = vsel %vm2996, %v2998, %v2994
      %v3000 = vmul.f32 1.0, %v2999
      %v3001 = vrcp.pop %v2984
      %v3002 = vmul.f32 %v2984, %v3001
      %v3003 = vsub.f32 1.0, %v3002
      %v3004 = vmul.f32 %v3001, %v3003
      %v3005 = vadd.f32 %v3001, %v3004
      %vm3006 = vweird.f32 %v2984
      %vm3007 = vweird.f32 %v3001
      %vm3008 = vmor %vm3006, %vm3007
      %v3009 = vsel %vm3008, %v3001, %v3005
      %v3010 = vand.u32 2147483647, %v2984
      %vm3011 = vcmp.eq.f32.partialorder %v3010, 8.507059e+37
      %v3012 = vand.u32 %v2984, 2147483648
      %v3013 = vor.u32 1.1754944e-38, %v3012
      %v3014 = vsel %vm3011, %v3013, %v3009
      %v3015 = vmul.f32 1.0, %v3014
      %v3016 = vrcp.pop %v2985
      %v3017 = vmul.f32 %v2985, %v3016
      %v3018 = vsub.f32 1.0, %v3017
      %v3019 = vmul.f32 %v3016, %v3018
      %v3020 = vadd.f32 %v3016, %v3019
      %vm3021 = vweird.f32 %v2985
      %vm3022 = vweird.f32 %v3016
      %vm3023 = vmor %vm3021, %vm3022
      %v3024 = vsel %vm3023, %v3016, %v3020
      %v3025 = vand.u32 2147483647, %v2985
      %vm3026 = vcmp.eq.f32.partialorder %v3025, 8.507059e+37
      %v3027 = vand.u32 %v2985, 2147483648
      %v3028 = vor.u32 1.1754944e-38, %v3027
      %v3029 = vsel %vm3026, %v3028, %v3024
      %v3030 = vmul.f32 1.0, %v3029
      %v3031 = vmul.f32 %v2971, %v3000
      %v3032 = vmul.f32 %v2972, %v3015
      %v3033 = vmul.f32 %v2973, %v3030
      %v3034 = vmul.f32 %v3031, %v724
      %v3035 = vmul.f32 %v3032, %v725
      %v3036 = vmul.f32 %v3033, %v726
      %v3037 = vpack.c.bf16 %v3035, %v3034
      %v3038 = vpack.c.bf16 %v3036, %v3036
      %v3041 = vrot.slane %v3037, 2
      %v3042 = vrot.slane %v3038, 4
      %v3043 = vrot.slane %v3038, 6
      %v3046 = vsel %vm392, %v3037, %v3041
      %v3049 = vsel %vm743, %v3042, %v3043
      %v3050 = vsel %vm747, %v3046, %v3049
      %3052 = vst.msk [vmem:[#allocation2 + $0x2] sm:$0x3f] %vm753, %v3050
      %s3053 = scalar_lea.vmem %s6, 4
      %v3054 = vld [vmem:[%s3053] sm:$0xf]
      %s3055 = scalar_lea.vmem %s5, 18
      %v3056 = vld [vmem:[%s3055] sm:$0x3]
      %v3057 = vld [vmem:[#allocation2] sm:$0xff]
      %s3058 = scalar_lea.vmem %s5, 20
      %v3059 = vld [vmem:[%s3058] sm:$0x3]
      %3061 = vst [vmem:[#allocation1] ss:$4 sm:$0xff] %v3057
      %v3062 = vld.sshfl [vmem:[#allocation1] sm:$0xff pattern:$0x73625140]
      %v3064 = vld.sshfl [vmem:[#allocation1 + $0x8] sm:$0xff pattern:$0x73625140]
      %v3066 = vld.sshfl [vmem:[#allocation1 + $0x10] sm:$0xff pattern:$0x73625140]
      %v3068 = vld.sshfl [vmem:[#allocation1 + $0x18] sm:$0xff pattern:$0x73625140]
      %3070 = vrot.lane.b32.xlu0 %v3062, 18
      %v3071 = vpop.permute.xlu0 %3070
      %3072 = vrot.lane.b32.xlu0 %v3064, 18
      %v3073 = vpop.permute.xlu0 %3072
      %3074 = vrot.lane.b32.xlu0 %v3066, 18
      %v3075 = vpop.permute.xlu0 %3074
      %3076 = vrot.lane.b32.xlu0 %v3068, 18
      %v3077 = vpop.permute.xlu0 %3076
      %v3078 = vsel %vm778, %v3071, %v3073
      %v3079 = vsel %vm778, %v3073, %v3075
      %v3080 = vsel %vm778, %v3075, %v3077
      %v3082 = vsel %vm388, %v3059, 0
      %v3085 = vsel %vm392, %v3078, 0
      %v3088 = vsel %vm392, %v3079, 0
      %v3091 = vsel %vm392, %v3080, 0
      %3093 = vmatpush.bf16.msra.mxu0 0
      %3094 = vmatpush.bf16.msra.mxu0 0
      %3095 = vmatpush.bf16.msra.mxu0 0
      %3096 = vmatpush.bf16.msra.mxu0 0
      %3097 = vmatpush.bf16.msra.mxu0 0
      %3098 = vmatpush.bf16.msra.mxu0 0
      %3099 = vmatpush.bf16.msra.mxu0 0
      %3100 = vmatpush.bf16.msra.mxu0 %v3085
      %3101 = vmatmul.bf16.gmra.mxu0 %v3082
      %v3102 = vpop.f32.mrf.mxu0
      %v3103 = vadd.f32 0.0, %v3102
      %v3104 = vpop.f32.mrf.mxu0
      %3105 = vdwg.mxu0
      %3106 = vmatpush.bf16.msra.mxu0 0
      %3107 = vmatpush.bf16.msra.mxu0 0
      %3108 = vmatpush.bf16.msra.mxu0 0
      %3109 = vmatpush.bf16.msra.mxu0 0
      %3110 = vmatpush.bf16.msra.mxu0 0
      %3111 = vmatpush.bf16.msra.mxu0 0
      %3112 = vmatpush.bf16.msra.mxu0 0
      %3113 = vmatpush.bf16.msra.mxu0 %v3088
      %3114 = vmatmul.bf16.gmra.mxu0 %v3082
      %v3115 = vpop.f32.mrf.mxu0
      %v3116 = vadd.f32 0.0, %v3115
      %v3117 = vpop.f32.mrf.mxu0
      %3118 = vdwg.mxu0
      %3119 = vmatpush.bf16.msra.mxu0 0
      %3120 = vmatpush.bf16.msra.mxu0 0
      %3121 = vmatpush.bf16.msra.mxu0 0
      %3122 = vmatpush.bf16.msra.mxu0 0
      %3123 = vmatpush.bf16.msra.mxu0 0
      %3124 = vmatpush.bf16.msra.mxu0 0
      %3125 = vmatpush.bf16.msra.mxu0 0
      %3126 = vmatpush.bf16.msra.mxu0 %v3091
      %3127 = vmatmul.bf16.gmra.mxu0 %v3082
      %v3128 = vpop.f32.mrf.mxu0
      %v3129 = vadd.f32 0.0, %v3128
      %v3130 = vpop.f32.mrf.mxu0
      %3131 = vdwg.mxu0
      %3132 = vst [vmem:[#allocation1] ss:$4 sm:$0xff] %v3057
      %v3133 = vld.sshfl [vmem:[#allocation1] sm:$0xff pattern:$0x73625140]
      %v3135 = vld.sshfl [vmem:[#allocation1 + $0x8] sm:$0xff pattern:$0x73625140]
      %v3137 = vld.sshfl [vmem:[#allocation1 + $0x10] sm:$0xff pattern:$0x73625140]
      %v3139 = vld.sshfl [vmem:[#allocation1 + $0x18] sm:$0xff pattern:$0x73625140]
      %3141 = vrot.lane.b32.xlu0 %v3133, 19
      %v3142 = vpop.permute.xlu0 %3141
      %3143 = vrot.lane.b32.xlu0 %v3135, 19
      %v3144 = vpop.permute.xlu0 %3143
      %3145 = vrot.lane.b32.xlu0 %v3137, 19
      %v3146 = vpop.permute.xlu0 %3145
      %3147 = vrot.lane.b32.xlu0 %v3139, 19
      %v3148 = vpop.permute.xlu0 %3147
      %v3149 = vsel %vm850, %v3142, %v3144
      %v3150 = vsel %vm850, %v3144, %v3146
      %v3151 = vsel %vm850, %v3146, %v3148
      %v3153 = vsel %vm388, %v3056, 0
      %v3156 = vsel %vm392, %v3149, 0
      %v3159 = vsel %vm392, %v3150, 0
      %v3162 = vsel %vm392, %v3151, 0
      %3164 = vmatpush.bf16.msra.mxu0 0
      %3165 = vmatpush.bf16.msra.mxu0 0
      %3166 = vmatpush.bf16.msra.mxu0 0
      %3167 = vmatpush.bf16.msra.mxu0 0
      %3168 = vmatpush.bf16.msra.mxu0 0
      %3169 = vmatpush.bf16.msra.mxu0 0
      %3170 = vmatpush.bf16.msra.mxu0 0
      %3171 = vmatpush.bf16.msra.mxu0 %v3156
      %3172 = vmatmul.bf16.gmra.mxu0 %v3153
      %v3173 = vpop.f32.mrf.mxu0
      %v3174 = vadd.f32 %v3103, %v3173
      %v3175 = vpop.f32.mrf.mxu0
      %3176 = vdwg.mxu0
      %3177 = vmatpush.bf16.msra.mxu0 0
      %3178 = vmatpush.bf16.msra.mxu0 0
      %3179 = vmatpush.bf16.msra.mxu0 0
      %3180 = vmatpush.bf16.msra.mxu0 0
      %3181 = vmatpush.bf16.msra.mxu0 0
      %3182 = vmatpush.bf16.msra.mxu0 0
      %3183 = vmatpush.bf16.msra.mxu0 0
      %3184 = vmatpush.bf16.msra.mxu0 %v3159
      %3185 = vmatmul.bf16.gmra.mxu0 %v3153
      %v3186 = vpop.f32.mrf.mxu0
      %v3187 = vadd.f32 %v3116, %v3186
      %v3188 = vpop.f32.mrf.mxu0
      %3189 = vdwg.mxu0
      %3190 = vmatpush.bf16.msra.mxu0 0
      %3191 = vmatpush.bf16.msra.mxu0 0
      %3192 = vmatpush.bf16.msra.mxu0 0
      %3193 = vmatpush.bf16.msra.mxu0 0
      %3194 = vmatpush.bf16.msra.mxu0 0
      %3195 = vmatpush.bf16.msra.mxu0 0
      %3196 = vmatpush.bf16.msra.mxu0 0
      %3197 = vmatpush.bf16.msra.mxu0 %v3162
      %3198 = vmatmul.bf16.gmra.mxu0 %v3153
      %v3199 = vpop.f32.mrf.mxu0
      %v3200 = vadd.f32 %v3129, %v3199
      %v3201 = vpop.f32.mrf.mxu0
      %3202 = vdwg.mxu0
      %s3203 = scalar_lea.vmem %s5, 22
      %v3204 = vld [vmem:[%s3203] sm:$0x3]
      %v3205 = vld [vmem:[#allocation2] sm:$0xff]
      %3207 = vst [vmem:[#allocation1] ss:$4 sm:$0xff] %v3205
      %v3208 = vld.sshfl [vmem:[#allocation1] sm:$0xff pattern:$0x73625140]
      %v3210 = vld.sshfl [vmem:[#allocation1 + $0x8] sm:$0xff pattern:$0x73625140]
      %v3212 = vld.sshfl [vmem:[#allocation1 + $0x10] sm:$0xff pattern:$0x73625140]
      %v3214 = vld.sshfl [vmem:[#allocation1 + $0x18] sm:$0xff pattern:$0x73625140]
      %3216 = vrot.lane.b32.xlu0 %v3208, 17
      %v3217 = vpop.permute.xlu0 %3216
      %3218 = vrot.lane.b32.xlu0 %v3210, 17
      %v3219 = vpop.permute.xlu0 %3218
      %3220 = vrot.lane.b32.xlu0 %v3212, 17
      %v3221 = vpop.permute.xlu0 %3220
      %3222 = vrot.lane.b32.xlu0 %v3214, 17
      %v3223 = vpop.permute.xlu0 %3222
      %v3224 = vsel %vm926, %v3217, %v3219
      %v3225 = vsel %vm926, %v3219, %v3221
      %v3226 = vsel %vm926, %v3221, %v3223
      %v3228 = vsel %vm388, %v3204, 0
      %v3231 = vsel %vm392, %v3224, 0
      %v3234 = vsel %vm392, %v3225, 0
      %v3237 = vsel %vm392, %v3226, 0
      %3239 = vmatpush.bf16.msra.mxu0 0
      %3240 = vmatpush.bf16.msra.mxu0 0
      %3241 = vmatpush.bf16.msra.mxu0 0
      %3242 = vmatpush.bf16.msra.mxu0 0
      %3243 = vmatpush.bf16.msra.mxu0 0
      %3244 = vmatpush.bf16.msra.mxu0 0
      %3245 = vmatpush.bf16.msra.mxu0 0
      %3246 = vmatpush.bf16.msra.mxu0 %v3231
      %3247 = vmatmul.bf16.gmra.mxu0 %v3228
      %v3248 = vpop.f32.mrf.mxu0
      %v3249 = vadd.f32 0.0, %v3248
      %v3250 = vpop.f32.mrf.mxu0
      %3251 = vdwg.mxu0
      %3252 = vmatpush.bf16.msra.mxu0 0
      %3253 = vmatpush.bf16.msra.mxu0 0
      %3254 = vmatpush.bf16.msra.mxu0 0
      %3255 = vmatpush.bf16.msra.mxu0 0
      %3256 = vmatpush.bf16.msra.mxu0 0
      %3257 = vmatpush.bf16.msra.mxu0 0
      %3258 = vmatpush.bf16.msra.mxu0 0
      %3259 = vmatpush.bf16.msra.mxu0 %v3234
      %3260 = vmatmul.bf16.gmra.mxu0 %v3228
      %v3261 = vpop.f32.mrf.mxu0
      %v3262 = vadd.f32 0.0, %v3261
      %v3263 = vpop.f32.mrf.mxu0
      %3264 = vdwg.mxu0
      %3265 = vmatpush.bf16.msra.mxu0 0
      %3266 = vmatpush.bf16.msra.mxu0 0
      %3267 = vmatpush.bf16.msra.mxu0 0
      %3268 = vmatpush.bf16.msra.mxu0 0
      %3269 = vmatpush.bf16.msra.mxu0 0
      %3270 = vmatpush.bf16.msra.mxu0 0
      %3271 = vmatpush.bf16.msra.mxu0 0
      %3272 = vmatpush.bf16.msra.mxu0 %v3237
      %3273 = vmatmul.bf16.gmra.mxu0 %v3228
      %v3274 = vpop.f32.mrf.mxu0
      %v3275 = vadd.f32 0.0, %v3274
      %v3276 = vpop.f32.mrf.mxu0
      %3277 = vdwg.mxu0
      %v3278 = vadd.f32 %v3174, %v3249
      %v3279 = vadd.f32 %v3187, %v3262
      %v3280 = vadd.f32 %v3200, %v3275
      %s3281 = scalar_lea.vmem %s5, 24
      %v3282 = vld [vmem:[%s3281] sm:$0x3]
      %v3283 = vld [vmem:[#allocation2] sm:$0xff]
      %3285 = vst [vmem:[#allocation1] ss:$4 sm:$0xff] %v3283
      %v3286 = vld.sshfl [vmem:[#allocation1] sm:$0xff pattern:$0x73625140]
      %v3288 = vld.sshfl [vmem:[#allocation1 + $0x8] sm:$0xff pattern:$0x73625140]
      %v3290 = vld.sshfl [vmem:[#allocation1 + $0x10] sm:$0xff pattern:$0x73625140]
      %v3292 = vld.sshfl [vmem:[#allocation1 + $0x18] sm:$0xff pattern:$0x73625140]
      %3294 = vrot.lane.b32.xlu0 %v3286, 1
      %v3295 = vpop.permute.xlu0 %3294
      %3296 = vrot.lane.b32.xlu0 %v3288, 1
      %v3297 = vpop.permute.xlu0 %3296
      %3298 = vrot.lane.b32.xlu0 %v3290, 1
      %v3299 = vpop.permute.xlu0 %3298
      %3300 = vrot.lane.b32.xlu0 %v3292, 1
      %v3301 = vpop.permute.xlu0 %3300
      %v3302 = vsel %vm1005, %v3295, %v3297
      %v3303 = vsel %vm1005, %v3297, %v3299
      %v3304 = vsel %vm1005, %v3299, %v3301
      %v3306 = vsel %vm388, %v3282, 0
      %v3309 = vsel %vm392, %v3302, 0
      %v3312 = vsel %vm392, %v3303, 0
      %v3315 = vsel %vm392, %v3304, 0
      %3317 = vmatpush.bf16.msra.mxu0 0
      %3318 = vmatpush.bf16.msra.mxu0 0
      %3319 = vmatpush.bf16.msra.mxu0 0
      %3320 = vmatpush.bf16.msra.mxu0 0
      %3321 = vmatpush.bf16.msra.mxu0 0
      %3322 = vmatpush.bf16.msra.mxu0 0
      %3323 = vmatpush.bf16.msra.mxu0 0
      %3324 = vmatpush.bf16.msra.mxu0 %v3309
      %3325 = vmatmul.bf16.gmra.mxu0 %v3306
      %v3326 = vpop.f32.mrf.mxu0
      %v3327 = vadd.f32 0.0, %v3326
      %v3328 = vpop.f32.mrf.mxu0
      %3329 = vdwg.mxu0
      %3330 = vmatpush.bf16.msra.mxu0 0
      %3331 = vmatpush.bf16.msra.mxu0 0
      %3332 = vmatpush.bf16.msra.mxu0 0
      %3333 = vmatpush.bf16.msra.mxu0 0
      %3334 = vmatpush.bf16.msra.mxu0 0
      %3335 = vmatpush.bf16.msra.mxu0 0
      %3336 = vmatpush.bf16.msra.mxu0 0
      %3337 = vmatpush.bf16.msra.mxu0 %v3312
      %3338 = vmatmul.bf16.gmra.mxu0 %v3306
      %v3339 = vpop.f32.mrf.mxu0
      %v3340 = vadd.f32 0.0, %v3339
      %v3341 = vpop.f32.mrf.mxu0
      %3342 = vdwg.mxu0
      %3343 = vmatpush.bf16.msra.mxu0 0
      %3344 = vmatpush.bf16.msra.mxu0 0
      %3345 = vmatpush.bf16.msra.mxu0 0
      %3346 = vmatpush.bf16.msra.mxu0 0
      %3347 = vmatpush.bf16.msra.mxu0 0
      %3348 = vmatpush.bf16.msra.mxu0 0
      %3349 = vmatpush.bf16.msra.mxu0 0
      %3350 = vmatpush.bf16.msra.mxu0 %v3315
      %3351 = vmatmul.bf16.gmra.mxu0 %v3306
      %v3352 = vpop.f32.mrf.mxu0
      %v3353 = vadd.f32 0.0, %v3352
      %v3354 = vpop.f32.mrf.mxu0
      %3355 = vdwg.mxu0
      %v3356 = vadd.f32 %v3278, %v3327
      %v3357 = vadd.f32 %v3279, %v3340
      %v3358 = vadd.f32 %v3280, %v3353
      %s3359 = scalar_lea.vmem %s5, 26
      %v3360 = vld [vmem:[%s3359] sm:$0x3]
      %v3361 = vld [vmem:[#allocation2 + $0x2] sm:$0x3f]
      %3363 = vst [vmem:[#allocation1] ss:$4 sm:$0xff] %v3361
      %v3364 = vld.sshfl [vmem:[#allocation1] sm:$0xff pattern:$0x73625140]
      %v3365 = vld.sshfl [vmem:[#allocation1 + $0x8] sm:$0xff pattern:$0x73625140]
      %v3366 = vld.sshfl [vmem:[#allocation1 + $0x10] sm:$0xff pattern:$0x73625140]
      %v3368 = vsel %vm388, %v3360, 0
      %v3370 = vsel %vm392, %v3364, 0
      %v3372 = vsel %vm392, %v3365, 0
      %v3374 = vsel %vm392, %v3366, 0
      %3376 = vmatpush.bf16.msra.mxu0 0
      %3377 = vmatpush.bf16.msra.mxu0 0
      %3378 = vmatpush.bf16.msra.mxu0 0
      %3379 = vmatpush.bf16.msra.mxu0 0
      %3380 = vmatpush.bf16.msra.mxu0 0
      %3381 = vmatpush.bf16.msra.mxu0 0
      %3382 = vmatpush.bf16.msra.mxu0 0
      %3383 = vmatpush.bf16.msra.mxu0 %v3370
      %3384 = vmatmul.bf16.gmra.mxu0 %v3368
      %v3385 = vpop.f32.mrf.mxu0
      %v3386 = vadd.f32 0.0, %v3385
      %v3387 = vpop.f32.mrf.mxu0
      %3388 = vdwg.mxu0
      %3389 = vmatpush.bf16.msra.mxu0 0
      %3390 = vmatpush.bf16.msra.mxu0 0
      %3391 = vmatpush.bf16.msra.mxu0 0
      %3392 = vmatpush.bf16.msra.mxu0 0
      %3393 = vmatpush.bf16.msra.mxu0 0
      %3394 = vmatpush.bf16.msra.mxu0 0
      %3395 = vmatpush.bf16.msra.mxu0 0
      %3396 = vmatpush.bf16.msra.mxu0 %v3372
      %3397 = vmatmul.bf16.gmra.mxu0 %v3368
      %v3398 = vpop.f32.mrf.mxu0
      %v3399 = vadd.f32 0.0, %v3398
      %v3400 = vpop.f32.mrf.mxu0
      %3401 = vdwg.mxu0
      %3402 = vmatpush.bf16.msra.mxu0 0
      %3403 = vmatpush.bf16.msra.mxu0 0
      %3404 = vmatpush.bf16.msra.mxu0 0
      %3405 = vmatpush.bf16.msra.mxu0 0
      %3406 = vmatpush.bf16.msra.mxu0 0
      %3407 = vmatpush.bf16.msra.mxu0 0
      %3408 = vmatpush.bf16.msra.mxu0 0
      %3409 = vmatpush.bf16.msra.mxu0 %v3374
      %3410 = vmatmul.bf16.gmra.mxu0 %v3368
      %v3411 = vpop.f32.mrf.mxu0
      %v3412 = vadd.f32 0.0, %v3411
      %v3413 = vpop.f32.mrf.mxu0
      %3414 = vdwg.mxu0
      %v3415 = vadd.f32 %v3356, %v3386
      %v3416 = vadd.f32 %v3357, %v3399
      %v3417 = vadd.f32 %v3358, %v3412
      %s3418 = scalar_lea.vmem %s5, 28
      %v3419 = vld [vmem:[%s3418] sm:$0x3]
      %v3420 = vld [vmem:[#allocation2 + $0x2] sm:$0x3f]
      %3422 = vst [vmem:[#allocation1] ss:$4 sm:$0xff] %v3420
      %v3423 = vld.sshfl [vmem:[#allocation1] sm:$0xff pattern:$0x73625140]
      %v3425 = vld.sshfl [vmem:[#allocation1 + $0x8] sm:$0xff pattern:$0x73625140]
      %v3427 = vld.sshfl [vmem:[#allocation1 + $0x10] sm:$0xff pattern:$0x73625140]
      %3429 = vrot.lane.b32.xlu0 %v3423, 127
      %v3430 = vpop.permute.xlu0 %3429
      %3431 = vrot.lane.b32.xlu0 %v3425, 127
      %v3432 = vpop.permute.xlu0 %3431
      %3433 = vrot.lane.b32.xlu0 %v3427, 127
      %v3434 = vpop.permute.xlu0 %3433
      %v3435 = vsel %vm1139, %v3430, %v3432
      %v3436 = vsel %vm1139, %v3432, %v3434
      %v3438 = vsel %vm388, %v3419, 0
      %v3441 = vsel %vm392, %v3435, 0
      %v3444 = vsel %vm392, %v3436, 0
      %v3447 = vsel %vm392, %v3434, 0
      %3449 = vmatpush.bf16.msra.mxu0 0
      %3450 = vmatpush.bf16.msra.mxu0 0
      %3451 = vmatpush.bf16.msra.mxu0 0
      %3452 = vmatpush.bf16.msra.mxu0 0
      %3453 = vmatpush.bf16.msra.mxu0 0
      %3454 = vmatpush.bf16.msra.mxu0 0
      %3455 = vmatpush.bf16.msra.mxu0 0
      %3456 = vmatpush.bf16.msra.mxu0 %v3441
      %3457 = vmatmul.bf16.gmra.mxu0 %v3438
      %v3458 = vpop.f32.mrf.mxu0
      %v3459 = vadd.f32 0.0, %v3458
      %v3460 = vpop.f32.mrf.mxu0
      %3461 = vdwg.mxu0
      %3462 = vmatpush.bf16.msra.mxu0 0
      %3463 = vmatpush.bf16.msra.mxu0 0
      %3464 = vmatpush.bf16.msra.mxu0 0
      %3465 = vmatpush.bf16.msra.mxu0 0
      %3466 = vmatpush.bf16.msra.mxu0 0
      %3467 = vmatpush.bf16.msra.mxu0 0
      %3468 = vmatpush.bf16.msra.mxu0 0
      %3469 = vmatpush.bf16.msra.mxu0 %v3444
      %3470 = vmatmul.bf16.gmra.mxu0 %v3438
      %v3471 = vpop.f32.mrf.mxu0
      %v3472 = vadd.f32 0.0, %v3471
      %v3473 = vpop.f32.mrf.mxu0
      %3474 = vdwg.mxu0
      %3475 = vmatpush.bf16.msra.mxu0 0
      %3476 = vmatpush.bf16.msra.mxu0 0
      %3477 = vmatpush.bf16.msra.mxu0 0
      %3478 = vmatpush.bf16.msra.mxu0 0
      %3479 = vmatpush.bf16.msra.mxu0 0
      %3480 = vmatpush.bf16.msra.mxu0 0
      %3481 = vmatpush.bf16.msra.mxu0 0
      %3482 = vmatpush.bf16.msra.mxu0 %v3447
      %3483 = vmatmul.bf16.gmra.mxu0 %v3438
      %v3484 = vpop.f32.mrf.mxu0
      %v3485 = vadd.f32 0.0, %v3484
      %v3486 = vpop.f32.mrf.mxu0
      %3487 = vdwg.mxu0
      %v3488 = vadd.f32 %v3415, %v3459
      %v3489 = vadd.f32 %v3416, %v3472
      %v3490 = vadd.f32 %v3417, %v3485
      %s3491 = scalar_lea.vmem %s5, 30
      %v3492 = vld [vmem:[%s3491] sm:$0x3]
      %v3493 = vld [vmem:[#allocation2 + $0x2] sm:$0x3f]
      %3495 = vst [vmem:[#allocation1] ss:$4 sm:$0xff] %v3493
      %v3496 = vld.sshfl [vmem:[#allocation1] sm:$0xff pattern:$0x73625140]
      %v3498 = vld.sshfl [vmem:[#allocation1 + $0x8] sm:$0xff pattern:$0x73625140]
      %v3500 = vld.sshfl [vmem:[#allocation1 + $0x10] sm:$0xff pattern:$0x73625140]
      %3502 = vrot.lane.b32.xlu0 %v3496, 111
      %v3503 = vpop.permute.xlu0 %3502
      %3504 = vrot.lane.b32.xlu0 %v3498, 111
      %v3505 = vpop.permute.xlu0 %3504
      %3506 = vrot.lane.b32.xlu0 %v3500, 111
      %v3507 = vpop.permute.xlu0 %3506
      %v3508 = vsel %vm1213, %v3503, %v3505
      %v3509 = vsel %vm1213, %v3505, %v3507
      %v3511 = vsel %vm388, %v3492, 0
      %v3514 = vsel %vm392, %v3508, 0
      %v3517 = vsel %vm392, %v3509, 0
      %v3520 = vsel %vm392, %v3507, 0
      %3522 = vmatpush.bf16.msra.mxu0 0
      %3523 = vmatpush.bf16.msra.mxu0 0
      %3524 = vmatpush.bf16.msra.mxu0 0
      %3525 = vmatpush.bf16.msra.mxu0 0
      %3526 = vmatpush.bf16.msra.mxu0 0
      %3527 = vmatpush.bf16.msra.mxu0 0
      %3528 = vmatpush.bf16.msra.mxu0 0
      %3529 = vmatpush.bf16.msra.mxu0 %v3514
      %3530 = vmatmul.bf16.gmra.mxu0 %v3511
      %v3531 = vpop.f32.mrf.mxu0
      %v3532 = vadd.f32 0.0, %v3531
      %v3533 = vpop.f32.mrf.mxu0
      %3534 = vdwg.mxu0
      %3535 = vmatpush.bf16.msra.mxu0 0
      %3536 = vmatpush.bf16.msra.mxu0 0
      %3537 = vmatpush.bf16.msra.mxu0 0
      %3538 = vmatpush.bf16.msra.mxu0 0
      %3539 = vmatpush.bf16.msra.mxu0 0
      %3540 = vmatpush.bf16.msra.mxu0 0
      %3541 = vmatpush.bf16.msra.mxu0 0
      %3542 = vmatpush.bf16.msra.mxu0 %v3517
      %3543 = vmatmul.bf16.gmra.mxu0 %v3511
      %v3544 = vpop.f32.mrf.mxu0
      %v3545 = vadd.f32 0.0, %v3544
      %v3546 = vpop.f32.mrf.mxu0
      %3547 = vdwg.mxu0
      %3548 = vmatpush.bf16.msra.mxu0 0
      %3549 = vmatpush.bf16.msra.mxu0 0
      %3550 = vmatpush.bf16.msra.mxu0 0
      %3551 = vmatpush.bf16.msra.mxu0 0
      %3552 = vmatpush.bf16.msra.mxu0 0
      %3553 = vmatpush.bf16.msra.mxu0 0
      %3554 = vmatpush.bf16.msra.mxu0 0
      %3555 = vmatpush.bf16.msra.mxu0 %v3520
      %3556 = vmatmul.bf16.gmra.mxu0 %v3511
      %v3557 = vpop.f32.mrf.mxu0
      %v3558 = vadd.f32 0.0, %v3557
      %v3559 = vpop.f32.mrf.mxu0
      %3560 = vdwg.mxu0
      %v3561 = vadd.f32 %v3488, %v3532
      %v3562 = vadd.f32 %v3489, %v3545
      %v3563 = vadd.f32 %v3490, %v3558
      %s3564 = scalar_lea.vmem %s5, 32
      %v3565 = vld [vmem:[%s3564] sm:$0x3]
      %v3566 = vld [vmem:[#allocation2 + $0x2] sm:$0x3f]
      %3568 = vst [vmem:[#allocation1] ss:$4 sm:$0xff] %v3566
      %v3569 = vld.sshfl [vmem:[#allocation1] sm:$0xff pattern:$0x73625140]
      %v3571 = vld.sshfl [vmem:[#allocation1 + $0x8] sm:$0xff pattern:$0x73625140]
      %v3573 = vld.sshfl [vmem:[#allocation1 + $0x10] sm:$0xff pattern:$0x73625140]
      %3575 = vrot.lane.b32.xlu0 %v3569, 110
      %v3576 = vpop.permute.xlu0 %3575
      %3577 = vrot.lane.b32.xlu0 %v3571, 110
      %v3578 = vpop.permute.xlu0 %3577
      %3579 = vrot.lane.b32.xlu0 %v3573, 110
      %v3580 = vpop.permute.xlu0 %3579
      %v3581 = vsel %vm1287, %v3576, %v3578
      %v3582 = vsel %vm1287, %v3578, %v3580
      %v3584 = vsel %vm388, %v3565, 0
      %v3587 = vsel %vm392, %v3581, 0
      %v3590 = vsel %vm392, %v3582, 0
      %v3593 = vsel %vm392, %v3580, 0
      %3595 = vmatpush.bf16.msra.mxu0 0
      %3596 = vmatpush.bf16.msra.mxu0 0
      %3597 = vmatpush.bf16.msra.mxu0 0
      %3598 = vmatpush.bf16.msra.mxu0 0
      %3599 = vmatpush.bf16.msra.mxu0 0
      %3600 = vmatpush.bf16.msra.mxu0 0
      %3601 = vmatpush.bf16.msra.mxu0 0
      %3602 = vmatpush.bf16.msra.mxu0 %v3587
      %3603 = vmatmul.bf16.gmra.mxu0 %v3584
      %v3604 = vpop.f32.mrf.mxu0
      %v3605 = vadd.f32 0.0, %v3604
      %v3606 = vpop.f32.mrf.mxu0
      %3607 = vdwg.mxu0
      %3608 = vmatpush.bf16.msra.mxu0 0
      %3609 = vmatpush.bf16.msra.mxu0 0
      %3610 = vmatpush.bf16.msra.mxu0 0
      %3611 = vmatpush.bf16.msra.mxu0 0
      %3612 = vmatpush.bf16.msra.mxu0 0
      %3613 = vmatpush.bf16.msra.mxu0 0
      %3614 = vmatpush.bf16.msra.mxu0 0
      %3615 = vmatpush.bf16.msra.mxu0 %v3590
      %3616 = vmatmul.bf16.gmra.mxu0 %v3584
      %v3617 = vpop.f32.mrf.mxu0
      %v3618 = vadd.f32 0.0, %v3617
      %v3619 = vpop.f32.mrf.mxu0
      %3620 = vdwg.mxu0
      %3621 = vmatpush.bf16.msra.mxu0 0
      %3622 = vmatpush.bf16.msra.mxu0 0
      %3623 = vmatpush.bf16.msra.mxu0 0
      %3624 = vmatpush.bf16.msra.mxu0 0
      %3625 = vmatpush.bf16.msra.mxu0 0
      %3626 = vmatpush.bf16.msra.mxu0 0
      %3627 = vmatpush.bf16.msra.mxu0 0
      %3628 = vmatpush.bf16.msra.mxu0 %v3593
      %3629 = vmatmul.bf16.gmra.mxu0 %v3584
      %v3630 = vpop.f32.mrf.mxu0
      %v3631 = vadd.f32 0.0, %v3630
      %v3632 = vpop.f32.mrf.mxu0
      %3633 = vdwg.mxu0
      %v3634 = vadd.f32 %v3561, %v3605
      %v3635 = vadd.f32 %v3562, %v3618
      %v3636 = vadd.f32 %v3563, %v3631
      %s3637 = scalar_lea.vmem %s5, 34
      %v3638 = vld [vmem:[%s3637] sm:$0x3]
      %v3639 = vld [vmem:[#allocation2 + $0x2] sm:$0x3f]
      %3641 = vst [vmem:[#allocation1] ss:$4 sm:$0xff] %v3639
      %v3642 = vld.sshfl [vmem:[#allocation1] sm:$0xff pattern:$0x73625140]
      %v3644 = vld.sshfl [vmem:[#allocation1 + $0x8] sm:$0xff pattern:$0x73625140]
      %v3646 = vld.sshfl [vmem:[#allocation1 + $0x10] sm:$0xff pattern:$0x73625140]
      %3648 = vrot.lane.b32.xlu0 %v3642, 109
      %v3649 = vpop.permute.xlu0 %3648
      %3650 = vrot.lane.b32.xlu0 %v3644, 109
      %v3651 = vpop.permute.xlu0 %3650
      %3652 = vrot.lane.b32.xlu0 %v3646, 109
      %v3653 = vpop.permute.xlu0 %3652
      %v3654 = vsel %vm1361, %v3649, %v3651
      %v3655 = vsel %vm1361, %v3651, %v3653
      %v3657 = vsel %vm388, %v3638, 0
      %v3660 = vsel %vm392, %v3654, 0
      %v3663 = vsel %vm392, %v3655, 0
      %v3666 = vsel %vm392, %v3653, 0
      %3668 = vmatpush.bf16.msra.mxu0 0
      %3669 = vmatpush.bf16.msra.mxu0 0
      %3670 = vmatpush.bf16.msra.mxu0 0
      %3671 = vmatpush.bf16.msra.mxu0 0
      %3672 = vmatpush.bf16.msra.mxu0 0
      %3673 = vmatpush.bf16.msra.mxu0 0
      %3674 = vmatpush.bf16.msra.mxu0 0
      %3675 = vmatpush.bf16.msra.mxu0 %v3660
      %3676 = vmatmul.bf16.gmra.mxu0 %v3657
      %v3677 = vpop.f32.mrf.mxu0
      %v3678 = vadd.f32 0.0, %v3677
      %v3679 = vpop.f32.mrf.mxu0
      %3680 = vdwg.mxu0
      %3681 = vmatpush.bf16.msra.mxu0 0
      %3682 = vmatpush.bf16.msra.mxu0 0
      %3683 = vmatpush.bf16.msra.mxu0 0
      %3684 = vmatpush.bf16.msra.mxu0 0
      %3685 = vmatpush.bf16.msra.mxu0 0
      %3686 = vmatpush.bf16.msra.mxu0 0
      %3687 = vmatpush.bf16.msra.mxu0 0
      %3688 = vmatpush.bf16.msra.mxu0 %v3663
      %3689 = vmatmul.bf16.gmra.mxu0 %v3657
      %v3690 = vpop.f32.mrf.mxu0
      %v3691 = vadd.f32 0.0, %v3690
      %v3692 = vpop.f32.mrf.mxu0
      %3693 = vdwg.mxu0
      %3694 = vmatpush.bf16.msra.mxu0 0
      %3695 = vmatpush.bf16.msra.mxu0 0
      %3696 = vmatpush.bf16.msra.mxu0 0
      %3697 = vmatpush.bf16.msra.mxu0 0
      %3698 = vmatpush.bf16.msra.mxu0 0
      %3699 = vmatpush.bf16.msra.mxu0 0
      %3700 = vmatpush.bf16.msra.mxu0 0
      %3701 = vmatpush.bf16.msra.mxu0 %v3666
      %3702 = vmatmul.bf16.gmra.mxu0 %v3657
      %v3703 = vpop.f32.mrf.mxu0
      %v3704 = vadd.f32 0.0, %v3703
      %v3705 = vpop.f32.mrf.mxu0
      %3706 = vdwg.mxu0
      %v3707 = vadd.f32 %v3634, %v3678
      %v3708 = vadd.f32 %v3635, %v3691
      %v3709 = vadd.f32 %v3636, %v3704
      %3711 = vset.pattern.permute.xlu0 0
      %3712 = vperm.xlu0 %3711, %v3054
      %v3713 = vpop.permute.xlu0 %3712
      %v3715 = vadd.f32 %v3707, %v3713
      %v3716 = vadd.f32 %v3708, %v3713
      %v3717 = vadd.f32 %v3709, %v3713
      %v3718 = vsub.f32 0.0, %v3715
      %v3719 = vsub.f32 0.0, %v3716
      %v3720 = vsub.f32 0.0, %v3717
      %v3721 = vmul.f32 %v3718, 1.442695
      %v3722 = vpow.pop %v3721
      %v3723 = vmul.f32 %v3719, 1.442695
      %v3724 = vpow.pop %v3723
      %v3725 = vmul.f32 %v3720, 1.442695
      %v3726 = vpow.pop %v3725
      %v3727 = vadd.f32 %v3722, 1.0
      %v3728 = vadd.f32 %v3724, 1.0
      %v3729 = vadd.f32 %v3726, 1.0
      %v3730 = vrcp.pop %v3727
      %v3731 = vmul.f32 %v3727, %v3730
      %v3732 = vsub.f32 1.0, %v3731
      %v3733 = vmul.f32 %v3730, %v3732
      %v3734 = vadd.f32 %v3730, %v3733
      %vm3735 = vweird.f32 %v3727
      %vm3736 = vweird.f32 %v3730
      %vm3737 = vmor %vm3735, %vm3736
      %v3738 = vsel %vm3737, %v3730, %v3734
      %v3739 = vand.u32 2147483647, %v3727
      %vm3740 = vcmp.eq.f32.partialorder %v3739, 8.507059e+37
      %v3741 = vand.u32 %v3727, 2147483648
      %v3742 = vor.u32 1.1754944e-38, %v3741
      %v3743 = vsel %vm3740, %v3742, %v3738
      %v3744 = vmul.f32 1.0, %v3743
      %v3745 = vrcp.pop %v3728
      %v3746 = vmul.f32 %v3728, %v3745
      %v3747 = vsub.f32 1.0, %v3746
      %v3748 = vmul.f32 %v3745, %v3747
      %v3749 = vadd.f32 %v3745, %v3748
      %vm3750 = vweird.f32 %v3728
      %vm3751 = vweird.f32 %v3745
      %vm3752 = vmor %vm3750, %vm3751
      %v3753 = vsel %vm3752, %v3745, %v3749
      %v3754 = vand.u32 2147483647, %v3728
      %vm3755 = vcmp.eq.f32.partialorder %v3754, 8.507059e+37
      %v3756 = vand.u32 %v3728, 2147483648
      %v3757 = vor.u32 1.1754944e-38, %v3756
      %v3758 = vsel %vm3755, %v3757, %v3753
      %v3759 = vmul.f32 1.0, %v3758
      %v3760 = vrcp.pop %v3729
      %v3761 = vmul.f32 %v3729, %v3760
      %v3762 = vsub.f32 1.0, %v3761
      %v3763 = vmul.f32 %v3760, %v3762
      %v3764 = vadd.f32 %v3760, %v3763
      %vm3765 = vweird.f32 %v3729
      %vm3766 = vweird.f32 %v3760
      %vm3767 = vmor %vm3765, %vm3766
      %v3768 = vsel %vm3767, %v3760, %v3764
      %v3769 = vand.u32 2147483647, %v3729
      %vm3770 = vcmp.eq.f32.partialorder %v3769, 8.507059e+37
      %v3771 = vand.u32 %v3729, 2147483648
      %v3772 = vor.u32 1.1754944e-38, %v3771
      %v3773 = vsel %vm3770, %v3772, %v3768
      %v3774 = vmul.f32 1.0, %v3773
      %v3775 = vmul.f32 %v3715, %v3744
      %v3776 = vmul.f32 %v3716, %v3759
      %v3777 = vmul.f32 %v3717, %v3774
      %v3778 = vadd.f32 %v3775, %v2228
      %v3779 = vadd.f32 %v3776, %v2229
      %v3780 = vadd.f32 %v3777, %v2230
      %s3781 = scalar_lea.vmem %s7, 12
      %v3782 = vld [vmem:[%s3781] sm:$0xf]
      %v3783 = vpack.c.bf16 %v3778, %v3778
      %v3784 = vpack.c.bf16 %v3779, %v3779
      %v3785 = vpack.c.bf16 %v3780, %v3780
      %v3787 = vsel %vm388, %v3782, 0
      %v3790 = vsel %vm392, %v3783, 0
      %v3793 = vsel %vm392, %v3784, 0
      %v3796 = vsel %vm392, %v3785, 0
      %3798 = vmatpush.bf16.msra.mxu0 0
      %3799 = vmatpush.bf16.msra.mxu0 0
      %3800 = vmatpush.bf16.msra.mxu0 0
      %3801 = vmatpush.bf16.msra.mxu0 0
      %3802 = vmatpush.bf16.msra.mxu0 0
      %3803 = vmatpush.bf16.msra.mxu0 0
      %3804 = vmatpush.bf16.msra.mxu0 0
      %3805 = vmatpush.bf16.msra.mxu0 %v3790
      %3806 = vmatmul.bf16.gmra.mxu0 %v3787
      %v3807 = vpop.f32.mrf.mxu0
      %v3808 = vadd.f32 0.0, %v3807
      %v3809 = vpop.f32.mrf.mxu0
      %3810 = vdwg.mxu0
      %3811 = vmatpush.bf16.msra.mxu0 0
      %3812 = vmatpush.bf16.msra.mxu0 0
      %3813 = vmatpush.bf16.msra.mxu0 0
      %3814 = vmatpush.bf16.msra.mxu0 0
      %3815 = vmatpush.bf16.msra.mxu0 0
      %3816 = vmatpush.bf16.msra.mxu0 0
      %3817 = vmatpush.bf16.msra.mxu0 0
      %3818 = vmatpush.bf16.msra.mxu0 %v3793
      %3819 = vmatmul.bf16.gmra.mxu0 %v3787
      %v3820 = vpop.f32.mrf.mxu0
      %v3821 = vadd.f32 0.0, %v3820
      %v3822 = vpop.f32.mrf.mxu0
      %3823 = vdwg.mxu0
      %3824 = vmatpush.bf16.msra.mxu0 0
      %3825 = vmatpush.bf16.msra.mxu0 0
      %3826 = vmatpush.bf16.msra.mxu0 0
      %3827 = vmatpush.bf16.msra.mxu0 0
      %3828 = vmatpush.bf16.msra.mxu0 0
      %3829 = vmatpush.bf16.msra.mxu0 0
      %3830 = vmatpush.bf16.msra.mxu0 0
      %3831 = vmatpush.bf16.msra.mxu0 %v3796
      %3832 = vmatmul.bf16.gmra.mxu0 %v3787
      %v3833 = vpop.f32.mrf.mxu0
      %v3834 = vadd.f32 0.0, %v3833
      %v3835 = vpop.f32.mrf.mxu0
      %3836 = vdwg.mxu0
      %v3837 = vadd.f32 %v2287, %v3808
      %v3838 = vadd.f32 %v2288, %v3821
      %v3839 = vadd.f32 %v2289, %v3834
      %v3840 = vld [vmem:[%s8] sm:$0xff]
      %3842 = vset.pattern.permute.xlu0 0
      %3843 = vperm.xlu0 %3842, %v3840
      %v3844 = vpop.permute.xlu0 %3843
      %v3846 = vadd.f32 %v3837, %v3844
      %v3847 = vadd.f32 %v3838, %v3844
      %v3848 = vadd.f32 %v3839, %v3844
      %v3849 = vsub.f32 0.0, %v3846
      %v3850 = vsub.f32 0.0, %v3847
      %v3851 = vsub.f32 0.0, %v3848
      %v3852 = vmul.f32 %v3849, 1.442695
      %v3853 = vpow.pop %v3852
      %v3854 = vmul.f32 %v3850, 1.442695
      %v3855 = vpow.pop %v3854
      %v3856 = vmul.f32 %v3851, 1.442695
      %v3857 = vpow.pop %v3856
      %v3858 = vadd.f32 %v3853, 1.0
      %v3859 = vadd.f32 %v3855, 1.0
      %v3860 = vadd.f32 %v3857, 1.0
      %v3861 = vrcp.pop %v3858
      %v3862 = vmul.f32 %v3858, %v3861
      %v3863 = vsub.f32 1.0, %v3862
      %v3864 = vmul.f32 %v3861, %v3863
      %v3865 = vadd.f32 %v3861, %v3864
      %vm3866 = vweird.f32 %v3858
      %vm3867 = vweird.f32 %v3861
      %vm3868 = vmor %vm3866, %vm3867
      %v3869 = vsel %vm3868, %v3861, %v3865
      %v3870 = vand.u32 2147483647, %v3858
      %vm3871 = vcmp.eq.f32.partialorder %v3870, 8.507059e+37
      %v3872 = vand.u32 %v3858, 2147483648
      %v3873 = vor.u32 1.1754944e-38, %v3872
      %v3874 = vsel %vm3871, %v3873, %v3869
      %v3875 = vmul.f32 1.0, %v3874
      %v3876 = vrcp.pop %v3859
      %v3877 = vmul.f32 %v3859, %v3876
      %v3878 = vsub.f32 1.0, %v3877
      %v3879 = vmul.f32 %v3876, %v3878
      %v3880 = vadd.f32 %v3876, %v3879
      %vm3881 = vweird.f32 %v3859
      %vm3882 = vweird.f32 %v3876
      %vm3883 = vmor %vm3881, %vm3882
      %v3884 = vsel %vm3883, %v3876, %v3880
      %v3885 = vand.u32 2147483647, %v3859
      %vm3886 = vcmp.eq.f32.partialorder %v3885, 8.507059e+37
      %v3887 = vand.u32 %v3859, 2147483648
      %v3888 = vor.u32 1.1754944e-38, %v3887
      %v3889 = vsel %vm3886, %v3888, %v3884
      %v3890 = vmul.f32 1.0, %v3889
      %v3891 = vrcp.pop %v3860
      %v3892 = vmul.f32 %v3860, %v3891
      %v3893 = vsub.f32 1.0, %v3892
      %v3894 = vmul.f32 %v3891, %v3893
      %v3895 = vadd.f32 %v3891, %v3894
      %vm3896 = vweird.f32 %v3860
      %vm3897 = vweird.f32 %v3891
      %vm3898 = vmor %vm3896, %vm3897
      %v3899 = vsel %vm3898, %v3891, %v3895
      %v3900 = vand.u32 2147483647, %v3860
      %vm3901 = vcmp.eq.f32.partialorder %v3900, 8.507059e+37
      %v3902 = vand.u32 %v3860, 2147483648
      %v3903 = vor.u32 1.1754944e-38, %v3902
      %v3904 = vsel %vm3901, %v3903, %v3899
      %v3905 = vmul.f32 1.0, %v3904
      %v3906 = vmul.f32 %v3846, %v3875
      %v3907 = vmul.f32 %v3847, %v3890
      %v3908 = vmul.f32 %v3848, %v3905
      %3909 = vst [vmem:[%s359] sm:$0xff] %v3906
      %3910 = vst [vmem:[%s359 + $0x8] sm:$0xff] %v3907
      %vm3911 = vcmask 556032
      %3912 = vst.msk [vmem:[%s359 + $0x10] sm:$0xff] %vm3911, %v3908
      %p3913 = scmp.lt.s32.totalorder %s21, 1
      %s3914 = scalar_select %p3913, %s21, 1
      %s3915 = smul.addr %s3914, 3
      %s3916 = smul.addr %s3915, 8
      %s3917 = scalar_lea.vmem %s10, %s3916
      // Predicated region
      $region61: #{_lambda_.1} parent=59 // pred_check
        %p3918 = pneg %p254
      $region62: #{_lambda_.1} parent=59 // pred_check_branch
        %3920 = sbr.rel (%p3918) target = $region64
      $region63: #{_lambda_.1} parent=59 // pred_region
        _
      $region64: #{_lambda_.1} parent=59 // pred_fallthru
        _
    $region60: #{_lambda_.1} parent=5 // pred_fallthru
      _
    %p3921 = scmp.le.s32.totalorder 2, %s16
    // Predicated region
    $region65: #{_lambda_.1} parent=5 // pred_check
      %p3922 = pneg %p3921
    $region66: #{_lambda_.1} parent=5 // pred_check_branch
      %3924 = sbr.rel (%p3922) target = $region68
    $region67: #{_lambda_.1} parent=5 // pred_region
      %s3925 = ssub.s32 %s16, 2
      // Predicated region
      $region69: #{_lambda_.1} parent=67 // pred_check
        %p3926 = pneg %p260
      $region70: #{_lambda_.1} parent=67 // pred_check_branch
        %3928 = sbr.rel (%p3926) target = $region72
      $region71: #{_lambda_.1} parent=67 // pred_region
        %p3929 = scmp.lt.s32.totalorder %s22, 1
        %s3930 = scalar_select %p3929, %s22, 1
        %s3931 = smul.addr %s3930, 3
        %s3932 = smul.addr %s3931, 8
        %s3933 = scalar_lea.vmem %s10, %s3932
      $region72: #{_lambda_.1} parent=67 // pred_fallthru
        _
    $region68: #{_lambda_.1} parent=5 // pred_fallthru
      _
  $region6: #{_lambda_.1} parent=0 // loop_footer
    %s20 = sadd.s32 1, %s16
  $region7: #{_lambda_.1} parent=0 // loop_footer_branch
    %15 = sbr.rel target = $region3
  $region8: #{_lambda_.1} parent=0 // loop_exit
    _

</llo_original>
